<compile_context>
chip_gen: v6e
topology: v6e:2x2x1
jax: 0.10.0
libtpu: 0.0.40
codegen_flags: <defaults>
</compile_context>

<pallas_src>
import math

import jax
import jax.numpy as jnp
from jax.experimental import pallas as pl
from jax.experimental.pallas import tpu as pltpu


# ----------------------------------------------------------------------------
# Hardware introspection (generation-aware tiling / VMEM budget / dtypes).
# ----------------------------------------------------------------------------
def _tpu_traits():
    kind = ""
    try:
        kind = jax.devices()[0].device_kind.lower()
    except Exception:
        pass
    is_v5e = ("v5 lite" in kind) or ("v5e" in kind) or ("v5lite" in kind)
    num_cores = 2 if "v7" in kind else 1            # v7x: 2 TCs per chip
    try:
        vmem_cap = int(pltpu.get_tpu_info().vmem_capacity_bytes)
    except Exception:
        vmem_cap = (64 * 2**20) if "v7" in kind else (128 * 2**20)
    return is_v5e, num_cores, vmem_cap


# ----------------------------------------------------------------------------
# Kernel
# ----------------------------------------------------------------------------
def _make_kernel(L, B, E, FF, num_heads, head_dim, res_attn, res_ffn,
                 ew_dtype, eps=1e-5):
    H, Dh = num_heads, head_dim
    M = L * B              # matmul M dimension (rows per block)
    G = B * H              # batched-head count
    inv_sqrt2 = 1.0 / math.sqrt(2.0)

    def kernel(x_ref,
               wqkv_ref, bqkv_ref,
               wo_ref, bo_ref,
               g1_ref, be1_ref,
               w1_ref, b1_ref, w2_ref, b2_ref,
               g2_ref, be2_ref,
               o_ref):
        x = x_ref[...].astype(jnp.float32)            # (L, B, E), seq-first
        xf = x.reshape(M, E)                          # (M, E)

        def mm(a, w_ref):
            # bf16 MXU operands, f32 accumulation.
            return jnp.dot(a.astype(jnp.bfloat16), w_ref[...],
                           preferred_element_type=jnp.float32)

        def layernorm(v, g_ref, b_ref):
            mu = jnp.mean(v, axis=-1, keepdims=True)
            c = v - mu
            var = jnp.mean(c * c, axis=-1, keepdims=True)
            return c * jax.lax.rsqrt(var + eps) * g_ref[...] + b_ref[...]

        # Fused (outer Linear o MHA in-proj) QKV projection: single wide matmul.
        # Cast to bf16 right away so every downstream head relayout moves half
        # the bytes (the data only ever feeds bf16 MXU operands).
        qkv = (mm(xf, wqkv_ref) + bqkv_ref[...]).astype(jnp.bfloat16)  # (M, 3E)

        # (M, E) bf16 -> (B*H, L, Dh) bf16 batched-head layout.
        def to_heads(t):
            t = t.reshape(L, B, H, Dh)
            return jnp.transpose(t, (1, 2, 0, 3)).reshape(G, L, Dh)

        qh = to_heads(qkv[:, :E])          # 1/sqrt(Dh) already folded into wqkv
        kh = to_heads(qkv[:, E:2 * E])
        vh = to_heads(qkv[:, 2 * E:])

        s = jnp.einsum('gld,gmd->glm', qh, kh,
                       preferred_element_type=jnp.float32)     # (G, L, L) f32
        s = s - jnp.max(s, axis=-1, keepdims=True)
        p = jnp.exp(s)
        inv = pl.reciprocal(jnp.sum(p, axis=-1, keepdims=True), approx=True)
        # Probability scaling in bf16 on v6e/v7x (bf16 VPU), f32 on v5e.
        p = (p.astype(ew_dtype) * inv.astype(ew_dtype)).astype(jnp.bfloat16)

        ctx = jnp.einsum('glm,gmd->gld', p, vh,
                         preferred_element_type=jnp.float32)   # (G, L, Dh)
        # Cast before the inverse relayout -> half the bytes moved.
        ctx = ctx.astype(jnp.bfloat16)
        ctx = jnp.transpose(ctx.reshape(B, H, L, Dh), (2, 0, 1, 3)).reshape(M, E)

        attn_out = jnp.dot(ctx, wo_ref[...],
                           preferred_element_type=jnp.float32) + bo_ref[...]

        # residual + norm1
        resid = attn_out if res_attn == 1.0 else res_attn * attn_out
        x1 = layernorm(xf + resid, g1_ref, be1_ref)

        # FFN: Linear -> GELU (exact, erf) -> Linear.  Elementwise GELU in
        # ew_dtype (bf16 where the VPU/EUP support it); reductions stay f32.
        h1 = (mm(x1, w1_ref) + b1_ref[...]).astype(ew_dtype)   # (M, FF)
        h1 = 0.5 * h1 * (1.0 + jax.lax.erf(h1 * inv_sqrt2))
        ffn_out = mm(h1, w2_ref) + b2_ref[...]

        # residual + norm2
        resid2 = ffn_out if res_ffn == 1.0 else res_ffn * ffn_out
        x2 = layernorm(x1 + resid2, g2_ref, be2_ref)

        o_ref[...] = x2.reshape(L, B, E).astype(o_ref.dtype)

    return kernel


_FUSED_ORDER = ['wqkv', 'bqkv', 'wo', 'bo', 'g1', 'be1',
                'w1', 'b1', 'w2', 'b2', 'g2', 'be2']


def _fold_params(params, num_heads):
    """Fold outer q/k/v Linears into the MHA in-projection (and the attention
    scale into q) on the host; cast matmul weights to bf16."""
    E = params['wq'].shape[0]
    scale = 1.0 / math.sqrt(E // num_heads)

    wq = (params['wq'] @ params['wiq']) * scale
    bq = (params['bq'] @ params['wiq'] + params['biq']) * scale
    wk = params['wk'] @ params['wik']
    bk = params['bk'] @ params['wik'] + params['bik']
    wv = params['wv'] @ params['wiv']
    bv = params['bv'] @ params['wiv'] + params['biv']

    return dict(
        wqkv=jnp.concatenate([wq, wk, wv], axis=1).astype(jnp.bfloat16),
        bqkv=jnp.concatenate([bq, bk, bv], axis=1).astype(jnp.float32),
        wo=params['wo'].astype(jnp.bfloat16), bo=params['bo'],
        g1=params['g1'], be1=params['be1'],
        w1=params['w1'].astype(jnp.bfloat16), b1=params['b1'],
        w2=params['w2'].astype(jnp.bfloat16), b2=params['b2'],
        g2=params['g2'], be2=params['be2'],
    )


def _pick_b_tile(N, L, target_rows, num_cores):
    """Largest divisor d of N that (a) satisfies the (8,128) sublane rule for a
    (L, d, E) block (d % 8 == 0 or d == N) and (b) keeps d*L <= target_rows;
    among those, prefer tiles that give >= num_cores grid steps so every
    TensorCore gets work (v7x)."""
    valid = [d for d in range(1, N + 1)
             if N % d == 0 and (d % 8 == 0 or d == N)]
    fits = [d for d in valid if d * L <= target_rows]
    if not fits:
        # L alone exceeds the row budget; take the smallest legal tile and let
        # the caller's VMEM check error out cleanly if it does not fit.
        fits = [min(valid)]
    multi = [d for d in fits if N // d >= num_cores]
    pool = multi if multi else fits
    return max(pool)


def transfusion_block(x_lne, params, *, num_heads, res_attn, res_ffn):
    """x_lne: (L, N, E) float32, PyTorch seq-first layout (no host transposes)."""
    L, N, E = x_lne.shape
    head_dim = E // num_heads
    FF = params['w1'].shape[1]

    is_v5e, num_cores, vmem_cap = _tpu_traits()
    ew_dtype = jnp.float32 if is_v5e else jnp.bfloat16
    target_rows = 512 if vmem_cap >= 100 * 2**20 else 256

    fused = _fold_params(params, num_heads)
    weight_args = [fused[name] for name in _FUSED_ORDER]

    B = _pick_b_tile(N, L, target_rows, num_cores)
    grid = (N // B,)
    M = L * B
    G = B * num_heads

    # --- VMEM budget (weights counted ONCE: they are single-buffered) --------
    weight_bytes = int(sum(w.size * w.dtype.itemsize for w in weight_args))
    block_bytes = 2 * 2 * L * B * E * 4             # in + out blocks, dbl-buffered
    bpe_ew = 2 if ew_dtype == jnp.bfloat16 else 4
    scratch_bytes = (4 * M * 3 * E                  # qkv f32 accumulation
                     + 2 * M * 3 * E                # qkv bf16
                     + 3 * 2 * G * L * head_dim     # q/k/v head layouts (bf16)
                     + 4 * G * L * L                # scores f32
                     + bpe_ew * G * L * L           # probabilities
                     + 6 * G * L * head_dim         # ctx (f32 + bf16)
                     + 4 * M * FF + bpe_ew * M * FF  # FFN hidden
                     + 6 * 4 * M * E)               # attn_out/x1/ffn/x2 temps
    vmem_need = weight_bytes + block_bytes + scratch_bytes
    if vmem_need > int(0.85 * vmem_cap):
        # TODO(synk): flash-style KV-tiled online softmax + FF-dim tiling for
        # long sequences / large FF instead of materializing (B*H, L, L) scores
        # and (M, FF) hidden activations in one block.
        raise ValueError(
            f"TransFusionBlock single-block intermediates (~{vmem_need >> 20} MiB)"
            f" exceed the VMEM budget (~{vmem_cap >> 20} MiB); KV/FF tiling not"
            f" implemented for this configuration (L={L}, FF={FF}).")
    vmem_limit = int(min(int(0.85 * vmem_cap),
                         max(32 * 2**20, 2 * vmem_need)))

    # --- specs ----------------------------------------------------------------
    in_specs = [pl.BlockSpec((L, B, E), lambda b: (0, b, 0))]
    # Grid-invariant weights: constant index_map + single VMEM buffer each.
    in_specs += [pl.BlockSpec(w.shape, lambda b: (0, 0),
                              pipeline_mode=pl.Buffered(1))
                 for w in weight_args]
    out_specs = pl.BlockSpec((L, B, E), lambda b: (0, b, 0))

    kernel = _make_kernel(L, B, E, FF, num_heads, head_dim,
                          float(res_attn), float(res_ffn), ew_dtype)

    # Advisory cost estimate.
    flops_blk = (2 * M * E * 3 * E          # fused qkv projection
                 + 4 * G * L * L * head_dim  # attention einsums
                 + 2 * M * E * E            # out projection
                 + 4 * M * E * FF)          # FFN
    transcend_blk = G * L * L + M * FF + G * L + 2 * M
    act_bytes = 2 * L * N * E * 4
    cost = pl.CostEstimate(flops=int(flops_blk * grid[0]),
                           transcendentals=int(transcend_blk * grid[0]),
                           bytes_accessed=int(weight_bytes + act_bytes))

    return pl.pallas_call(
        kernel,
        out_shape=jax.ShapeDtypeStruct((L, N, E), x_lne.dtype),
        grid=grid,
        in_specs=in_specs,
        out_specs=out_specs,
        compiler_params=pltpu.CompilerParams(
            dimension_semantics=("parallel",),
            vmem_limit_bytes=vmem_limit),
        cost_estimate=cost,
    )(x_lne, *weight_args)


# ----------------------------------------------------------------------------
# Parameters / reference
# ----------------------------------------------------------------------------
def init_params(key, E, FF):
    """Deterministic synthetic parameters (LayerNorms use PyTorch init)."""
    names_shapes = [
        ('wq', (E, E)), ('bq', (1, E)),
        ('wk', (E, E)), ('bk', (1, E)),
        ('wv', (E, E)), ('bv', (1, E)),
        ('wiq', (E, E)), ('biq', (1, E)),
        ('wik', (E, E)), ('bik', (1, E)),
        ('wiv', (E, E)), ('biv', (1, E)),
        ('wo', (E, E)), ('bo', (1, E)),
        ('w1', (E, FF)), ('b1', (1, FF)),
        ('w2', (FF, E)), ('b2', (1, E)),
    ]
    keys = jax.random.split(key, len(names_shapes))
    p = {n: jax.random.normal(k, s, jnp.float32) * 0.05
         for (n, s), k in zip(names_shapes, keys)}
    p['g1'] = jnp.ones((1, E), jnp.float32)
    p['be1'] = jnp.zeros((1, E), jnp.float32)
    p['g2'] = jnp.ones((1, E), jnp.float32)
    p['be2'] = jnp.zeros((1, E), jnp.float32)
    return p


def reference(x, p, H, ra, rf, eps=1e-5):
    """Pure-JAX f32 mirror of the PyTorch forward (unfused), for checking."""
    L, N, E = x.shape
    Dh = E // H

    def lin(v, w, b):
        return v @ w + b

    def ln(v, g, b):
        mu = v.mean(-1, keepdims=True)
        c = v - mu
        var = (c * c).mean(-1, keepdims=True)
        return c * jax.lax.rsqrt(var + eps) * g + b

    q = lin(x, p['wq'], p['bq'])
    k = lin(x, p['wk'], p['bk'])
    v = lin(x, p['wv'], p['bv'])
    q2 = lin(q, p['wiq'], p['biq']).reshape(L, N, H, Dh)
    k2 = lin(k, p['wik'], p['bik']).reshape(L, N, H, Dh)
    v2 = lin(v, p['wiv'], p['biv']).reshape(L, N, H, Dh)
    s = jnp.einsum('lnhd,mnhd->nhlm', q2, k2) / math.sqrt(Dh)
    a = jax.nn.softmax(s, axis=-1)
    ctx = jnp.einsum('nhlm,mnhd->lnhd', a, v2).reshape(L, N, E)
    attn_out = lin(ctx, p['wo'], p['bo'])
    x1 = ln(x + ra * attn_out, p['g1'], p['be1'])
    h1 = lin(x1, p['w1'], p['b1'])
    h1 = 0.5 * h1 * (1.0 + jax.lax.erf(h1 / math.sqrt(2.0)))
    x2 = ln(x1 + rf * lin(h1, p['w2'], p['b2']), p['g2'], p['be2'])
    return x2


if __name__ == "__main__":
    L, N, E, H, FF = 8, 2, 32, 4, 64          # seq, batch, feature_dim, heads, ff_dim
    key = jax.random.PRNGKey(0)
    kx, kp = jax.random.split(key)
    x = jax.random.normal(kx, (L, N, E), jnp.float32)
    params = init_params(kp, E, FF)

    out = transfusion_block(x, params, num_heads=H, res_attn=1.0, res_ffn=1.0)
    out = jax.block_until_ready(out)

    ref = reference(x, params, H, 1.0, 1.0)
    err = float(jnp.max(jnp.abs(out - ref)))
    assert out.shape == (L, N, E)
    # bf16 matmul operands / bf16 GELU & softmax scaling (on v6e/v7x) / approx
    # reciprocal / host-side affine folding change rounding vs the f32
    # reference; tolerance relaxed accordingly.
    assert err < 7.5e-2, f"max abs error {err}"
    print("KERNEL_OK")
</pallas_src>

<mosaic_0001>
module attributes {stable_mosaic.version = 11 : i64} {
  func.func @kernel(%arg0: i32, %arg1: memref<8x2x32xf32, #tpu.memory_space<vmem>>, %arg2: memref<32x96xbf16, #tpu.memory_space<vmem>>, %arg3: memref<1x96xf32, #tpu.memory_space<vmem>>, %arg4: memref<32x32xbf16, #tpu.memory_space<vmem>>, %arg5: memref<1x32xf32, #tpu.memory_space<vmem>>, %arg6: memref<1x32xf32, #tpu.memory_space<vmem>>, %arg7: memref<1x32xf32, #tpu.memory_space<vmem>>, %arg8: memref<32x64xbf16, #tpu.memory_space<vmem>>, %arg9: memref<1x64xf32, #tpu.memory_space<vmem>>, %arg10: memref<64x32xbf16, #tpu.memory_space<vmem>>, %arg11: memref<1x32xf32, #tpu.memory_space<vmem>>, %arg12: memref<1x32xf32, #tpu.memory_space<vmem>>, %arg13: memref<1x32xf32, #tpu.memory_space<vmem>>, %arg14: memref<8x2x32xf32, #tpu.memory_space<vmem>>) attributes {dimension_semantics = [#tpu.dimension_semantics<parallel>], iteration_bounds = array<i64: 1>, scalar_prefetch = 0 : i64, scratch_operands = 0 : i64, tpu.core_type = #tpu.core_type<tc>, window_params = [{transform_indices = @transform_0, window_bounds = array<i64: 8, 2, 32>}, {pipeline_mode = #tpu.pipeline_mode<synchronous>, transform_indices = @transform_1, window_bounds = array<i64: 32, 96>}, {pipeline_mode = #tpu.pipeline_mode<synchronous>, transform_indices = @transform_2, window_bounds = array<i64: 1, 96>}, {pipeline_mode = #tpu.pipeline_mode<synchronous>, transform_indices = @transform_3, window_bounds = array<i64: 32, 32>}, {pipeline_mode = #tpu.pipeline_mode<synchronous>, transform_indices = @transform_4, window_bounds = array<i64: 1, 32>}, {pipeline_mode = #tpu.pipeline_mode<synchronous>, transform_indices = @transform_5, window_bounds = array<i64: 1, 32>}, {pipeline_mode = #tpu.pipeline_mode<synchronous>, transform_indices = @transform_6, window_bounds = array<i64: 1, 32>}, {pipeline_mode = #tpu.pipeline_mode<synchronous>, transform_indices = @transform_7, window_bounds = array<i64: 32, 64>}, {pipeline_mode = #tpu.pipeline_mode<synchronous>, transform_indices = @transform_8, window_bounds = array<i64: 1, 64>}, {pipeline_mode = #tpu.pipeline_mode<synchronous>, transform_indices = @transform_9, window_bounds = array<i64: 64, 32>}, {pipeline_mode = #tpu.pipeline_mode<synchronous>, transform_indices = @transform_10, window_bounds = array<i64: 1, 32>}, {pipeline_mode = #tpu.pipeline_mode<synchronous>, transform_indices = @transform_11, window_bounds = array<i64: 1, 32>}, {pipeline_mode = #tpu.pipeline_mode<synchronous>, transform_indices = @transform_12, window_bounds = array<i64: 1, 32>}, {transform_indices = @transform_13, window_bounds = array<i64: 8, 2, 32>}]} {
    %c0 = arith.constant 0 : index
    %c0_0 = arith.constant 0 : index
    %c0_1 = arith.constant 0 : index
    %0 = vector.load %arg1[%c0, %c0_0, %c0_1] : memref<8x2x32xf32, #tpu.memory_space<vmem>>, vector<8x2x32xf32>
    %1 = vector.shape_cast %0 : vector<8x2x32xf32> to vector<16x32xf32>
    %2 = arith.truncf %1 : vector<16x32xf32> to vector<16x32xbf16>
    %c0_2 = arith.constant 0 : index
    %c0_3 = arith.constant 0 : index
    %3 = vector.load %arg2[%c0_2, %c0_3] : memref<32x96xbf16, #tpu.memory_space<vmem>>, vector<32x96xbf16>
    %cst = arith.constant dense<0.000000e+00> : vector<16x96xf32>
    %4 = tpu.matmul %2, %3, %cst {dimension_numbers = #tpu.dot_dimension_numbers<[1], [0], [0], [1], [0, 0, 1, 1], [], []>} : vector<16x32xbf16>, vector<32x96xbf16>, vector<16x96xf32> -> vector<16x96xf32>
    %c0_4 = arith.constant 0 : index
    %c0_5 = arith.constant 0 : index
    %5 = vector.load %arg3[%c0_4, %c0_5] : memref<1x96xf32, #tpu.memory_space<vmem>>, vector<1x96xf32>
    %6 = vector.broadcast %5 : vector<1x96xf32> to vector<16x96xf32>
    %7 = arith.addf %4, %6 : vector<16x96xf32>
    %8 = arith.truncf %7 : vector<16x96xf32> to vector<16x96xbf16>
    %9 = vector.extract_strided_slice %8 {offsets = [0, 0], sizes = [16, 32], strides = [1, 1]} : vector<16x96xbf16> to vector<16x32xbf16>
    %10 = vector.shape_cast %9 : vector<16x32xbf16> to vector<8x2x4x8xbf16>
    %11 = tpu.transpose %10, [1, 2, 0, 3] : vector<8x2x4x8xbf16> -> vector<2x4x8x8xbf16>
    %12 = vector.shape_cast %11 : vector<2x4x8x8xbf16> to vector<8x8x8xbf16>
    %13 = vector.extract_strided_slice %8 {offsets = [0, 32], sizes = [16, 32], strides = [1, 1]} : vector<16x96xbf16> to vector<16x32xbf16>
    %14 = vector.shape_cast %13 : vector<16x32xbf16> to vector<8x2x4x8xbf16>
    %15 = tpu.transpose %14, [1, 2, 0, 3] : vector<8x2x4x8xbf16> -> vector<2x4x8x8xbf16>
    %16 = vector.shape_cast %15 : vector<2x4x8x8xbf16> to vector<8x8x8xbf16>
    %17 = vector.extract_strided_slice %8 {offsets = [0, 64], sizes = [16, 32], strides = [1, 1]} : vector<16x96xbf16> to vector<16x32xbf16>
    %18 = vector.shape_cast %17 : vector<16x32xbf16> to vector<8x2x4x8xbf16>
    %19 = tpu.transpose %18, [1, 2, 0, 3] : vector<8x2x4x8xbf16> -> vector<2x4x8x8xbf16>
    %20 = vector.shape_cast %19 : vector<2x4x8x8xbf16> to vector<8x8x8xbf16>
    "tpu.trace_start"() <{level = 10 : i32, message = "gld,gmd->glm"}> : () -> ()
    %cst_6 = arith.constant dense<0.000000e+00> : vector<8x8x8xf32>
    %21 = tpu.matmul %12, %16, %cst_6 {dimension_numbers = #tpu.dot_dimension_numbers<[2], [2], [1], [1], [0, 0, 0, 1, 1, 1], [0], [0]>} : vector<8x8x8xbf16>, vector<8x8x8xbf16>, vector<8x8x8xf32> -> vector<8x8x8xf32>
    "tpu.trace_stop"() : () -> ()
    %cst_7 = arith.constant dense<0xFF800000> : vector<8x8xf32>
    %22 = vector.multi_reduction <maximumf>, %21, %cst_7 [2] : vector<8x8x8xf32> to vector<8x8xf32>
    %23 = vector.shape_cast %22 : vector<8x8xf32> to vector<8x8x1xf32>
    %24 = vector.broadcast %23 : vector<8x8x1xf32> to vector<8x8x8xf32>
    %25 = arith.subf %21, %24 : vector<8x8x8xf32>
    %26 = math.exp %25 : vector<8x8x8xf32>
    %cst_8 = arith.constant dense<0.000000e+00> : vector<8x8xf32>
    %27 = vector.multi_reduction <add>, %26, %cst_8 [2] : vector<8x8x8xf32> to vector<8x8xf32>
    %28 = vector.shape_cast %27 : vector<8x8xf32> to vector<8x8x1xf32>
    %29 = tpu.reciprocal %28 {approx = true} : vector<8x8x1xf32> -> vector<8x8x1xf32>
    %30 = arith.truncf %26 : vector<8x8x8xf32> to vector<8x8x8xbf16>
    %31 = arith.truncf %29 : vector<8x8x1xf32> to vector<8x8x1xbf16>
    %32 = vector.broadcast %31 : vector<8x8x1xbf16> to vector<8x8x8xbf16>
    %33 = arith.mulf %30, %32 : vector<8x8x8xbf16>
    "tpu.trace_start"() <{level = 10 : i32, message = "glm,gmd->gld"}> : () -> ()
    %cst_9 = arith.constant dense<0.000000e+00> : vector<8x8x8xf32>
    %34 = tpu.matmul %33, %20, %cst_9 {dimension_numbers = #tpu.dot_dimension_numbers<[2], [1], [1], [2], [0, 0, 0, 1, 1, 2], [0], [0]>} : vector<8x8x8xbf16>, vector<8x8x8xbf16>, vector<8x8x8xf32> -> vector<8x8x8xf32>
    "tpu.trace_stop"() : () -> ()
    %35 = arith.truncf %34 : vector<8x8x8xf32> to vector<8x8x8xbf16>
    %36 = vector.shape_cast %35 : vector<8x8x8xbf16> to vector<2x4x8x8xbf16>
    %37 = tpu.transpose %36, [2, 0, 1, 3] : vector<2x4x8x8xbf16> -> vector<8x2x4x8xbf16>
    %38 = vector.shape_cast %37 : vector<8x2x4x8xbf16> to vector<16x32xbf16>
    %c0_10 = arith.constant 0 : index
    %c0_11 = arith.constant 0 : index
    %39 = vector.load %arg4[%c0_10, %c0_11] : memref<32x32xbf16, #tpu.memory_space<vmem>>, vector<32x32xbf16>
    %cst_12 = arith.constant dense<0.000000e+00> : vector<16x32xf32>
    %40 = tpu.matmul %38, %39, %cst_12 {dimension_numbers = #tpu.dot_dimension_numbers<[1], [0], [0], [1], [0, 0, 1, 1], [], []>} : vector<16x32xbf16>, vector<32x32xbf16>, vector<16x32xf32> -> vector<16x32xf32>
    %c0_13 = arith.constant 0 : index
    %c0_14 = arith.constant 0 : index
    %41 = vector.load %arg5[%c0_13, %c0_14] : memref<1x32xf32, #tpu.memory_space<vmem>>, vector<1x32xf32>
    %42 = vector.broadcast %41 : vector<1x32xf32> to vector<16x32xf32>
    %43 = arith.addf %40, %42 : vector<16x32xf32>
    %44 = arith.addf %1, %43 : vector<16x32xf32>
    %cst_15 = arith.constant dense<0.000000e+00> : vector<16xf32>
    %45 = vector.multi_reduction <add>, %44, %cst_15 [1] : vector<16x32xf32> to vector<16xf32>
    %46 = vector.shape_cast %45 : vector<16xf32> to vector<16x1xf32>
    %cst_16 = arith.constant 3.200000e+01 : f32
    %47 = vector.broadcast %cst_16 : f32 to vector<16x1xf32>
    %48 = arith.divf %46, %47 : vector<16x1xf32>
    %49 = vector.broadcast %48 : vector<16x1xf32> to vector<16x32xf32>
    %50 = arith.subf %44, %49 : vector<16x32xf32>
    %51 = arith.mulf %50, %50 : vector<16x32xf32>
    %cst_17 = arith.constant dense<0.000000e+00> : vector<16xf32>
    %52 = vector.multi_reduction <add>, %51, %cst_17 [1] : vector<16x32xf32> to vector<16xf32>
    %53 = vector.shape_cast %52 : vector<16xf32> to vector<16x1xf32>
    %cst_18 = arith.constant 3.200000e+01 : f32
    %54 = vector.broadcast %cst_18 : f32 to vector<16x1xf32>
    %55 = arith.divf %53, %54 : vector<16x1xf32>
    %cst_19 = arith.constant 9.99999974E-6 : f32
    %56 = vector.broadcast %cst_19 : f32 to vector<16x1xf32>
    %57 = arith.addf %55, %56 : vector<16x1xf32>
    %58 = math.rsqrt %57 : vector<16x1xf32>
    %59 = vector.broadcast %58 : vector<16x1xf32> to vector<16x32xf32>
    %60 = arith.mulf %50, %59 : vector<16x32xf32>
    %c0_20 = arith.constant 0 : index
    %c0_21 = arith.constant 0 : index
    %61 = vector.load %arg6[%c0_20, %c0_21] : memref<1x32xf32, #tpu.memory_space<vmem>>, vector<1x32xf32>
    %62 = vector.broadcast %61 : vector<1x32xf32> to vector<16x32xf32>
    %63 = arith.mulf %60, %62 : vector<16x32xf32>
    %c0_22 = arith.constant 0 : index
    %c0_23 = arith.constant 0 : index
    %64 = vector.load %arg7[%c0_22, %c0_23] : memref<1x32xf32, #tpu.memory_space<vmem>>, vector<1x32xf32>
    %65 = vector.broadcast %64 : vector<1x32xf32> to vector<16x32xf32>
    %66 = arith.addf %63, %65 : vector<16x32xf32>
    %67 = arith.truncf %66 : vector<16x32xf32> to vector<16x32xbf16>
    %c0_24 = arith.constant 0 : index
    %c0_25 = arith.constant 0 : index
    %68 = vector.load %arg8[%c0_24, %c0_25] : memref<32x64xbf16, #tpu.memory_space<vmem>>, vector<32x64xbf16>
    %cst_26 = arith.constant dense<0.000000e+00> : vector<16x64xf32>
    %69 = tpu.matmul %67, %68, %cst_26 {dimension_numbers = #tpu.dot_dimension_numbers<[1], [0], [0], [1], [0, 0, 1, 1], [], []>} : vector<16x32xbf16>, vector<32x64xbf16>, vector<16x64xf32> -> vector<16x64xf32>
    %c0_27 = arith.constant 0 : index
    %c0_28 = arith.constant 0 : index
    %70 = vector.load %arg9[%c0_27, %c0_28] : memref<1x64xf32, #tpu.memory_space<vmem>>, vector<1x64xf32>
    %71 = vector.broadcast %70 : vector<1x64xf32> to vector<16x64xf32>
    %72 = arith.addf %69, %71 : vector<16x64xf32>
    %73 = arith.truncf %72 : vector<16x64xf32> to vector<16x64xbf16>
    %cst_29 = arith.constant 5.000000e-01 : bf16
    %74 = vector.broadcast %cst_29 : bf16 to vector<16x64xbf16>
    %75 = arith.mulf %74, %73 : vector<16x64xbf16>
    %cst_30 = arith.constant 7.070310e-01 : bf16
    %76 = vector.broadcast %cst_30 : bf16 to vector<16x64xbf16>
    %77 = arith.mulf %73, %76 : vector<16x64xbf16>
    %78 = math.erf %77 : vector<16x64xbf16>
    %cst_31 = arith.constant 1.000000e+00 : bf16
    %79 = vector.broadcast %cst_31 : bf16 to vector<16x64xbf16>
    %80 = arith.addf %79, %78 : vector<16x64xbf16>
    %81 = arith.mulf %75, %80 : vector<16x64xbf16>
    %c0_32 = arith.constant 0 : index
    %c0_33 = arith.constant 0 : index
    %82 = vector.load %arg10[%c0_32, %c0_33] : memref<64x32xbf16, #tpu.memory_space<vmem>>, vector<64x32xbf16>
    %cst_34 = arith.constant dense<0.000000e+00> : vector<16x32xf32>
    %83 = tpu.matmul %81, %82, %cst_34 {dimension_numbers = #tpu.dot_dimension_numbers<[1], [0], [0], [1], [0, 0, 1, 1], [], []>} : vector<16x64xbf16>, vector<64x32xbf16>, vector<16x32xf32> -> vector<16x32xf32>
    %c0_35 = arith.constant 0 : index
    %c0_36 = arith.constant 0 : index
    %84 = vector.load %arg11[%c0_35, %c0_36] : memref<1x32xf32, #tpu.memory_space<vmem>>, vector<1x32xf32>
    %85 = vector.broadcast %84 : vector<1x32xf32> to vector<16x32xf32>
    %86 = arith.addf %83, %85 : vector<16x32xf32>
    %87 = arith.addf %66, %86 : vector<16x32xf32>
    %cst_37 = arith.constant dense<0.000000e+00> : vector<16xf32>
    %88 = vector.multi_reduction <add>, %87, %cst_37 [1] : vector<16x32xf32> to vector<16xf32>
    %89 = vector.shape_cast %88 : vector<16xf32> to vector<16x1xf32>
    %cst_38 = arith.constant 3.200000e+01 : f32
    %90 = vector.broadcast %cst_38 : f32 to vector<16x1xf32>
    %91 = arith.divf %89, %90 : vector<16x1xf32>
    %92 = vector.broadcast %91 : vector<16x1xf32> to vector<16x32xf32>
    %93 = arith.subf %87, %92 : vector<16x32xf32>
    %94 = arith.mulf %93, %93 : vector<16x32xf32>
    %cst_39 = arith.constant dense<0.000000e+00> : vector<16xf32>
    %95 = vector.multi_reduction <add>, %94, %cst_39 [1] : vector<16x32xf32> to vector<16xf32>
    %96 = vector.shape_cast %95 : vector<16xf32> to vector<16x1xf32>
    %cst_40 = arith.constant 3.200000e+01 : f32
    %97 = vector.broadcast %cst_40 : f32 to vector<16x1xf32>
    %98 = arith.divf %96, %97 : vector<16x1xf32>
    %cst_41 = arith.constant 9.99999974E-6 : f32
    %99 = vector.broadcast %cst_41 : f32 to vector<16x1xf32>
    %100 = arith.addf %98, %99 : vector<16x1xf32>
    %101 = math.rsqrt %100 : vector<16x1xf32>
    %102 = vector.broadcast %101 : vector<16x1xf32> to vector<16x32xf32>
    %103 = arith.mulf %93, %102 : vector<16x32xf32>
    %c0_42 = arith.constant 0 : index
    %c0_43 = arith.constant 0 : index
    %104 = vector.load %arg12[%c0_42, %c0_43] : memref<1x32xf32, #tpu.memory_space<vmem>>, vector<1x32xf32>
    %105 = vector.broadcast %104 : vector<1x32xf32> to vector<16x32xf32>
    %106 = arith.mulf %103, %105 : vector<16x32xf32>
    %c0_44 = arith.constant 0 : index
    %c0_45 = arith.constant 0 : index
    %107 = vector.load %arg13[%c0_44, %c0_45] : memref<1x32xf32, #tpu.memory_space<vmem>>, vector<1x32xf32>
    %108 = vector.broadcast %107 : vector<1x32xf32> to vector<16x32xf32>
    %109 = arith.addf %106, %108 : vector<16x32xf32>
    %110 = vector.shape_cast %109 : vector<16x32xf32> to vector<8x2x32xf32>
    %c0_46 = arith.constant 0 : index
    %c0_47 = arith.constant 0 : index
    %c0_48 = arith.constant 0 : index
    %111 = vector.load %arg14[%c0_46, %c0_47, %c0_48] : memref<8x2x32xf32, #tpu.memory_space<vmem>>, vector<8x2x32xf32>
    tpu.vector_store %arg14[%c0_46, %c0_47, %c0_48], %110 {strides = array<i32>} : memref<8x2x32xf32, #tpu.memory_space<vmem>>, vector<8x2x32xf32>,
    return
  }
  func.func @transform_0(%arg0: i32) -> (i32, i32, i32) {
    %c0_i32 = arith.constant 0 : i32
    %c0_i32_0 = arith.constant 0 : i32
    %c0_i32_1 = arith.constant 0 : i32
    return %c0_i32, %arg0, %c0_i32_0 : i32, i32, i32
  }
  func.func @transform_1(%arg0: i32) -> (i32, i32) {
    %c0_i32 = arith.constant 0 : i32
    %c0_i32_0 = arith.constant 0 : i32
    %c0_i32_1 = arith.constant 0 : i32
    return %c0_i32, %c0_i32_0 : i32, i32
  }
  func.func @transform_2(%arg0: i32) -> (i32, i32) {
    %c0_i32 = arith.constant 0 : i32
    %c0_i32_0 = arith.constant 0 : i32
    %c0_i32_1 = arith.constant 0 : i32
    return %c0_i32, %c0_i32_0 : i32, i32
  }
  func.func @transform_3(%arg0: i32) -> (i32, i32) {
    %c0_i32 = arith.constant 0 : i32
    %c0_i32_0 = arith.constant 0 : i32
    %c0_i32_1 = arith.constant 0 : i32
    return %c0_i32, %c0_i32_0 : i32, i32
  }
  func.func @transform_4(%arg0: i32) -> (i32, i32) {
    %c0_i32 = arith.constant 0 : i32
    %c0_i32_0 = arith.constant 0 : i32
    %c0_i32_1 = arith.constant 0 : i32
    return %c0_i32, %c0_i32_0 : i32, i32
  }
  func.func @transform_5(%arg0: i32) -> (i32, i32) {
    %c0_i32 = arith.constant 0 : i32
    %c0_i32_0 = arith.constant 0 : i32
    %c0_i32_1 = arith.constant 0 : i32
    return %c0_i32, %c0_i32_0 : i32, i32
  }
  func.func @transform_6(%arg0: i32) -> (i32, i32) {
    %c0_i32 = arith.constant 0 : i32
    %c0_i32_0 = arith.constant 0 : i32
    %c0_i32_1 = arith.constant 0 : i32
    return %c0_i32, %c0_i32_0 : i32, i32
  }
  func.func @transform_7(%arg0: i32) -> (i32, i32) {
    %c0_i32 = arith.constant 0 : i32
    %c0_i32_0 = arith.constant 0 : i32
    %c0_i32_1 = arith.constant 0 : i32
    return %c0_i32, %c0_i32_0 : i32, i32
  }
  func.func @transform_8(%arg0: i32) -> (i32, i32) {
    %c0_i32 = arith.constant 0 : i32
    %c0_i32_0 = arith.constant 0 : i32
    %c0_i32_1 = arith.constant 0 : i32
    return %c0_i32, %c0_i32_0 : i32, i32
  }
  func.func @transform_9(%arg0: i32) -> (i32, i32) {
    %c0_i32 = arith.constant 0 : i32
    %c0_i32_0 = arith.constant 0 : i32
    %c0_i32_1 = arith.constant 0 : i32
    return %c0_i32, %c0_i32_0 : i32, i32
  }
  func.func @transform_10(%arg0: i32) -> (i32, i32) {
    %c0_i32 = arith.constant 0 : i32
    %c0_i32_0 = arith.constant 0 : i32
    %c0_i32_1 = arith.constant 0 : i32
    return %c0_i32, %c0_i32_0 : i32, i32
  }
  func.func @transform_11(%arg0: i32) -> (i32, i32) {
    %c0_i32 = arith.constant 0 : i32
    %c0_i32_0 = arith.constant 0 : i32
    %c0_i32_1 = arith.constant 0 : i32
    return %c0_i32, %c0_i32_0 : i32, i32
  }
  func.func @transform_12(%arg0: i32) -> (i32, i32) {
    %c0_i32 = arith.constant 0 : i32
    %c0_i32_0 = arith.constant 0 : i32
    %c0_i32_1 = arith.constant 0 : i32
    return %c0_i32, %c0_i32_0 : i32, i32
  }
  func.func @transform_13(%arg0: i32) -> (i32, i32, i32) {
    %c0_i32 = arith.constant 0 : i32
    %c0_i32_0 = arith.constant 0 : i32
    %c0_i32_1 = arith.constant 0 : i32
    return %c0_i32, %arg0, %c0_i32_0 : i32, i32, i32
  }
}

</mosaic_0001>

<llo_original>
// kernel: tpu_custom_call.1
$region0: #{tpu_custom_call.1}
  #allocation0 [shape = 'u32[]', space=smem, size = 0x4, offset = 0x4, fixed_abs, tag = 'smem constant byte address 0x4 - core index']
  #allocation1 [shape = 'u32[144,128]{1,0:T(1,128)}', space=vmem, size = 0x12000, scoped, tag = 'internal scratch']
  %s0 = inlined_call_operand.vmem [shape: f32[8,2,32], index: 0, kind: input, shape index: {}]
  %s1 = inlined_call_operand.vmem [shape: bf16[32,96], index: 1, kind: input, shape index: {}]
  %s2 = inlined_call_operand.hbm [shape: f32[1,96], index: 2, kind: input, shape index: {}]
  %s3 = inlined_call_operand.vmem [shape: bf16[32,32], index: 3, kind: input, shape index: {}]
  %s4 = inlined_call_operand.hbm [shape: f32[1,32], index: 4, kind: input, shape index: {}]
  %s5 = inlined_call_operand.hbm [shape: f32[1,32], index: 5, kind: input, shape index: {}]
  %s6 = inlined_call_operand.hbm [shape: f32[1,32], index: 6, kind: input, shape index: {}]
  %s7 = inlined_call_operand.hbm [shape: bf16[32,64], index: 7, kind: input, shape index: {}]
  %s8 = inlined_call_operand.hbm [shape: f32[1,64], index: 8, kind: input, shape index: {}]
  %s9 = inlined_call_operand.vmem [shape: bf16[64,32], index: 9, kind: input, shape index: {}]
  %s10 = inlined_call_operand.vmem [shape: f32[1,32], index: 10, kind: input, shape index: {}]
  %s11 = inlined_call_operand.vmem [shape: f32[1,32], index: 11, kind: input, shape index: {}]
  %s12 = inlined_call_operand.vmem [shape: f32[1,32], index: 12, kind: input, shape index: {}]
  %s13 = inlined_call_operand.hbm [shape: f32[8,2,32], index: 13, kind: output, shape index: {}]
  %s14 = sld [smem:[#allocation0]]
  $region86: #{tpu_custom_call.1} parent=0
    _
  %s16 = ssub.s32 1, %s14
  %s17 = scalar_select 0, %s16, %s14
  $region1: #{tpu_custom_call.1} parent=0
    #allocation2 [shape = 'u8[512]{0}', space=vmem, size = 0x400, scoped, tag = 'input window, operand 2, single buffered']
    #allocation3 [shape = 's32[1]{0}', space=sflag, size = 0x4, scoped, tag = 'scoped memory for tpu_custom_call.1']
    #allocation4 [shape = 's32[1]{0}', space=sflag, size = 0x4, scoped, tag = 'scoped memory for tpu_custom_call.1']
    #allocation5 [shape = 'u8[512]{0}', space=vmem, size = 0x400, scoped, tag = 'input window, operand 4, single buffered']
    #allocation6 [shape = 's32[1]{0}', space=sflag, size = 0x4, scoped, tag = 'scoped memory for tpu_custom_call.1']
    #allocation7 [shape = 'u8[512]{0}', space=vmem, size = 0x400, scoped, tag = 'input window, operand 5, single buffered']
    #allocation8 [shape = 'u8[512]{0}', space=vmem, size = 0x400, scoped, tag = 'input window, operand 6, single buffered']
    #allocation9 [shape = 's32[1]{0}', space=sflag, size = 0x4, scoped, tag = 'scoped memory for tpu_custom_call.1']
    #allocation10 [shape = 'u8[8192]{0}', space=vmem, size = 0x2000, scoped, tag = 'input window, operand 7, single buffered']
    #allocation11 [shape = 'u8[512]{0}', space=vmem, size = 0x400, scoped, tag = 'input window, operand 8, single buffered']
    #allocation12 [shape = 's32[1]{0}', space=sflag, size = 0x4, scoped, tag = 'scoped memory for tpu_custom_call.1']
    #allocation13 [shape = 'u8[8192]{0}', space=vmem, size = 0x2000, scoped, tag = 'output window, operand 0, single buffered']
    %18 = vsyncpa [#allocation3], 0
    %19 = vsyncpa [#allocation6], 0
    %20 = vsyncpa [#allocation9], 0
    %21 = vsyncpa [#allocation12], 0
    %22 = vsyncpa [#allocation4], 0
    // Predicated region
    $region2: #{tpu_custom_call.1} parent=1 // pred_check
      _
    $region3: #{tpu_custom_call.1} parent=1 // pred_check_branch
      %24 = sbr.rel (0) target = $region5
    $region4: #{tpu_custom_call.1} parent=1 // pred_region
      _
    $region5: #{tpu_custom_call.1} parent=1 // pred_fallthru
      _
    // Predicated region
    $region6: #{tpu_custom_call.1} parent=1 // pred_check
      _
    $region7: #{tpu_custom_call.1} parent=1 // pred_check_branch
      %26 = sbr.rel (0) target = $region9
    $region8: #{tpu_custom_call.1} parent=1 // pred_region
      _
    $region9: #{tpu_custom_call.1} parent=1 // pred_fallthru
      _
    // Predicated region
    $region10: #{tpu_custom_call.1} parent=1 // pred_check
      _
    $region11: #{tpu_custom_call.1} parent=1 // pred_check_branch
      %28 = sbr.rel (0) target = $region13
    $region12: #{tpu_custom_call.1} parent=1 // pred_region
      %s30 = ssub.s32 16, 16
      %31 = vsyncadd [#allocation3], %s30
      %s33 = sshll.u32 [#allocation2], 4
      %s34 = int_to_ptr.vmem [resolvable:$true] %s33
      %36 = dma.hbm_to_vmem [thread:$0]  %s2, 16, %s34, [#allocation3]
    $region13: #{tpu_custom_call.1} parent=1 // pred_fallthru
      _
    // Predicated region
    $region14: #{tpu_custom_call.1} parent=1 // pred_check
      _
    $region15: #{tpu_custom_call.1} parent=1 // pred_check_branch
      %38 = sbr.rel (0) target = $region17
    $region16: #{tpu_custom_call.1} parent=1 // pred_region
      _
    $region17: #{tpu_custom_call.1} parent=1 // pred_fallthru
      _
    // Predicated region
    $region18: #{tpu_custom_call.1} parent=1 // pred_check
      _
    $region19: #{tpu_custom_call.1} parent=1 // pred_check_branch
      %40 = sbr.rel (0) target = $region21
    $region20: #{tpu_custom_call.1} parent=1 // pred_region
      %s42 = ssub.s32 16, 16
      %43 = vsyncadd [#allocation6], %s42
      %s45 = sshll.u32 [#allocation5], 4
      %s46 = int_to_ptr.vmem [resolvable:$true] %s45
      %48 = dma.hbm_to_vmem [thread:$0]  %s4, 16, %s46, [#allocation6]
    $region21: #{tpu_custom_call.1} parent=1 // pred_fallthru
      _
    // Predicated region
    $region22: #{tpu_custom_call.1} parent=1 // pred_check
      _
    $region23: #{tpu_custom_call.1} parent=1 // pred_check_branch
      %50 = sbr.rel (0) target = $region25
    $region24: #{tpu_custom_call.1} parent=1 // pred_region
      %s52 = ssub.s32 16, 16
      %53 = vsyncadd [#allocation6], %s52
      %s55 = sshll.u32 [#allocation7], 4
      %s56 = int_to_ptr.vmem [resolvable:$true] %s55
      %58 = dma.hbm_to_vmem [thread:$0]  %s5, 16, %s56, [#allocation6]
    $region25: #{tpu_custom_call.1} parent=1 // pred_fallthru
      _
    // Predicated region
    $region26: #{tpu_custom_call.1} parent=1 // pred_check
      _
    $region27: #{tpu_custom_call.1} parent=1 // pred_check_branch
      %60 = sbr.rel (0) target = $region29
    $region28: #{tpu_custom_call.1} parent=1 // pred_region
      %s62 = ssub.s32 16, 16
      %63 = vsyncadd [#allocation9], %s62
      %s65 = sshll.u32 [#allocation8], 4
      %s66 = int_to_ptr.vmem [resolvable:$true] %s65
      %68 = dma.hbm_to_vmem [thread:$0]  %s6, 16, %s66, [#allocation9]
    $region29: #{tpu_custom_call.1} parent=1 // pred_fallthru
      _
    // Predicated region
    $region30: #{tpu_custom_call.1} parent=1 // pred_check
      _
    $region31: #{tpu_custom_call.1} parent=1 // pred_check_branch
      %70 = sbr.rel (0) target = $region33
    $region32: #{tpu_custom_call.1} parent=1 // pred_region
      %s72 = ssub.s32 256, 256
      %73 = vsyncadd [#allocation9], %s72
      %s74 = sshll.u32 [#allocation10], 4
      %s75 = int_to_ptr.vmem [resolvable:$true] %s74
      %80 = dma.hbm_to_vmem [thread:$0]  %s7, 256, %s75, [#allocation9], 64, 64, 4
    $region33: #{tpu_custom_call.1} parent=1 // pred_fallthru
      _
    // Predicated region
    $region34: #{tpu_custom_call.1} parent=1 // pred_check
      _
    $region35: #{tpu_custom_call.1} parent=1 // pred_check_branch
      %82 = sbr.rel (0) target = $region37
    $region36: #{tpu_custom_call.1} parent=1 // pred_region
      %s84 = ssub.s32 16, 16
      %85 = vsyncadd [#allocation12], %s84
      %s87 = sshll.u32 [#allocation11], 4
      %s88 = int_to_ptr.vmem [resolvable:$true] %s87
      %90 = dma.hbm_to_vmem [thread:$0]  %s8, 16, %s88, [#allocation12]
    $region37: #{tpu_custom_call.1} parent=1 // pred_fallthru
      _
    // Predicated region
    $region38: #{tpu_custom_call.1} parent=1 // pred_check
      _
    $region39: #{tpu_custom_call.1} parent=1 // pred_check_branch
      %92 = sbr.rel (0) target = $region41
    $region40: #{tpu_custom_call.1} parent=1 // pred_region
      _
    $region41: #{tpu_custom_call.1} parent=1 // pred_fallthru
      _
    // Predicated region
    $region42: #{tpu_custom_call.1} parent=1 // pred_check
      _
    $region43: #{tpu_custom_call.1} parent=1 // pred_check_branch
      %94 = sbr.rel (0) target = $region45
    $region44: #{tpu_custom_call.1} parent=1 // pred_region
      _
    $region45: #{tpu_custom_call.1} parent=1 // pred_fallthru
      _
    // Predicated region
    $region46: #{tpu_custom_call.1} parent=1 // pred_check
      _
    $region47: #{tpu_custom_call.1} parent=1 // pred_check_branch
      %96 = sbr.rel (0) target = $region49
    $region48: #{tpu_custom_call.1} parent=1 // pred_region
      _
    $region49: #{tpu_custom_call.1} parent=1 // pred_fallthru
      _
    // Predicated region
    $region50: #{tpu_custom_call.1} parent=1 // pred_check
      _
    $region51: #{tpu_custom_call.1} parent=1 // pred_check_branch
      %98 = sbr.rel (0) target = $region53
    $region52: #{tpu_custom_call.1} parent=1 // pred_region
      _
    $region53: #{tpu_custom_call.1} parent=1 // pred_fallthru
      _
    // Predicated region
    $region54: #{tpu_custom_call.1} parent=1 // pred_check
      _
    $region55: #{tpu_custom_call.1} parent=1 // pred_check_branch
      %100 = sbr.rel (0) target = $region57
    $region56: #{tpu_custom_call.1} parent=1 // pred_region
      %101 = dma.done [#allocation3], 16
    $region57: #{tpu_custom_call.1} parent=1 // pred_fallthru
      _
    // Predicated region
    $region58: #{tpu_custom_call.1} parent=1 // pred_check
      _
    $region59: #{tpu_custom_call.1} parent=1 // pred_check_branch
      %103 = sbr.rel (0) target = $region61
    $region60: #{tpu_custom_call.1} parent=1 // pred_region
      %104 = dma.done [#allocation6], 16
    $region61: #{tpu_custom_call.1} parent=1 // pred_fallthru
      _
    // Predicated region
    $region62: #{tpu_custom_call.1} parent=1 // pred_check
      _
    $region63: #{tpu_custom_call.1} parent=1 // pred_check_branch
      %106 = sbr.rel (0) target = $region65
    $region64: #{tpu_custom_call.1} parent=1 // pred_region
      %107 = dma.done [#allocation6], 16
    $region65: #{tpu_custom_call.1} parent=1 // pred_fallthru
      _
    // Predicated region
    $region66: #{tpu_custom_call.1} parent=1 // pred_check
      _
    $region67: #{tpu_custom_call.1} parent=1 // pred_check_branch
      %109 = sbr.rel (0) target = $region69
    $region68: #{tpu_custom_call.1} parent=1 // pred_region
      %110 = dma.done [#allocation9], 16
    $region69: #{tpu_custom_call.1} parent=1 // pred_fallthru
      _
    // Predicated region
    $region70: #{tpu_custom_call.1} parent=1 // pred_check
      _
    $region71: #{tpu_custom_call.1} parent=1 // pred_check_branch
      %112 = sbr.rel (0) target = $region73
    $region72: #{tpu_custom_call.1} parent=1 // pred_region
      %113 = dma.done [#allocation9], 256
    $region73: #{tpu_custom_call.1} parent=1 // pred_fallthru
      _
    // Predicated region
    $region74: #{tpu_custom_call.1} parent=1 // pred_check
      _
    $region75: #{tpu_custom_call.1} parent=1 // pred_check_branch
      %115 = sbr.rel (0) target = $region77
    $region76: #{tpu_custom_call.1} parent=1 // pred_region
      %116 = dma.done [#allocation12], 16
    $region77: #{tpu_custom_call.1} parent=1 // pred_fallthru
      _
    %v121 = vld [vmem:[%s0] sm:$0x3]
    %v122 = vld [vmem:[%s0 + $0x2] sm:$0x3]
    %v123 = vld [vmem:[%s0 + $0x4] sm:$0x3]
    %v124 = vld [vmem:[%s0 + $0x6] sm:$0x3]
    %v125 = vld [vmem:[%s0 + $0x8] sm:$0x3]
    %v126 = vld [vmem:[%s0 + $0xa] sm:$0x3]
    %v127 = vld [vmem:[%s0 + $0xc] sm:$0x3]
    %v128 = vld [vmem:[%s0 + $0xe] sm:$0x3]
    %v137 = vcombine.low %v121, %v122
    %v138 = vcombine.low %v123, %v124
    %v140 = vunpack.c.l.s4 1983009808
    %v141 = vunpack.c.0.s8 %v140
    %v142 = vlaneseq
    %v143 = vshrl.u32 %v142, 7
    %v144 = vsub.s32 %v141, %v143
    %v145 = vrot.slane %v137, %v144
    %v147 = vunpack.c.l.s4 1983009808
    %v148 = vunpack.c.0.s8 %v147
    %v149 = vlaneseq
    %v150 = vshrl.u32 %v149, 7
    %v151 = vsub.s32 %v148, %v150
    %v152 = vrot.slane %v138, %v151
    %v153 = vcombine.low %v145, %v152
    %v154 = vcombine.low %v125, %v126
    %v155 = vcombine.low %v127, %v128
    %v157 = vunpack.c.l.s4 1983009808
    %v158 = vunpack.c.0.s8 %v157
    %v159 = vlaneseq
    %v160 = vshrl.u32 %v159, 7
    %v161 = vsub.s32 %v158, %v160
    %v162 = vrot.slane %v154, %v161
    %v164 = vunpack.c.l.s4 1983009808
    %v165 = vunpack.c.0.s8 %v164
    %v166 = vlaneseq
    %v167 = vshrl.u32 %v166, 7
    %v168 = vsub.s32 %v165, %v167
    %v169 = vrot.slane %v155, %v168
    %v170 = vcombine.low %v162, %v169
    %v173 = vpack.c.bf16 %v170, %v153
    %v174 = vld [vmem:[%s1] sm:$0xf]
    %v175 = vld [vmem:[%s1 + $0x4] sm:$0xf]
    %v176 = vld [vmem:[%s1 + $0x8] sm:$0xf]
    %v177 = vld [vmem:[%s1 + $0xc] sm:$0xf]
    %v178 = vld [vmem:[#allocation2] sm:$0x1]
    %v180 = vlaneseq
    %v181 = vshrl.u32 %v180, 7
    %v182 = vsub.s32 0, %v181
    %v183 = vrot.slane %v178, %v182
    %v189 = vunpack.c.l.b16 %v174
    %v190 = vunpack.c.l.b16 %v175
    %v191 = vunpack.c.l.b16 %v176
    %v192 = vunpack.c.l.b16 %v177
    %v193 = vpack.c.b16 %v190, %v189
    %v194 = vpack.c.b16 %v192, %v191
    %vm197 = vcmask 261120
    %v199 = vsel %vm197, %v173, 0
    %201 = vmatprep.subr.bf16.mxu0 0
    %202 = vmatpush1.bf16.msra.mxu0 0
    %203 = vmatprep.subr.bf16.mxu0 0
    %204 = vmatpush1.bf16.msra.mxu0 0
    %205 = vmatprep.subr.bf16.mxu0 0
    %206 = vmatpush1.bf16.msra.mxu0 0
    %207 = vmatprep.subr.bf16.mxu0 0
    %208 = vmatpush1.bf16.msra.mxu0 0
    %209 = vmatprep.subr.bf16.mxu0 0
    %210 = vmatpush1.bf16.msra.mxu0 0
    %211 = vmatprep.subr.bf16.mxu0 0
    %212 = vmatpush1.bf16.msra.mxu0 0
    %213 = vmatprep.subr.bf16.mxu0 0
    %214 = vmatpush1.bf16.msra.mxu0 %v194
    %215 = vmatprep.subr.bf16.mxu0 0
    %216 = vmatpush1.bf16.msra.mxu0 %v193
    %217 = vmatprep.subr.bf16.mxu0 0
    %218 = vmatpush2.bf16.msra.mxu0 0
    %219 = vmatprep.subr.bf16.mxu0 0
    %220 = vmatpush2.bf16.msra.mxu0 0
    %221 = vmatprep.subr.bf16.mxu0 0
    %222 = vmatpush2.bf16.msra.mxu0 0
    %223 = vmatprep.subr.bf16.mxu0 0
    %224 = vmatpush2.bf16.msra.mxu0 0
    %225 = vmatprep.subr.bf16.mxu0 0
    %226 = vmatpush2.bf16.msra.mxu0 0
    %227 = vmatprep.subr.bf16.mxu0 0
    %228 = vmatpush2.bf16.msra.mxu0 0
    %229 = vmatprep.subr.bf16.mxu0 0
    %230 = vmatpush2.bf16.msra.mxu0 0
    %231 = vmatprep.subr.bf16.mxu0 0
    %232 = vmatpush2.bf16.msra.mxu0 0
    %233 = vmatprep.mubr.bf16.mxu0 0
    %234 = vmatmul.mubr.bf16.gmra.mxu0 %v199
    %v235 = vpop.f32.mrf.mxu0
    %v236 = vadd.f32 %v183, %v235
    %v237 = vpop.f32.mrf.mxu0
    %v238 = vpop.f32.mrf.mxu0
    %v239 = vadd.f32 %v183, %v238
    %v240 = vpop.f32.mrf.mxu0
    %241 = vdwg.mxu0
    %v242 = vpack.c.bf16 %v239, %v236
    %244 = vrot.lane.b32.xlu0 %v242, 120
    %v245 = vpop.permute.xlu0 %244
    %246 = vrot.lane.b32.xlu0 %v242, 112
    %v247 = vpop.permute.xlu0 %246
    %248 = vrot.lane.b32.xlu0 %v242, 104
    %v249 = vpop.permute.xlu0 %248
    %v252 = vpack.i.b16 %v245, %v242
    %v254 = vshrl.u32 %v242, 16
    %v255 = vshrl.u32 %v245, 16
    %v256 = vpack.i.b16 %v255, %v254
    %v260 = vpack.i.b16 %v249, %v247
    %v262 = vshrl.u32 %v247, 16
    %v263 = vshrl.u32 %v249, 16
    %v264 = vpack.i.b16 %v263, %v262
    %v267 = vpack.i.b16 0, 0
    %v269 = vshrl.u32 0, 16
    %v270 = vpack.i.b16 %v269, %v269
    %v272 = vcombine.high %v252, %v267
    %v274 = vunpack.c.l.s4 1983009808
    %v275 = vunpack.c.0.s8 %v274
    %v276 = vlaneseq
    %v277 = vshrl.u32 %v276, 7
    %v278 = vsub.s32 %v275, %v277
    %v279 = vrot.slane %v252, %v278
    %v281 = vunpack.c.l.s4 1983009808
    %v282 = vunpack.c.0.s8 %v281
    %v283 = vlaneseq
    %v284 = vshrl.u32 %v283, 7
    %v285 = vsub.s32 %v282, %v284
    %v286 = vrot.slane %v272, %v285
    %v287 = vcombine.high %v260, %v267
    %v289 = vunpack.c.l.s4 1983009808
    %v290 = vunpack.c.0.s8 %v289
    %v291 = vlaneseq
    %v292 = vshrl.u32 %v291, 7
    %v293 = vsub.s32 %v290, %v292
    %v294 = vrot.slane %v260, %v293
    %v296 = vunpack.c.l.s4 1983009808
    %v297 = vunpack.c.0.s8 %v296
    %v298 = vlaneseq
    %v299 = vshrl.u32 %v298, 7
    %v300 = vsub.s32 %v297, %v299
    %v301 = vrot.slane %v287, %v300
    %v302 = vcombine.low %v279, %v294
    %v303 = vcombine.high %v279, %v294
    %v305 = vunpack.c.l.s4 1934713408
    %v306 = vunpack.c.0.s8 %v305
    %v307 = vlaneseq
    %v308 = vshrl.u32 %v307, 7
    %v309 = vsub.s32 %v306, %v308
    %v310 = vrot.slane %v302, %v309
    %v312 = vunpack.c.l.s4 1934713408
    %v313 = vunpack.c.0.s8 %v312
    %v314 = vlaneseq
    %v315 = vshrl.u32 %v314, 7
    %v316 = vsub.s32 %v313, %v315
    %v317 = vrot.slane %v303, %v316
    %v318 = vcombine.low %v286, %v301
    %v319 = vcombine.high %v286, %v301
    %v321 = vunpack.c.l.s4 1934713408
    %v322 = vunpack.c.0.s8 %v321
    %v323 = vlaneseq
    %v324 = vshrl.u32 %v323, 7
    %v325 = vsub.s32 %v322, %v324
    %v326 = vrot.slane %v318, %v325
    %v328 = vunpack.c.l.s4 1934713408
    %v329 = vunpack.c.0.s8 %v328
    %v330 = vlaneseq
    %v331 = vshrl.u32 %v330, 7
    %v332 = vsub.s32 %v329, %v331
    %v333 = vrot.slane %v319, %v332
    %v334 = vcombine.high %v310, 0
    %v335 = vcombine.high %v317, 0
    %v336 = vcombine.high %v326, 0
    %v337 = vcombine.high %v333, 0
    %v338 = vcombine.high %v256, %v270
    %v340 = vunpack.c.l.s4 1983009808
    %v341 = vunpack.c.0.s8 %v340
    %v342 = vlaneseq
    %v343 = vshrl.u32 %v342, 7
    %v344 = vsub.s32 %v341, %v343
    %v345 = vrot.slane %v256, %v344
    %v347 = vunpack.c.l.s4 1983009808
    %v348 = vunpack.c.0.s8 %v347
    %v349 = vlaneseq
    %v350 = vshrl.u32 %v349, 7
    %v351 = vsub.s32 %v348, %v350
    %v352 = vrot.slane %v338, %v351
    %v353 = vcombine.high %v264, %v270
    %v355 = vunpack.c.l.s4 1983009808
    %v356 = vunpack.c.0.s8 %v355
    %v357 = vlaneseq
    %v358 = vshrl.u32 %v357, 7
    %v359 = vsub.s32 %v356, %v358
    %v360 = vrot.slane %v264, %v359
    %v362 = vunpack.c.l.s4 1983009808
    %v363 = vunpack.c.0.s8 %v362
    %v364 = vlaneseq
    %v365 = vshrl.u32 %v364, 7
    %v366 = vsub.s32 %v363, %v365
    %v367 = vrot.slane %v353, %v366
    %v368 = vcombine.low %v345, %v360
    %v369 = vcombine.high %v345, %v360
    %v371 = vunpack.c.l.s4 1934713408
    %v372 = vunpack.c.0.s8 %v371
    %v373 = vlaneseq
    %v374 = vshrl.u32 %v373, 7
    %v375 = vsub.s32 %v372, %v374
    %v376 = vrot.slane %v368, %v375
    %v378 = vunpack.c.l.s4 1934713408
    %v379 = vunpack.c.0.s8 %v378
    %v380 = vlaneseq
    %v381 = vshrl.u32 %v380, 7
    %v382 = vsub.s32 %v379, %v381
    %v383 = vrot.slane %v369, %v382
    %v384 = vcombine.low %v352, %v367
    %v385 = vcombine.high %v352, %v367
    %v387 = vunpack.c.l.s4 1934713408
    %v388 = vunpack.c.0.s8 %v387
    %v389 = vlaneseq
    %v390 = vshrl.u32 %v389, 7
    %v391 = vsub.s32 %v388, %v390
    %v392 = vrot.slane %v384, %v391
    %v394 = vunpack.c.l.s4 1934713408
    %v395 = vunpack.c.0.s8 %v394
    %v396 = vlaneseq
    %v397 = vshrl.u32 %v396, 7
    %v398 = vsub.s32 %v395, %v397
    %v399 = vrot.slane %v385, %v398
    %v400 = vcombine.high %v376, 0
    %v401 = vcombine.high %v383, 0
    %v402 = vcombine.high %v392, 0
    %v403 = vcombine.high %v399, 0
    %v404 = vcombine.low %v310, %v326
    %v406 = vunpack.c.l.s4 1983009808
    %v407 = vunpack.c.0.s8 %v406
    %v408 = vlaneseq
    %v409 = vshrl.u32 %v408, 7
    %v410 = vsub.s32 %v407, %v409
    %v411 = vrot.slane %v404, %v410
    %v412 = vcombine.low %v317, %v333
    %v414 = vunpack.c.l.s4 1983009808
    %v415 = vunpack.c.0.s8 %v414
    %v416 = vlaneseq
    %v417 = vshrl.u32 %v416, 7
    %v418 = vsub.s32 %v415, %v417
    %v419 = vrot.slane %v412, %v418
    %v420 = vcombine.low %v411, %v419
    %v422 = vunpack.c.l.s4 1934713408
    %v423 = vunpack.c.0.s8 %v422
    %v424 = vlaneseq
    %v425 = vshrl.u32 %v424, 7
    %v426 = vsub.s32 %v423, %v425
    %v427 = vrot.slane %v420, %v426
    %v428 = vcombine.high %v427, 0
    %v429 = vcombine.low %v334, %v336
    %v431 = vunpack.c.l.s4 1983009808
    %v432 = vunpack.c.0.s8 %v431
    %v433 = vlaneseq
    %v434 = vshrl.u32 %v433, 7
    %v435 = vsub.s32 %v432, %v434
    %v436 = vrot.slane %v429, %v435
    %v437 = vcombine.low %v335, %v337
    %v439 = vunpack.c.l.s4 1983009808
    %v440 = vunpack.c.0.s8 %v439
    %v441 = vlaneseq
    %v442 = vshrl.u32 %v441, 7
    %v443 = vsub.s32 %v440, %v442
    %v444 = vrot.slane %v437, %v443
    %v445 = vcombine.low %v436, %v444
    %v447 = vunpack.c.l.s4 1934713408
    %v448 = vunpack.c.0.s8 %v447
    %v449 = vlaneseq
    %v450 = vshrl.u32 %v449, 7
    %v451 = vsub.s32 %v448, %v450
    %v452 = vrot.slane %v445, %v451
    %v453 = vcombine.high %v452, 0
    %v454 = vcombine.low %v376, %v392
    %v456 = vunpack.c.l.s4 1983009808
    %v457 = vunpack.c.0.s8 %v456
    %v458 = vlaneseq
    %v459 = vshrl.u32 %v458, 7
    %v460 = vsub.s32 %v457, %v459
    %v461 = vrot.slane %v454, %v460
    %v462 = vcombine.low %v383, %v399
    %v464 = vunpack.c.l.s4 1983009808
    %v465 = vunpack.c.0.s8 %v464
    %v466 = vlaneseq
    %v467 = vshrl.u32 %v466, 7
    %v468 = vsub.s32 %v465, %v467
    %v469 = vrot.slane %v462, %v468
    %v470 = vcombine.low %v461, %v469
    %v472 = vunpack.c.l.s4 1934713408
    %v473 = vunpack.c.0.s8 %v472
    %v474 = vlaneseq
    %v475 = vshrl.u32 %v474, 7
    %v476 = vsub.s32 %v473, %v475
    %v477 = vrot.slane %v470, %v476
    %v478 = vcombine.high %v477, 0
    %v479 = vcombine.low %v400, %v402
    %v481 = vunpack.c.l.s4 1983009808
    %v482 = vunpack.c.0.s8 %v481
    %v483 = vlaneseq
    %v484 = vshrl.u32 %v483, 7
    %v485 = vsub.s32 %v482, %v484
    %v486 = vrot.slane %v479, %v485
    %v487 = vcombine.low %v401, %v403
    %v489 = vunpack.c.l.s4 1983009808
    %v490 = vunpack.c.0.s8 %v489
    %v491 = vlaneseq
    %v492 = vshrl.u32 %v491, 7
    %v493 = vsub.s32 %v490, %v492
    %v494 = vrot.slane %v487, %v493
    %v495 = vcombine.low %v486, %v494
    %v497 = vunpack.c.l.s4 1934713408
    %v498 = vunpack.c.0.s8 %v497
    %v499 = vlaneseq
    %v500 = vshrl.u32 %v499, 7
    %v501 = vsub.s32 %v498, %v500
    %v502 = vrot.slane %v495, %v501
    %v503 = vcombine.high %v502, 0
    %v506 = vpack.i.b16 %v452, %v427
    %v507 = vshrl.u32 %v427, 16
    %v508 = vshrl.u32 %v452, 16
    %v509 = vpack.i.b16 %v508, %v507
    %v512 = vpack.i.b16 %v453, %v428
    %v513 = vshrl.u32 %v428, 16
    %v514 = vshrl.u32 %v453, 16
    %v515 = vpack.i.b16 %v514, %v513
    %v518 = vpack.i.b16 %v502, %v477
    %v519 = vshrl.u32 %v477, 16
    %v520 = vshrl.u32 %v502, 16
    %v521 = vpack.i.b16 %v520, %v519
    %v524 = vpack.i.b16 %v503, %v478
    %v525 = vshrl.u32 %v478, 16
    %v526 = vshrl.u32 %v503, 16
    %v527 = vpack.i.b16 %v526, %v525
    %528 = vrot.lane.b32.xlu0 %v242, 96
    %v529 = vpop.permute.xlu0 %528
    %530 = vrot.lane.b32.xlu0 %v245, 96
    %v531 = vpop.permute.xlu0 %530
    %532 = vrot.lane.b32.xlu0 %v247, 96
    %v533 = vpop.permute.xlu0 %532
    %534 = vrot.lane.b32.xlu0 %v249, 96
    %v535 = vpop.permute.xlu0 %534
    %v538 = vpack.i.b16 %v531, %v529
    %v540 = vshrl.u32 %v529, 16
    %v541 = vshrl.u32 %v531, 16
    %v542 = vpack.i.b16 %v541, %v540
    %v546 = vpack.i.b16 %v535, %v533
    %v548 = vshrl.u32 %v533, 16
    %v549 = vshrl.u32 %v535, 16
    %v550 = vpack.i.b16 %v549, %v548
    %v552 = vcombine.high %v538, %v267
    %v554 = vunpack.c.l.s4 1983009808
    %v555 = vunpack.c.0.s8 %v554
    %v556 = vlaneseq
    %v557 = vshrl.u32 %v556, 7
    %v558 = vsub.s32 %v555, %v557
    %v559 = vrot.slane %v538, %v558
    %v561 = vunpack.c.l.s4 1983009808
    %v562 = vunpack.c.0.s8 %v561
    %v563 = vlaneseq
    %v564 = vshrl.u32 %v563, 7
    %v565 = vsub.s32 %v562, %v564
    %v566 = vrot.slane %v552, %v565
    %v567 = vcombine.high %v546, %v267
    %v569 = vunpack.c.l.s4 1983009808
    %v570 = vunpack.c.0.s8 %v569
    %v571 = vlaneseq
    %v572 = vshrl.u32 %v571, 7
    %v573 = vsub.s32 %v570, %v572
    %v574 = vrot.slane %v546, %v573
    %v576 = vunpack.c.l.s4 1983009808
    %v577 = vunpack.c.0.s8 %v576
    %v578 = vlaneseq
    %v579 = vshrl.u32 %v578, 7
    %v580 = vsub.s32 %v577, %v579
    %v581 = vrot.slane %v567, %v580
    %v582 = vcombine.low %v559, %v574
    %v583 = vcombine.high %v559, %v574
    %v585 = vunpack.c.l.s4 1934713408
    %v586 = vunpack.c.0.s8 %v585
    %v587 = vlaneseq
    %v588 = vshrl.u32 %v587, 7
    %v589 = vsub.s32 %v586, %v588
    %v590 = vrot.slane %v582, %v589
    %v592 = vunpack.c.l.s4 1934713408
    %v593 = vunpack.c.0.s8 %v592
    %v594 = vlaneseq
    %v595 = vshrl.u32 %v594, 7
    %v596 = vsub.s32 %v593, %v595
    %v597 = vrot.slane %v583, %v596
    %v598 = vcombine.low %v566, %v581
    %v599 = vcombine.high %v566, %v581
    %v601 = vunpack.c.l.s4 1934713408
    %v602 = vunpack.c.0.s8 %v601
    %v603 = vlaneseq
    %v604 = vshrl.u32 %v603, 7
    %v605 = vsub.s32 %v602, %v604
    %v606 = vrot.slane %v598, %v605
    %v608 = vunpack.c.l.s4 1934713408
    %v609 = vunpack.c.0.s8 %v608
    %v610 = vlaneseq
    %v611 = vshrl.u32 %v610, 7
    %v612 = vsub.s32 %v609, %v611
    %v613 = vrot.slane %v599, %v612
    %v614 = vcombine.high %v590, 0
    %v615 = vcombine.high %v597, 0
    %v616 = vcombine.high %v606, 0
    %v617 = vcombine.high %v613, 0
    %v618 = vcombine.high %v542, %v270
    %v620 = vunpack.c.l.s4 1983009808
    %v621 = vunpack.c.0.s8 %v620
    %v622 = vlaneseq
    %v623 = vshrl.u32 %v622, 7
    %v624 = vsub.s32 %v621, %v623
    %v625 = vrot.slane %v542, %v624
    %v627 = vunpack.c.l.s4 1983009808
    %v628 = vunpack.c.0.s8 %v627
    %v629 = vlaneseq
    %v630 = vshrl.u32 %v629, 7
    %v631 = vsub.s32 %v628, %v630
    %v632 = vrot.slane %v618, %v631
    %v633 = vcombine.high %v550, %v270
    %v635 = vunpack.c.l.s4 1983009808
    %v636 = vunpack.c.0.s8 %v635
    %v637 = vlaneseq
    %v638 = vshrl.u32 %v637, 7
    %v639 = vsub.s32 %v636, %v638
    %v640 = vrot.slane %v550, %v639
    %v642 = vunpack.c.l.s4 1983009808
    %v643 = vunpack.c.0.s8 %v642
    %v644 = vlaneseq
    %v645 = vshrl.u32 %v644, 7
    %v646 = vsub.s32 %v643, %v645
    %v647 = vrot.slane %v633, %v646
    %v648 = vcombine.low %v625, %v640
    %v649 = vcombine.high %v625, %v640
    %v651 = vunpack.c.l.s4 1934713408
    %v652 = vunpack.c.0.s8 %v651
    %v653 = vlaneseq
    %v654 = vshrl.u32 %v653, 7
    %v655 = vsub.s32 %v652, %v654
    %v656 = vrot.slane %v648, %v655
    %v658 = vunpack.c.l.s4 1934713408
    %v659 = vunpack.c.0.s8 %v658
    %v660 = vlaneseq
    %v661 = vshrl.u32 %v660, 7
    %v662 = vsub.s32 %v659, %v661
    %v663 = vrot.slane %v649, %v662
    %v664 = vcombine.low %v632, %v647
    %v665 = vcombine.high %v632, %v647
    %v667 = vunpack.c.l.s4 1934713408
    %v668 = vunpack.c.0.s8 %v667
    %v669 = vlaneseq
    %v670 = vshrl.u32 %v669, 7
    %v671 = vsub.s32 %v668, %v670
    %v672 = vrot.slane %v664, %v671
    %v674 = vunpack.c.l.s4 1934713408
    %v675 = vunpack.c.0.s8 %v674
    %v676 = vlaneseq
    %v677 = vshrl.u32 %v676, 7
    %v678 = vsub.s32 %v675, %v677
    %v679 = vrot.slane %v665, %v678
    %v680 = vcombine.high %v656, 0
    %v681 = vcombine.high %v663, 0
    %v682 = vcombine.high %v672, 0
    %v683 = vcombine.high %v679, 0
    %v684 = vcombine.low %v590, %v606
    %v686 = vunpack.c.l.s4 1983009808
    %v687 = vunpack.c.0.s8 %v686
    %v688 = vlaneseq
    %v689 = vshrl.u32 %v688, 7
    %v690 = vsub.s32 %v687, %v689
    %v691 = vrot.slane %v684, %v690
    %v692 = vcombine.low %v597, %v613
    %v694 = vunpack.c.l.s4 1983009808
    %v695 = vunpack.c.0.s8 %v694
    %v696 = vlaneseq
    %v697 = vshrl.u32 %v696, 7
    %v698 = vsub.s32 %v695, %v697
    %v699 = vrot.slane %v692, %v698
    %v700 = vcombine.low %v691, %v699
    %v702 = vunpack.c.l.s4 1934713408
    %v703 = vunpack.c.0.s8 %v702
    %v704 = vlaneseq
    %v705 = vshrl.u32 %v704, 7
    %v706 = vsub.s32 %v703, %v705
    %v707 = vrot.slane %v700, %v706
    %v708 = vcombine.high %v707, 0
    %v709 = vcombine.low %v614, %v616
    %v711 = vunpack.c.l.s4 1983009808
    %v712 = vunpack.c.0.s8 %v711
    %v713 = vlaneseq
    %v714 = vshrl.u32 %v713, 7
    %v715 = vsub.s32 %v712, %v714
    %v716 = vrot.slane %v709, %v715
    %v717 = vcombine.low %v615, %v617
    %v719 = vunpack.c.l.s4 1983009808
    %v720 = vunpack.c.0.s8 %v719
    %v721 = vlaneseq
    %v722 = vshrl.u32 %v721, 7
    %v723 = vsub.s32 %v720, %v722
    %v724 = vrot.slane %v717, %v723
    %v725 = vcombine.low %v716, %v724
    %v727 = vunpack.c.l.s4 1934713408
    %v728 = vunpack.c.0.s8 %v727
    %v729 = vlaneseq
    %v730 = vshrl.u32 %v729, 7
    %v731 = vsub.s32 %v728, %v730
    %v732 = vrot.slane %v725, %v731
    %v733 = vcombine.high %v732, 0
    %v734 = vcombine.low %v656, %v672
    %v736 = vunpack.c.l.s4 1983009808
    %v737 = vunpack.c.0.s8 %v736
    %v738 = vlaneseq
    %v739 = vshrl.u32 %v738, 7
    %v740 = vsub.s32 %v737, %v739
    %v741 = vrot.slane %v734, %v740
    %v742 = vcombine.low %v663, %v679
    %v744 = vunpack.c.l.s4 1983009808
    %v745 = vunpack.c.0.s8 %v744
    %v746 = vlaneseq
    %v747 = vshrl.u32 %v746, 7
    %v748 = vsub.s32 %v745, %v747
    %v749 = vrot.slane %v742, %v748
    %v750 = vcombine.low %v741, %v749
    %v752 = vunpack.c.l.s4 1934713408
    %v753 = vunpack.c.0.s8 %v752
    %v754 = vlaneseq
    %v755 = vshrl.u32 %v754, 7
    %v756 = vsub.s32 %v753, %v755
    %v757 = vrot.slane %v750, %v756
    %v758 = vcombine.high %v757, 0
    %v759 = vcombine.low %v680, %v682
    %v761 = vunpack.c.l.s4 1983009808
    %v762 = vunpack.c.0.s8 %v761
    %v763 = vlaneseq
    %v764 = vshrl.u32 %v763, 7
    %v765 = vsub.s32 %v762, %v764
    %v766 = vrot.slane %v759, %v765
    %v767 = vcombine.low %v681, %v683
    %v769 = vunpack.c.l.s4 1983009808
    %v770 = vunpack.c.0.s8 %v769
    %v771 = vlaneseq
    %v772 = vshrl.u32 %v771, 7
    %v773 = vsub.s32 %v770, %v772
    %v774 = vrot.slane %v767, %v773
    %v775 = vcombine.low %v766, %v774
    %v777 = vunpack.c.l.s4 1934713408
    %v778 = vunpack.c.0.s8 %v777
    %v779 = vlaneseq
    %v780 = vshrl.u32 %v779, 7
    %v781 = vsub.s32 %v778, %v780
    %v782 = vrot.slane %v775, %v781
    %v783 = vcombine.high %v782, 0
    %v786 = vpack.i.b16 %v732, %v707
    %v787 = vshrl.u32 %v707, 16
    %v788 = vshrl.u32 %v732, 16
    %v789 = vpack.i.b16 %v788, %v787
    %v792 = vpack.i.b16 %v733, %v708
    %v793 = vshrl.u32 %v708, 16
    %v794 = vshrl.u32 %v733, 16
    %v795 = vpack.i.b16 %v794, %v793
    %v798 = vpack.i.b16 %v782, %v757
    %v799 = vshrl.u32 %v757, 16
    %v800 = vshrl.u32 %v782, 16
    %v801 = vpack.i.b16 %v800, %v799
    %v804 = vpack.i.b16 %v783, %v758
    %v805 = vshrl.u32 %v758, 16
    %v806 = vshrl.u32 %v783, 16
    %v807 = vpack.i.b16 %v806, %v805
    %808 = vrot.lane.b32.xlu0 %v242, 64
    %v809 = vpop.permute.xlu0 %808
    %810 = vrot.lane.b32.xlu0 %v245, 64
    %v811 = vpop.permute.xlu0 %810
    %812 = vrot.lane.b32.xlu0 %v247, 64
    %v813 = vpop.permute.xlu0 %812
    %814 = vrot.lane.b32.xlu0 %v249, 64
    %v815 = vpop.permute.xlu0 %814
    %v818 = vpack.i.b16 %v811, %v809
    %v820 = vshrl.u32 %v809, 16
    %v821 = vshrl.u32 %v811, 16
    %v822 = vpack.i.b16 %v821, %v820
    %v826 = vpack.i.b16 %v815, %v813
    %v828 = vshrl.u32 %v813, 16
    %v829 = vshrl.u32 %v815, 16
    %v830 = vpack.i.b16 %v829, %v828
    %v832 = vcombine.high %v818, %v267
    %v834 = vunpack.c.l.s4 1983009808
    %v835 = vunpack.c.0.s8 %v834
    %v836 = vlaneseq
    %v837 = vshrl.u32 %v836, 7
    %v838 = vsub.s32 %v835, %v837
    %v839 = vrot.slane %v818, %v838
    %v841 = vunpack.c.l.s4 1983009808
    %v842 = vunpack.c.0.s8 %v841
    %v843 = vlaneseq
    %v844 = vshrl.u32 %v843, 7
    %v845 = vsub.s32 %v842, %v844
    %v846 = vrot.slane %v832, %v845
    %v847 = vcombine.high %v826, %v267
    %v849 = vunpack.c.l.s4 1983009808
    %v850 = vunpack.c.0.s8 %v849
    %v851 = vlaneseq
    %v852 = vshrl.u32 %v851, 7
    %v853 = vsub.s32 %v850, %v852
    %v854 = vrot.slane %v826, %v853
    %v856 = vunpack.c.l.s4 1983009808
    %v857 = vunpack.c.0.s8 %v856
    %v858 = vlaneseq
    %v859 = vshrl.u32 %v858, 7
    %v860 = vsub.s32 %v857, %v859
    %v861 = vrot.slane %v847, %v860
    %v862 = vcombine.low %v839, %v854
    %v863 = vcombine.high %v839, %v854
    %v865 = vunpack.c.l.s4 1934713408
    %v866 = vunpack.c.0.s8 %v865
    %v867 = vlaneseq
    %v868 = vshrl.u32 %v867, 7
    %v869 = vsub.s32 %v866, %v868
    %v870 = vrot.slane %v862, %v869
    %v872 = vunpack.c.l.s4 1934713408
    %v873 = vunpack.c.0.s8 %v872
    %v874 = vlaneseq
    %v875 = vshrl.u32 %v874, 7
    %v876 = vsub.s32 %v873, %v875
    %v877 = vrot.slane %v863, %v876
    %v878 = vcombine.low %v846, %v861
    %v879 = vcombine.high %v846, %v861
    %v881 = vunpack.c.l.s4 1934713408
    %v882 = vunpack.c.0.s8 %v881
    %v883 = vlaneseq
    %v884 = vshrl.u32 %v883, 7
    %v885 = vsub.s32 %v882, %v884
    %v886 = vrot.slane %v878, %v885
    %v888 = vunpack.c.l.s4 1934713408
    %v889 = vunpack.c.0.s8 %v888
    %v890 = vlaneseq
    %v891 = vshrl.u32 %v890, 7
    %v892 = vsub.s32 %v889, %v891
    %v893 = vrot.slane %v879, %v892
    %v894 = vcombine.high %v870, 0
    %v895 = vcombine.high %v877, 0
    %v896 = vcombine.high %v886, 0
    %v897 = vcombine.high %v893, 0
    %v898 = vcombine.high %v822, %v270
    %v900 = vunpack.c.l.s4 1983009808
    %v901 = vunpack.c.0.s8 %v900
    %v902 = vlaneseq
    %v903 = vshrl.u32 %v902, 7
    %v904 = vsub.s32 %v901, %v903
    %v905 = vrot.slane %v822, %v904
    %v907 = vunpack.c.l.s4 1983009808
    %v908 = vunpack.c.0.s8 %v907
    %v909 = vlaneseq
    %v910 = vshrl.u32 %v909, 7
    %v911 = vsub.s32 %v908, %v910
    %v912 = vrot.slane %v898, %v911
    %v913 = vcombine.high %v830, %v270
    %v915 = vunpack.c.l.s4 1983009808
    %v916 = vunpack.c.0.s8 %v915
    %v917 = vlaneseq
    %v918 = vshrl.u32 %v917, 7
    %v919 = vsub.s32 %v916, %v918
    %v920 = vrot.slane %v830, %v919
    %v922 = vunpack.c.l.s4 1983009808
    %v923 = vunpack.c.0.s8 %v922
    %v924 = vlaneseq
    %v925 = vshrl.u32 %v924, 7
    %v926 = vsub.s32 %v923, %v925
    %v927 = vrot.slane %v913, %v926
    %v928 = vcombine.low %v905, %v920
    %v929 = vcombine.high %v905, %v920
    %v931 = vunpack.c.l.s4 1934713408
    %v932 = vunpack.c.0.s8 %v931
    %v933 = vlaneseq
    %v934 = vshrl.u32 %v933, 7
    %v935 = vsub.s32 %v932, %v934
    %v936 = vrot.slane %v928, %v935
    %v938 = vunpack.c.l.s4 1934713408
    %v939 = vunpack.c.0.s8 %v938
    %v940 = vlaneseq
    %v941 = vshrl.u32 %v940, 7
    %v942 = vsub.s32 %v939, %v941
    %v943 = vrot.slane %v929, %v942
    %v944 = vcombine.low %v912, %v927
    %v945 = vcombine.high %v912, %v927
    %v947 = vunpack.c.l.s4 1934713408
    %v948 = vunpack.c.0.s8 %v947
    %v949 = vlaneseq
    %v950 = vshrl.u32 %v949, 7
    %v951 = vsub.s32 %v948, %v950
    %v952 = vrot.slane %v944, %v951
    %v954 = vunpack.c.l.s4 1934713408
    %v955 = vunpack.c.0.s8 %v954
    %v956 = vlaneseq
    %v957 = vshrl.u32 %v956, 7
    %v958 = vsub.s32 %v955, %v957
    %v959 = vrot.slane %v945, %v958
    %v960 = vcombine.high %v936, 0
    %v961 = vcombine.high %v943, 0
    %v962 = vcombine.high %v952, 0
    %v963 = vcombine.high %v959, 0
    %v964 = vcombine.low %v870, %v886
    %v966 = vunpack.c.l.s4 1983009808
    %v967 = vunpack.c.0.s8 %v966
    %v968 = vlaneseq
    %v969 = vshrl.u32 %v968, 7
    %v970 = vsub.s32 %v967, %v969
    %v971 = vrot.slane %v964, %v970
    %v972 = vcombine.low %v877, %v893
    %v974 = vunpack.c.l.s4 1983009808
    %v975 = vunpack.c.0.s8 %v974
    %v976 = vlaneseq
    %v977 = vshrl.u32 %v976, 7
    %v978 = vsub.s32 %v975, %v977
    %v979 = vrot.slane %v972, %v978
    %v980 = vcombine.low %v971, %v979
    %v982 = vunpack.c.l.s4 1934713408
    %v983 = vunpack.c.0.s8 %v982
    %v984 = vlaneseq
    %v985 = vshrl.u32 %v984, 7
    %v986 = vsub.s32 %v983, %v985
    %v987 = vrot.slane %v980, %v986
    %v988 = vcombine.high %v987, 0
    %v989 = vcombine.low %v894, %v896
    %v991 = vunpack.c.l.s4 1983009808
    %v992 = vunpack.c.0.s8 %v991
    %v993 = vlaneseq
    %v994 = vshrl.u32 %v993, 7
    %v995 = vsub.s32 %v992, %v994
    %v996 = vrot.slane %v989, %v995
    %v997 = vcombine.low %v895, %v897
    %v999 = vunpack.c.l.s4 1983009808
    %v1000 = vunpack.c.0.s8 %v999
    %v1001 = vlaneseq
    %v1002 = vshrl.u32 %v1001, 7
    %v1003 = vsub.s32 %v1000, %v1002
    %v1004 = vrot.slane %v997, %v1003
    %v1005 = vcombine.low %v996, %v1004
    %v1007 = vunpack.c.l.s4 1934713408
    %v1008 = vunpack.c.0.s8 %v1007
    %v1009 = vlaneseq
    %v1010 = vshrl.u32 %v1009, 7
    %v1011 = vsub.s32 %v1008, %v1010
    %v1012 = vrot.slane %v1005, %v1011
    %v1013 = vcombine.high %v1012, 0
    %v1014 = vcombine.low %v936, %v952
    %v1016 = vunpack.c.l.s4 1983009808
    %v1017 = vunpack.c.0.s8 %v1016
    %v1018 = vlaneseq
    %v1019 = vshrl.u32 %v1018, 7
    %v1020 = vsub.s32 %v1017, %v1019
    %v1021 = vrot.slane %v1014, %v1020
    %v1022 = vcombine.low %v943, %v959
    %v1024 = vunpack.c.l.s4 1983009808
    %v1025 = vunpack.c.0.s8 %v1024
    %v1026 = vlaneseq
    %v1027 = vshrl.u32 %v1026, 7
    %v1028 = vsub.s32 %v1025, %v1027
    %v1029 = vrot.slane %v1022, %v1028
    %v1030 = vcombine.low %v1021, %v1029
    %v1032 = vunpack.c.l.s4 1934713408
    %v1033 = vunpack.c.0.s8 %v1032
    %v1034 = vlaneseq
    %v1035 = vshrl.u32 %v1034, 7
    %v1036 = vsub.s32 %v1033, %v1035
    %v1037 = vrot.slane %v1030, %v1036
    %v1038 = vcombine.high %v1037, 0
    %v1039 = vcombine.low %v960, %v962
    %v1041 = vunpack.c.l.s4 1983009808
    %v1042 = vunpack.c.0.s8 %v1041
    %v1043 = vlaneseq
    %v1044 = vshrl.u32 %v1043, 7
    %v1045 = vsub.s32 %v1042, %v1044
    %v1046 = vrot.slane %v1039, %v1045
    %v1047 = vcombine.low %v961, %v963
    %v1049 = vunpack.c.l.s4 1983009808
    %v1050 = vunpack.c.0.s8 %v1049
    %v1051 = vlaneseq
    %v1052 = vshrl.u32 %v1051, 7
    %v1053 = vsub.s32 %v1050, %v1052
    %v1054 = vrot.slane %v1047, %v1053
    %v1055 = vcombine.low %v1046, %v1054
    %v1057 = vunpack.c.l.s4 1934713408
    %v1058 = vunpack.c.0.s8 %v1057
    %v1059 = vlaneseq
    %v1060 = vshrl.u32 %v1059, 7
    %v1061 = vsub.s32 %v1058, %v1060
    %v1062 = vrot.slane %v1055, %v1061
    %v1063 = vcombine.high %v1062, 0
    %v1066 = vpack.i.b16 %v1012, %v987
    %v1067 = vshrl.u32 %v987, 16
    %v1068 = vshrl.u32 %v1012, 16
    %v1069 = vpack.i.b16 %v1068, %v1067
    %v1072 = vpack.i.b16 %v1013, %v988
    %v1073 = vshrl.u32 %v988, 16
    %v1074 = vshrl.u32 %v1013, 16
    %v1075 = vpack.i.b16 %v1074, %v1073
    %v1078 = vpack.i.b16 %v1062, %v1037
    %v1079 = vshrl.u32 %v1037, 16
    %v1080 = vshrl.u32 %v1062, 16
    %v1081 = vpack.i.b16 %v1080, %v1079
    %v1084 = vpack.i.b16 %v1063, %v1038
    %v1085 = vshrl.u32 %v1038, 16
    %v1086 = vshrl.u32 %v1063, 16
    %v1087 = vpack.i.b16 %v1086, %v1085
    %vm1088 = vcmask 64512
    %v1090 = vsel %vm1088, %v506, 0
    %v1093 = vsel %vm1088, %v786, 0
    %1095 = vmatprep.subr.bf16.mxu0 0
    %1096 = vmatpush1.bf16.xpose.msra.mxu0 0
    %1097 = vmatprep.subr.bf16.mxu0 0
    %1098 = vmatpush1.bf16.xpose.msra.mxu0 0
    %1099 = vmatprep.subr.bf16.mxu0 0
    %1100 = vmatpush1.bf16.xpose.msra.mxu0 0
    %1101 = vmatprep.subr.bf16.mxu0 0
    %1102 = vmatpush1.bf16.xpose.msra.mxu0 0
    %1103 = vmatprep.subr.bf16.mxu0 0
    %1104 = vmatpush1.bf16.xpose.msra.mxu0 0
    %1105 = vmatprep.subr.bf16.mxu0 0
    %1106 = vmatpush1.bf16.xpose.msra.mxu0 0
    %1107 = vmatprep.subr.bf16.mxu0 0
    %1108 = vmatpush1.bf16.xpose.msra.mxu0 0
    %1109 = vmatprep.subr.bf16.mxu0 0
    %1110 = vmatpush1.bf16.xpose.msra.mxu0 %v1093
    %1111 = vmatprep.subr.bf16.mxu0 0
    %1112 = vmatpush2.bf16.xpose.msra.mxu0 0
    %1113 = vmatprep.subr.bf16.mxu0 0
    %1114 = vmatpush2.bf16.xpose.msra.mxu0 0
    %1115 = vmatprep.subr.bf16.mxu0 0
    %1116 = vmatpush2.bf16.xpose.msra.mxu0 0
    %1117 = vmatprep.subr.bf16.mxu0 0
    %1118 = vmatpush2.bf16.xpose.msra.mxu0 0
    %1119 = vmatprep.subr.bf16.mxu0 0
    %1120 = vmatpush2.bf16.xpose.msra.mxu0 0
    %1121 = vmatprep.subr.bf16.mxu0 0
    %1122 = vmatpush2.bf16.xpose.msra.mxu0 0
    %1123 = vmatprep.subr.bf16.mxu0 0
    %1124 = vmatpush2.bf16.xpose.msra.mxu0 0
    %1125 = vmatprep.subr.bf16.mxu0 0
    %1126 = vmatpush2.bf16.xpose.msra.mxu0 0
    %1127 = vmatprep.mubr.bf16.mxu0 0
    %1128 = vmatmul.mubr.bf16.gmra.mxu0 %v1090
    %v1129 = vpop.f32.mrf.mxu0
    %v1130 = vadd.f32 0.0, %v1129
    %v1131 = vpop.f32.mrf.mxu0
    %v1132 = vpop.f32.mrf.mxu0
    %v1133 = vpop.f32.mrf.mxu0
    %1134 = vdwg.mxu0
    %v1136 = vsel %vm1088, %v509, 0
    %v1139 = vsel %vm1088, %v789, 0
    %1141 = vmatprep.subr.bf16.mxu0 0
    %1142 = vmatpush1.bf16.xpose.msra.mxu0 0
    %1143 = vmatprep.subr.bf16.mxu0 0
    %1144 = vmatpush1.bf16.xpose.msra.mxu0 0
    %1145 = vmatprep.subr.bf16.mxu0 0
    %1146 = vmatpush1.bf16.xpose.msra.mxu0 0
    %1147 = vmatprep.subr.bf16.mxu0 0
    %1148 = vmatpush1.bf16.xpose.msra.mxu0 0
    %1149 = vmatprep.subr.bf16.mxu0 0
    %1150 = vmatpush1.bf16.xpose.msra.mxu0 0
    %1151 = vmatprep.subr.bf16.mxu0 0
    %1152 = vmatpush1.bf16.xpose.msra.mxu0 0
    %1153 = vmatprep.subr.bf16.mxu0 0
    %1154 = vmatpush1.bf16.xpose.msra.mxu0 0
    %1155 = vmatprep.subr.bf16.mxu0 0
    %1156 = vmatpush1.bf16.xpose.msra.mxu0 %v1139
    %1157 = vmatprep.subr.bf16.mxu0 0
    %1158 = vmatpush2.bf16.xpose.msra.mxu0 0
    %1159 = vmatprep.subr.bf16.mxu0 0
    %1160 = vmatpush2.bf16.xpose.msra.mxu0 0
    %1161 = vmatprep.subr.bf16.mxu0 0
    %1162 = vmatpush2.bf16.xpose.msra.mxu0 0
    %1163 = vmatprep.subr.bf16.mxu0 0
    %1164 = vmatpush2.bf16.xpose.msra.mxu0 0
    %1165 = vmatprep.subr.bf16.mxu0 0
    %1166 = vmatpush2.bf16.xpose.msra.mxu0 0
    %1167 = vmatprep.subr.bf16.mxu0 0
    %1168 = vmatpush2.bf16.xpose.msra.mxu0 0
    %1169 = vmatprep.subr.bf16.mxu0 0
    %1170 = vmatpush2.bf16.xpose.msra.mxu0 0
    %1171 = vmatprep.subr.bf16.mxu0 0
    %1172 = vmatpush2.bf16.xpose.msra.mxu0 0
    %1173 = vmatprep.mubr.bf16.mxu0 0
    %1174 = vmatmul.mubr.bf16.gmra.mxu0 %v1136
    %v1175 = vpop.f32.mrf.mxu0
    %v1176 = vadd.f32 0.0, %v1175
    %v1177 = vpop.f32.mrf.mxu0
    %v1178 = vpop.f32.mrf.mxu0
    %v1179 = vpop.f32.mrf.mxu0
    %1180 = vdwg.mxu0
    %v1182 = vsel %vm1088, %v512, 0
    %v1185 = vsel %vm1088, %v792, 0
    %1187 = vmatprep.subr.bf16.mxu0 0
    %1188 = vmatpush1.bf16.xpose.msra.mxu0 0
    %1189 = vmatprep.subr.bf16.mxu0 0
    %1190 = vmatpush1.bf16.xpose.msra.mxu0 0
    %1191 = vmatprep.subr.bf16.mxu0 0
    %1192 = vmatpush1.bf16.xpose.msra.mxu0 0
    %1193 = vmatprep.subr.bf16.mxu0 0
    %1194 = vmatpush1.bf16.xpose.msra.mxu0 0
    %1195 = vmatprep.subr.bf16.mxu0 0
    %1196 = vmatpush1.bf16.xpose.msra.mxu0 0
    %1197 = vmatprep.subr.bf16.mxu0 0
    %1198 = vmatpush1.bf16.xpose.msra.mxu0 0
    %1199 = vmatprep.subr.bf16.mxu0 0
    %1200 = vmatpush1.bf16.xpose.msra.mxu0 0
    %1201 = vmatprep.subr.bf16.mxu0 0
    %1202 = vmatpush1.bf16.xpose.msra.mxu0 %v1185
    %1203 = vmatprep.subr.bf16.mxu0 0
    %1204 = vmatpush2.bf16.xpose.msra.mxu0 0
    %1205 = vmatprep.subr.bf16.mxu0 0
    %1206 = vmatpush2.bf16.xpose.msra.mxu0 0
    %1207 = vmatprep.subr.bf16.mxu0 0
    %1208 = vmatpush2.bf16.xpose.msra.mxu0 0
    %1209 = vmatprep.subr.bf16.mxu0 0
    %1210 = vmatpush2.bf16.xpose.msra.mxu0 0
    %1211 = vmatprep.subr.bf16.mxu0 0
    %1212 = vmatpush2.bf16.xpose.msra.mxu0 0
    %1213 = vmatprep.subr.bf16.mxu0 0
    %1214 = vmatpush2.bf16.xpose.msra.mxu0 0
    %1215 = vmatprep.subr.bf16.mxu0 0
    %1216 = vmatpush2.bf16.xpose.msra.mxu0 0
    %1217 = vmatprep.subr.bf16.mxu0 0
    %1218 = vmatpush2.bf16.xpose.msra.mxu0 0
    %1219 = vmatprep.mubr.bf16.mxu0 0
    %1220 = vmatmul.mubr.bf16.gmra.mxu0 %v1182
    %v1221 = vpop.f32.mrf.mxu0
    %v1222 = vadd.f32 0.0, %v1221
    %v1223 = vpop.f32.mrf.mxu0
    %v1224 = vpop.f32.mrf.mxu0
    %v1225 = vpop.f32.mrf.mxu0
    %1226 = vdwg.mxu0
    %v1228 = vsel %vm1088, %v515, 0
    %v1231 = vsel %vm1088, %v795, 0
    %1233 = vmatprep.subr.bf16.mxu0 0
    %1234 = vmatpush1.bf16.xpose.msra.mxu0 0
    %1235 = vmatprep.subr.bf16.mxu0 0
    %1236 = vmatpush1.bf16.xpose.msra.mxu0 0
    %1237 = vmatprep.subr.bf16.mxu0 0
    %1238 = vmatpush1.bf16.xpose.msra.mxu0 0
    %1239 = vmatprep.subr.bf16.mxu0 0
    %1240 = vmatpush1.bf16.xpose.msra.mxu0 0
    %1241 = vmatprep.subr.bf16.mxu0 0
    %1242 = vmatpush1.bf16.xpose.msra.mxu0 0
    %1243 = vmatprep.subr.bf16.mxu0 0
    %1244 = vmatpush1.bf16.xpose.msra.mxu0 0
    %1245 = vmatprep.subr.bf16.mxu0 0
    %1246 = vmatpush1.bf16.xpose.msra.mxu0 0
    %1247 = vmatprep.subr.bf16.mxu0 0
    %1248 = vmatpush1.bf16.xpose.msra.mxu0 %v1231
    %1249 = vmatprep.subr.bf16.mxu0 0
    %1250 = vmatpush2.bf16.xpose.msra.mxu0 0
    %1251 = vmatprep.subr.bf16.mxu0 0
    %1252 = vmatpush2.bf16.xpose.msra.mxu0 0
    %1253 = vmatprep.subr.bf16.mxu0 0
    %1254 = vmatpush2.bf16.xpose.msra.mxu0 0
    %1255 = vmatprep.subr.bf16.mxu0 0
    %1256 = vmatpush2.bf16.xpose.msra.mxu0 0
    %1257 = vmatprep.subr.bf16.mxu0 0
    %1258 = vmatpush2.bf16.xpose.msra.mxu0 0
    %1259 = vmatprep.subr.bf16.mxu0 0
    %1260 = vmatpush2.bf16.xpose.msra.mxu0 0
    %1261 = vmatprep.subr.bf16.mxu0 0
    %1262 = vmatpush2.bf16.xpose.msra.mxu0 0
    %1263 = vmatprep.subr.bf16.mxu0 0
    %1264 = vmatpush2.bf16.xpose.msra.mxu0 0
    %1265 = vmatprep.mubr.bf16.mxu0 0
    %1266 = vmatmul.mubr.bf16.gmra.mxu0 %v1228
    %v1267 = vpop.f32.mrf.mxu0
    %v1268 = vadd.f32 0.0, %v1267
    %v1269 = vpop.f32.mrf.mxu0
    %v1270 = vpop.f32.mrf.mxu0
    %v1271 = vpop.f32.mrf.mxu0
    %1272 = vdwg.mxu0
    %v1274 = vsel %vm1088, %v518, 0
    %v1277 = vsel %vm1088, %v798, 0
    %1279 = vmatprep.subr.bf16.mxu0 0
    %1280 = vmatpush1.bf16.xpose.msra.mxu0 0
    %1281 = vmatprep.subr.bf16.mxu0 0
    %1282 = vmatpush1.bf16.xpose.msra.mxu0 0
    %1283 = vmatprep.subr.bf16.mxu0 0
    %1284 = vmatpush1.bf16.xpose.msra.mxu0 0
    %1285 = vmatprep.subr.bf16.mxu0 0
    %1286 = vmatpush1.bf16.xpose.msra.mxu0 0
    %1287 = vmatprep.subr.bf16.mxu0 0
    %1288 = vmatpush1.bf16.xpose.msra.mxu0 0
    %1289 = vmatprep.subr.bf16.mxu0 0
    %1290 = vmatpush1.bf16.xpose.msra.mxu0 0
    %1291 = vmatprep.subr.bf16.mxu0 0
    %1292 = vmatpush1.bf16.xpose.msra.mxu0 0
    %1293 = vmatprep.subr.bf16.mxu0 0
    %1294 = vmatpush1.bf16.xpose.msra.mxu0 %v1277
    %1295 = vmatprep.subr.bf16.mxu0 0
    %1296 = vmatpush2.bf16.xpose.msra.mxu0 0
    %1297 = vmatprep.subr.bf16.mxu0 0
    %1298 = vmatpush2.bf16.xpose.msra.mxu0 0
    %1299 = vmatprep.subr.bf16.mxu0 0
    %1300 = vmatpush2.bf16.xpose.msra.mxu0 0
    %1301 = vmatprep.subr.bf16.mxu0 0
    %1302 = vmatpush2.bf16.xpose.msra.mxu0 0
    %1303 = vmatprep.subr.bf16.mxu0 0
    %1304 = vmatpush2.bf16.xpose.msra.mxu0 0
    %1305 = vmatprep.subr.bf16.mxu0 0
    %1306 = vmatpush2.bf16.xpose.msra.mxu0 0
    %1307 = vmatprep.subr.bf16.mxu0 0
    %1308 = vmatpush2.bf16.xpose.msra.mxu0 0
    %1309 = vmatprep.subr.bf16.mxu0 0
    %1310 = vmatpush2.bf16.xpose.msra.mxu0 0
    %1311 = vmatprep.mubr.bf16.mxu0 0
    %1312 = vmatmul.mubr.bf16.gmra.mxu0 %v1274
    %v1313 = vpop.f32.mrf.mxu0
    %v1314 = vadd.f32 0.0, %v1313
    %v1315 = vpop.f32.mrf.mxu0
    %v1316 = vpop.f32.mrf.mxu0
    %v1317 = vpop.f32.mrf.mxu0
    %1318 = vdwg.mxu0
    %v1320 = vsel %vm1088, %v521, 0
    %v1323 = vsel %vm1088, %v801, 0
    %1325 = vmatprep.subr.bf16.mxu0 0
    %1326 = vmatpush1.bf16.xpose.msra.mxu0 0
    %1327 = vmatprep.subr.bf16.mxu0 0
    %1328 = vmatpush1.bf16.xpose.msra.mxu0 0
    %1329 = vmatprep.subr.bf16.mxu0 0
    %1330 = vmatpush1.bf16.xpose.msra.mxu0 0
    %1331 = vmatprep.subr.bf16.mxu0 0
    %1332 = vmatpush1.bf16.xpose.msra.mxu0 0
    %1333 = vmatprep.subr.bf16.mxu0 0
    %1334 = vmatpush1.bf16.xpose.msra.mxu0 0
    %1335 = vmatprep.subr.bf16.mxu0 0
    %1336 = vmatpush1.bf16.xpose.msra.mxu0 0
    %1337 = vmatprep.subr.bf16.mxu0 0
    %1338 = vmatpush1.bf16.xpose.msra.mxu0 0
    %1339 = vmatprep.subr.bf16.mxu0 0
    %1340 = vmatpush1.bf16.xpose.msra.mxu0 %v1323
    %1341 = vmatprep.subr.bf16.mxu0 0
    %1342 = vmatpush2.bf16.xpose.msra.mxu0 0
    %1343 = vmatprep.subr.bf16.mxu0 0
    %1344 = vmatpush2.bf16.xpose.msra.mxu0 0
    %1345 = vmatprep.subr.bf16.mxu0 0
    %1346 = vmatpush2.bf16.xpose.msra.mxu0 0
    %1347 = vmatprep.subr.bf16.mxu0 0
    %1348 = vmatpush2.bf16.xpose.msra.mxu0 0
    %1349 = vmatprep.subr.bf16.mxu0 0
    %1350 = vmatpush2.bf16.xpose.msra.mxu0 0
    %1351 = vmatprep.subr.bf16.mxu0 0
    %1352 = vmatpush2.bf16.xpose.msra.mxu0 0
    %1353 = vmatprep.subr.bf16.mxu0 0
    %1354 = vmatpush2.bf16.xpose.msra.mxu0 0
    %1355 = vmatprep.subr.bf16.mxu0 0
    %1356 = vmatpush2.bf16.xpose.msra.mxu0 0
    %1357 = vmatprep.mubr.bf16.mxu0 0
    %1358 = vmatmul.mubr.bf16.gmra.mxu0 %v1320
    %v1359 = vpop.f32.mrf.mxu0
    %v1360 = vadd.f32 0.0, %v1359
    %v1361 = vpop.f32.mrf.mxu0
    %v1362 = vpop.f32.mrf.mxu0
    %v1363 = vpop.f32.mrf.mxu0
    %1364 = vdwg.mxu0
    %v1366 = vsel %vm1088, %v524, 0
    %v1369 = vsel %vm1088, %v804, 0
    %1371 = vmatprep.subr.bf16.mxu0 0
    %1372 = vmatpush1.bf16.xpose.msra.mxu0 0
    %1373 = vmatprep.subr.bf16.mxu0 0
    %1374 = vmatpush1.bf16.xpose.msra.mxu0 0
    %1375 = vmatprep.subr.bf16.mxu0 0
    %1376 = vmatpush1.bf16.xpose.msra.mxu0 0
    %1377 = vmatprep.subr.bf16.mxu0 0
    %1378 = vmatpush1.bf16.xpose.msra.mxu0 0
    %1379 = vmatprep.subr.bf16.mxu0 0
    %1380 = vmatpush1.bf16.xpose.msra.mxu0 0
    %1381 = vmatprep.subr.bf16.mxu0 0
    %1382 = vmatpush1.bf16.xpose.msra.mxu0 0
    %1383 = vmatprep.subr.bf16.mxu0 0
    %1384 = vmatpush1.bf16.xpose.msra.mxu0 0
    %1385 = vmatprep.subr.bf16.mxu0 0
    %1386 = vmatpush1.bf16.xpose.msra.mxu0 %v1369
    %1387 = vmatprep.subr.bf16.mxu0 0
    %1388 = vmatpush2.bf16.xpose.msra.mxu0 0
    %1389 = vmatprep.subr.bf16.mxu0 0
    %1390 = vmatpush2.bf16.xpose.msra.mxu0 0
    %1391 = vmatprep.subr.bf16.mxu0 0
    %1392 = vmatpush2.bf16.xpose.msra.mxu0 0
    %1393 = vmatprep.subr.bf16.mxu0 0
    %1394 = vmatpush2.bf16.xpose.msra.mxu0 0
    %1395 = vmatprep.subr.bf16.mxu0 0
    %1396 = vmatpush2.bf16.xpose.msra.mxu0 0
    %1397 = vmatprep.subr.bf16.mxu0 0
    %1398 = vmatpush2.bf16.xpose.msra.mxu0 0
    %1399 = vmatprep.subr.bf16.mxu0 0
    %1400 = vmatpush2.bf16.xpose.msra.mxu0 0
    %1401 = vmatprep.subr.bf16.mxu0 0
    %1402 = vmatpush2.bf16.xpose.msra.mxu0 0
    %1403 = vmatprep.mubr.bf16.mxu0 0
    %1404 = vmatmul.mubr.bf16.gmra.mxu0 %v1366
    %v1405 = vpop.f32.mrf.mxu0
    %v1406 = vadd.f32 0.0, %v1405
    %v1407 = vpop.f32.mrf.mxu0
    %v1408 = vpop.f32.mrf.mxu0
    %v1409 = vpop.f32.mrf.mxu0
    %1410 = vdwg.mxu0
    %v1412 = vsel %vm1088, %v527, 0
    %v1415 = vsel %vm1088, %v807, 0
    %1417 = vmatprep.subr.bf16.mxu0 0
    %1418 = vmatpush1.bf16.xpose.msra.mxu0 0
    %1419 = vmatprep.subr.bf16.mxu0 0
    %1420 = vmatpush1.bf16.xpose.msra.mxu0 0
    %1421 = vmatprep.subr.bf16.mxu0 0
    %1422 = vmatpush1.bf16.xpose.msra.mxu0 0
    %1423 = vmatprep.subr.bf16.mxu0 0
    %1424 = vmatpush1.bf16.xpose.msra.mxu0 0
    %1425 = vmatprep.subr.bf16.mxu0 0
    %1426 = vmatpush1.bf16.xpose.msra.mxu0 0
    %1427 = vmatprep.subr.bf16.mxu0 0
    %1428 = vmatpush1.bf16.xpose.msra.mxu0 0
    %1429 = vmatprep.subr.bf16.mxu0 0
    %1430 = vmatpush1.bf16.xpose.msra.mxu0 0
    %1431 = vmatprep.subr.bf16.mxu0 0
    %1432 = vmatpush1.bf16.xpose.msra.mxu0 %v1415
    %1433 = vmatprep.subr.bf16.mxu0 0
    %1434 = vmatpush2.bf16.xpose.msra.mxu0 0
    %1435 = vmatprep.subr.bf16.mxu0 0
    %1436 = vmatpush2.bf16.xpose.msra.mxu0 0
    %1437 = vmatprep.subr.bf16.mxu0 0
    %1438 = vmatpush2.bf16.xpose.msra.mxu0 0
    %1439 = vmatprep.subr.bf16.mxu0 0
    %1440 = vmatpush2.bf16.xpose.msra.mxu0 0
    %1441 = vmatprep.subr.bf16.mxu0 0
    %1442 = vmatpush2.bf16.xpose.msra.mxu0 0
    %1443 = vmatprep.subr.bf16.mxu0 0
    %1444 = vmatpush2.bf16.xpose.msra.mxu0 0
    %1445 = vmatprep.subr.bf16.mxu0 0
    %1446 = vmatpush2.bf16.xpose.msra.mxu0 0
    %1447 = vmatprep.subr.bf16.mxu0 0
    %1448 = vmatpush2.bf16.xpose.msra.mxu0 0
    %1449 = vmatprep.mubr.bf16.mxu0 0
    %1450 = vmatmul.mubr.bf16.gmra.mxu0 %v1412
    %v1451 = vpop.f32.mrf.mxu0
    %v1452 = vadd.f32 0.0, %v1451
    %v1453 = vpop.f32.mrf.mxu0
    %v1454 = vpop.f32.mrf.mxu0
    %v1455 = vpop.f32.mrf.mxu0
    %1456 = vdwg.mxu0
    %v1457 = vsel %vm1088, %v1130, -inf
    %1458 = vmax.xlane.f32.xlu0 %v1457
    %v1459 = vpop.xlane.xlu0 %1458
    %v1460 = vsel %vm1088, %v1176, -inf
    %1461 = vmax.xlane.f32.xlu0 %v1460
    %v1462 = vpop.xlane.xlu0 %1461
    %v1463 = vsel %vm1088, %v1222, -inf
    %1464 = vmax.xlane.f32.xlu0 %v1463
    %v1465 = vpop.xlane.xlu0 %1464
    %v1466 = vsel %vm1088, %v1268, -inf
    %1467 = vmax.xlane.f32.xlu0 %v1466
    %v1468 = vpop.xlane.xlu0 %1467
    %v1469 = vsel %vm1088, %v1314, -inf
    %1470 = vmax.xlane.f32.xlu0 %v1469
    %v1471 = vpop.xlane.xlu0 %1470
    %v1472 = vsel %vm1088, %v1360, -inf
    %1473 = vmax.xlane.f32.xlu0 %v1472
    %v1474 = vpop.xlane.xlu0 %1473
    %v1475 = vsel %vm1088, %v1406, -inf
    %1476 = vmax.xlane.f32.xlu0 %v1475
    %v1477 = vpop.xlane.xlu0 %1476
    %v1478 = vsel %vm1088, %v1452, -inf
    %1479 = vmax.xlane.f32.xlu0 %v1478
    %v1480 = vpop.xlane.xlu0 %1479
    %v1481 = vsub.f32 %v1130, %v1459
    %v1482 = vsub.f32 %v1176, %v1462
    %v1483 = vsub.f32 %v1222, %v1465
    %v1484 = vsub.f32 %v1268, %v1468
    %v1485 = vsub.f32 %v1314, %v1471
    %v1486 = vsub.f32 %v1360, %v1474
    %v1487 = vsub.f32 %v1406, %v1477
    %v1488 = vsub.f32 %v1452, %v1480
    %v1489 = vmul.f32 %v1481, 1.442695
    %v1490 = vpow.pop %v1489
    %v1491 = vmul.f32 %v1482, 1.442695
    %v1492 = vpow.pop %v1491
    %v1493 = vmul.f32 %v1483, 1.442695
    %v1494 = vpow.pop %v1493
    %v1495 = vmul.f32 %v1484, 1.442695
    %v1496 = vpow.pop %v1495
    %v1497 = vmul.f32 %v1485, 1.442695
    %v1498 = vpow.pop %v1497
    %v1499 = vmul.f32 %v1486, 1.442695
    %v1500 = vpow.pop %v1499
    %v1501 = vmul.f32 %v1487, 1.442695
    %v1502 = vpow.pop %v1501
    %v1503 = vmul.f32 %v1488, 1.442695
    %v1504 = vpow.pop %v1503
    %v1505 = vsel %vm1088, %v1490, 0.0
    %1506 = vadd.xlane.f32.xlu0 %v1505
    %v1507 = vpop.xlane.xlu0 %1506
    %v1508 = vsel %vm1088, %v1492, 0.0
    %1509 = vadd.xlane.f32.xlu0 %v1508
    %v1510 = vpop.xlane.xlu0 %1509
    %v1511 = vsel %vm1088, %v1494, 0.0
    %1512 = vadd.xlane.f32.xlu0 %v1511
    %v1513 = vpop.xlane.xlu0 %1512
    %v1514 = vsel %vm1088, %v1496, 0.0
    %1515 = vadd.xlane.f32.xlu0 %v1514
    %v1516 = vpop.xlane.xlu0 %1515
    %v1517 = vsel %vm1088, %v1498, 0.0
    %1518 = vadd.xlane.f32.xlu0 %v1517
    %v1519 = vpop.xlane.xlu0 %1518
    %v1520 = vsel %vm1088, %v1500, 0.0
    %1521 = vadd.xlane.f32.xlu0 %v1520
    %v1522 = vpop.xlane.xlu0 %1521
    %v1523 = vsel %vm1088, %v1502, 0.0
    %1524 = vadd.xlane.f32.xlu0 %v1523
    %v1525 = vpop.xlane.xlu0 %1524
    %v1526 = vsel %vm1088, %v1504, 0.0
    %1527 = vadd.xlane.f32.xlu0 %v1526
    %v1528 = vpop.xlane.xlu0 %1527
    %v1529 = vrcp.pop %v1507
    %v1530 = vrcp.pop %v1510
    %v1531 = vrcp.pop %v1513
    %v1532 = vrcp.pop %v1516
    %v1533 = vrcp.pop %v1519
    %v1534 = vrcp.pop %v1522
    %v1535 = vrcp.pop %v1525
    %v1536 = vrcp.pop %v1528
    %v1537 = vpack.c.bf16 %v1490, %v1490
    %v1538 = vpack.c.bf16 %v1492, %v1492
    %v1539 = vpack.c.bf16 %v1494, %v1494
    %v1540 = vpack.c.bf16 %v1496, %v1496
    %v1541 = vpack.c.bf16 %v1498, %v1498
    %v1542 = vpack.c.bf16 %v1500, %v1500
    %v1543 = vpack.c.bf16 %v1502, %v1502
    %v1544 = vpack.c.bf16 %v1504, %v1504
    %v1545 = vpack.c.bf16 %v1529, %v1529
    %v1546 = vpack.c.bf16 %v1530, %v1530
    %v1547 = vpack.c.bf16 %v1531, %v1531
    %v1548 = vpack.c.bf16 %v1532, %v1532
    %v1549 = vpack.c.bf16 %v1533, %v1533
    %v1550 = vpack.c.bf16 %v1534, %v1534
    %v1551 = vpack.c.bf16 %v1535, %v1535
    %v1552 = vpack.c.bf16 %v1536, %v1536
    %v1553 = vmul.bf16 %v1537, %v1545
    %v1554 = vmul.bf16 %v1538, %v1546
    %v1555 = vmul.bf16 %v1539, %v1547
    %v1556 = vmul.bf16 %v1540, %v1548
    %v1557 = vmul.bf16 %v1541, %v1549
    %v1558 = vmul.bf16 %v1542, %v1550
    %v1559 = vmul.bf16 %v1543, %v1551
    %v1560 = vmul.bf16 %v1544, %v1552
    %v1562 = vsel %vm1088, %v1553, 0
    %vm1564 = vcmask 1043456
    %v1566 = vsel %vm1564, %v1066, 0
    %1568 = vmatprep.subr.bf16.mxu0 0
    %1569 = vmatpush1.bf16.msra.mxu0 0
    %1570 = vmatprep.subr.bf16.mxu0 0
    %1571 = vmatpush1.bf16.msra.mxu0 0
    %1572 = vmatprep.subr.bf16.mxu0 0
    %1573 = vmatpush1.bf16.msra.mxu0 0
    %1574 = vmatprep.subr.bf16.mxu0 0
    %1575 = vmatpush1.bf16.msra.mxu0 0
    %1576 = vmatprep.subr.bf16.mxu0 0
    %1577 = vmatpush1.bf16.msra.mxu0 0
    %1578 = vmatprep.subr.bf16.mxu0 0
    %1579 = vmatpush1.bf16.msra.mxu0 0
    %1580 = vmatprep.subr.bf16.mxu0 0
    %1581 = vmatpush1.bf16.msra.mxu0 0
    %1582 = vmatprep.subr.bf16.mxu0 0
    %1583 = vmatpush1.bf16.msra.mxu0 %v1566
    %1584 = vmatprep.subr.bf16.mxu0 0
    %1585 = vmatpush2.bf16.msra.mxu0 0
    %1586 = vmatprep.subr.bf16.mxu0 0
    %1587 = vmatpush2.bf16.msra.mxu0 0
    %1588 = vmatprep.subr.bf16.mxu0 0
    %1589 = vmatpush2.bf16.msra.mxu0 0
    %1590 = vmatprep.subr.bf16.mxu0 0
    %1591 = vmatpush2.bf16.msra.mxu0 0
    %1592 = vmatprep.subr.bf16.mxu0 0
    %1593 = vmatpush2.bf16.msra.mxu0 0
    %1594 = vmatprep.subr.bf16.mxu0 0
    %1595 = vmatpush2.bf16.msra.mxu0 0
    %1596 = vmatprep.subr.bf16.mxu0 0
    %1597 = vmatpush2.bf16.msra.mxu0 0
    %1598 = vmatprep.subr.bf16.mxu0 0
    %1599 = vmatpush2.bf16.msra.mxu0 0
    %1600 = vmatprep.mubr.bf16.mxu0 0
    %1601 = vmatmul.mubr.bf16.gmra.mxu0 %v1562
    %v1602 = vpop.f32.mrf.mxu0
    %v1603 = vadd.f32 0.0, %v1602
    %v1604 = vpop.f32.mrf.mxu0
    %v1605 = vpop.f32.mrf.mxu0
    %v1606 = vpop.f32.mrf.mxu0
    %1607 = vdwg.mxu0
    %v1609 = vsel %vm1088, %v1554, 0
    %v1612 = vsel %vm1564, %v1069, 0
    %1614 = vmatprep.subr.bf16.mxu0 0
    %1615 = vmatpush1.bf16.msra.mxu0 0
    %1616 = vmatprep.subr.bf16.mxu0 0
    %1617 = vmatpush1.bf16.msra.mxu0 0
    %1618 = vmatprep.subr.bf16.mxu0 0
    %1619 = vmatpush1.bf16.msra.mxu0 0
    %1620 = vmatprep.subr.bf16.mxu0 0
    %1621 = vmatpush1.bf16.msra.mxu0 0
    %1622 = vmatprep.subr.bf16.mxu0 0
    %1623 = vmatpush1.bf16.msra.mxu0 0
    %1624 = vmatprep.subr.bf16.mxu0 0
    %1625 = vmatpush1.bf16.msra.mxu0 0
    %1626 = vmatprep.subr.bf16.mxu0 0
    %1627 = vmatpush1.bf16.msra.mxu0 0
    %1628 = vmatprep.subr.bf16.mxu0 0
    %1629 = vmatpush1.bf16.msra.mxu0 %v1612
    %1630 = vmatprep.subr.bf16.mxu0 0
    %1631 = vmatpush2.bf16.msra.mxu0 0
    %1632 = vmatprep.subr.bf16.mxu0 0
    %1633 = vmatpush2.bf16.msra.mxu0 0
    %1634 = vmatprep.subr.bf16.mxu0 0
    %1635 = vmatpush2.bf16.msra.mxu0 0
    %1636 = vmatprep.subr.bf16.mxu0 0
    %1637 = vmatpush2.bf16.msra.mxu0 0
    %1638 = vmatprep.subr.bf16.mxu0 0
    %1639 = vmatpush2.bf16.msra.mxu0 0
    %1640 = vmatprep.subr.bf16.mxu0 0
    %1641 = vmatpush2.bf16.msra.mxu0 0
    %1642 = vmatprep.subr.bf16.mxu0 0
    %1643 = vmatpush2.bf16.msra.mxu0 0
    %1644 = vmatprep.subr.bf16.mxu0 0
    %1645 = vmatpush2.bf16.msra.mxu0 0
    %1646 = vmatprep.mubr.bf16.mxu0 0
    %1647 = vmatmul.mubr.bf16.gmra.mxu0 %v1609
    %v1648 = vpop.f32.mrf.mxu0
    %v1649 = vadd.f32 0.0, %v1648
    %v1650 = vpop.f32.mrf.mxu0
    %v1651 = vpop.f32.mrf.mxu0
    %v1652 = vpop.f32.mrf.mxu0
    %1653 = vdwg.mxu0
    %v1655 = vsel %vm1088, %v1555, 0
    %v1658 = vsel %vm1564, %v1072, 0
    %1660 = vmatprep.subr.bf16.mxu0 0
    %1661 = vmatpush1.bf16.msra.mxu0 0
    %1662 = vmatprep.subr.bf16.mxu0 0
    %1663 = vmatpush1.bf16.msra.mxu0 0
    %1664 = vmatprep.subr.bf16.mxu0 0
    %1665 = vmatpush1.bf16.msra.mxu0 0
    %1666 = vmatprep.subr.bf16.mxu0 0
    %1667 = vmatpush1.bf16.msra.mxu0 0
    %1668 = vmatprep.subr.bf16.mxu0 0
    %1669 = vmatpush1.bf16.msra.mxu0 0
    %1670 = vmatprep.subr.bf16.mxu0 0
    %1671 = vmatpush1.bf16.msra.mxu0 0
    %1672 = vmatprep.subr.bf16.mxu0 0
    %1673 = vmatpush1.bf16.msra.mxu0 0
    %1674 = vmatprep.subr.bf16.mxu0 0
    %1675 = vmatpush1.bf16.msra.mxu0 %v1658
    %1676 = vmatprep.subr.bf16.mxu0 0
    %1677 = vmatpush2.bf16.msra.mxu0 0
    %1678 = vmatprep.subr.bf16.mxu0 0
    %1679 = vmatpush2.bf16.msra.mxu0 0
    %1680 = vmatprep.subr.bf16.mxu0 0
    %1681 = vmatpush2.bf16.msra.mxu0 0
    %1682 = vmatprep.subr.bf16.mxu0 0
    %1683 = vmatpush2.bf16.msra.mxu0 0
    %1684 = vmatprep.subr.bf16.mxu0 0
    %1685 = vmatpush2.bf16.msra.mxu0 0
    %1686 = vmatprep.subr.bf16.mxu0 0
    %1687 = vmatpush2.bf16.msra.mxu0 0
    %1688 = vmatprep.subr.bf16.mxu0 0
    %1689 = vmatpush2.bf16.msra.mxu0 0
    %1690 = vmatprep.subr.bf16.mxu0 0
    %1691 = vmatpush2.bf16.msra.mxu0 0
    %1692 = vmatprep.mubr.bf16.mxu0 0
    %1693 = vmatmul.mubr.bf16.gmra.mxu0 %v1655
    %v1694 = vpop.f32.mrf.mxu0
    %v1695 = vadd.f32 0.0, %v1694
    %v1696 = vpop.f32.mrf.mxu0
    %v1697 = vpop.f32.mrf.mxu0
    %v1698 = vpop.f32.mrf.mxu0
    %1699 = vdwg.mxu0
    %v1701 = vsel %vm1088, %v1556, 0
    %v1704 = vsel %vm1564, %v1075, 0
    %1706 = vmatprep.subr.bf16.mxu0 0
    %1707 = vmatpush1.bf16.msra.mxu0 0
    %1708 = vmatprep.subr.bf16.mxu0 0
    %1709 = vmatpush1.bf16.msra.mxu0 0
    %1710 = vmatprep.subr.bf16.mxu0 0
    %1711 = vmatpush1.bf16.msra.mxu0 0
    %1712 = vmatprep.subr.bf16.mxu0 0
    %1713 = vmatpush1.bf16.msra.mxu0 0
    %1714 = vmatprep.subr.bf16.mxu0 0
    %1715 = vmatpush1.bf16.msra.mxu0 0
    %1716 = vmatprep.subr.bf16.mxu0 0
    %1717 = vmatpush1.bf16.msra.mxu0 0
    %1718 = vmatprep.subr.bf16.mxu0 0
    %1719 = vmatpush1.bf16.msra.mxu0 0
    %1720 = vmatprep.subr.bf16.mxu0 0
    %1721 = vmatpush1.bf16.msra.mxu0 %v1704
    %1722 = vmatprep.subr.bf16.mxu0 0
    %1723 = vmatpush2.bf16.msra.mxu0 0
    %1724 = vmatprep.subr.bf16.mxu0 0
    %1725 = vmatpush2.bf16.msra.mxu0 0
    %1726 = vmatprep.subr.bf16.mxu0 0
    %1727 = vmatpush2.bf16.msra.mxu0 0
    %1728 = vmatprep.subr.bf16.mxu0 0
    %1729 = vmatpush2.bf16.msra.mxu0 0
    %1730 = vmatprep.subr.bf16.mxu0 0
    %1731 = vmatpush2.bf16.msra.mxu0 0
    %1732 = vmatprep.subr.bf16.mxu0 0
    %1733 = vmatpush2.bf16.msra.mxu0 0
    %1734 = vmatprep.subr.bf16.mxu0 0
    %1735 = vmatpush2.bf16.msra.mxu0 0
    %1736 = vmatprep.subr.bf16.mxu0 0
    %1737 = vmatpush2.bf16.msra.mxu0 0
    %1738 = vmatprep.mubr.bf16.mxu0 0
    %1739 = vmatmul.mubr.bf16.gmra.mxu0 %v1701
    %v1740 = vpop.f32.mrf.mxu0
    %v1741 = vadd.f32 0.0, %v1740
    %v1742 = vpop.f32.mrf.mxu0
    %v1743 = vpop.f32.mrf.mxu0
    %v1744 = vpop.f32.mrf.mxu0
    %1745 = vdwg.mxu0
    %v1747 = vsel %vm1088, %v1557, 0
    %v1750 = vsel %vm1564, %v1078, 0
    %1752 = vmatprep.subr.bf16.mxu0 0
    %1753 = vmatpush1.bf16.msra.mxu0 0
    %1754 = vmatprep.subr.bf16.mxu0 0
    %1755 = vmatpush1.bf16.msra.mxu0 0
    %1756 = vmatprep.subr.bf16.mxu0 0
    %1757 = vmatpush1.bf16.msra.mxu0 0
    %1758 = vmatprep.subr.bf16.mxu0 0
    %1759 = vmatpush1.bf16.msra.mxu0 0
    %1760 = vmatprep.subr.bf16.mxu0 0
    %1761 = vmatpush1.bf16.msra.mxu0 0
    %1762 = vmatprep.subr.bf16.mxu0 0
    %1763 = vmatpush1.bf16.msra.mxu0 0
    %1764 = vmatprep.subr.bf16.mxu0 0
    %1765 = vmatpush1.bf16.msra.mxu0 0
    %1766 = vmatprep.subr.bf16.mxu0 0
    %1767 = vmatpush1.bf16.msra.mxu0 %v1750
    %1768 = vmatprep.subr.bf16.mxu0 0
    %1769 = vmatpush2.bf16.msra.mxu0 0
    %1770 = vmatprep.subr.bf16.mxu0 0
    %1771 = vmatpush2.bf16.msra.mxu0 0
    %1772 = vmatprep.subr.bf16.mxu0 0
    %1773 = vmatpush2.bf16.msra.mxu0 0
    %1774 = vmatprep.subr.bf16.mxu0 0
    %1775 = vmatpush2.bf16.msra.mxu0 0
    %1776 = vmatprep.subr.bf16.mxu0 0
    %1777 = vmatpush2.bf16.msra.mxu0 0
    %1778 = vmatprep.subr.bf16.mxu0 0
    %1779 = vmatpush2.bf16.msra.mxu0 0
    %1780 = vmatprep.subr.bf16.mxu0 0
    %1781 = vmatpush2.bf16.msra.mxu0 0
    %1782 = vmatprep.subr.bf16.mxu0 0
    %1783 = vmatpush2.bf16.msra.mxu0 0
    %1784 = vmatprep.mubr.bf16.mxu0 0
    %1785 = vmatmul.mubr.bf16.gmra.mxu0 %v1747
    %v1786 = vpop.f32.mrf.mxu0
    %v1787 = vadd.f32 0.0, %v1786
    %v1788 = vpop.f32.mrf.mxu0
    %v1789 = vpop.f32.mrf.mxu0
    %v1790 = vpop.f32.mrf.mxu0
    %1791 = vdwg.mxu0
    %v1793 = vsel %vm1088, %v1558, 0
    %v1796 = vsel %vm1564, %v1081, 0
    %1798 = vmatprep.subr.bf16.mxu0 0
    %1799 = vmatpush1.bf16.msra.mxu0 0
    %1800 = vmatprep.subr.bf16.mxu0 0
    %1801 = vmatpush1.bf16.msra.mxu0 0
    %1802 = vmatprep.subr.bf16.mxu0 0
    %1803 = vmatpush1.bf16.msra.mxu0 0
    %1804 = vmatprep.subr.bf16.mxu0 0
    %1805 = vmatpush1.bf16.msra.mxu0 0
    %1806 = vmatprep.subr.bf16.mxu0 0
    %1807 = vmatpush1.bf16.msra.mxu0 0
    %1808 = vmatprep.subr.bf16.mxu0 0
    %1809 = vmatpush1.bf16.msra.mxu0 0
    %1810 = vmatprep.subr.bf16.mxu0 0
    %1811 = vmatpush1.bf16.msra.mxu0 0
    %1812 = vmatprep.subr.bf16.mxu0 0
    %1813 = vmatpush1.bf16.msra.mxu0 %v1796
    %1814 = vmatprep.subr.bf16.mxu0 0
    %1815 = vmatpush2.bf16.msra.mxu0 0
    %1816 = vmatprep.subr.bf16.mxu0 0
    %1817 = vmatpush2.bf16.msra.mxu0 0
    %1818 = vmatprep.subr.bf16.mxu0 0
    %1819 = vmatpush2.bf16.msra.mxu0 0
    %1820 = vmatprep.subr.bf16.mxu0 0
    %1821 = vmatpush2.bf16.msra.mxu0 0
    %1822 = vmatprep.subr.bf16.mxu0 0
    %1823 = vmatpush2.bf16.msra.mxu0 0
    %1824 = vmatprep.subr.bf16.mxu0 0
    %1825 = vmatpush2.bf16.msra.mxu0 0
    %1826 = vmatprep.subr.bf16.mxu0 0
    %1827 = vmatpush2.bf16.msra.mxu0 0
    %1828 = vmatprep.subr.bf16.mxu0 0
    %1829 = vmatpush2.bf16.msra.mxu0 0
    %1830 = vmatprep.mubr.bf16.mxu0 0
    %1831 = vmatmul.mubr.bf16.gmra.mxu0 %v1793
    %v1832 = vpop.f32.mrf.mxu0
    %v1833 = vadd.f32 0.0, %v1832
    %v1834 = vpop.f32.mrf.mxu0
    %v1835 = vpop.f32.mrf.mxu0
    %v1836 = vpop.f32.mrf.mxu0
    %1837 = vdwg.mxu0
    %v1839 = vsel %vm1088, %v1559, 0
    %v1842 = vsel %vm1564, %v1084, 0
    %1844 = vmatprep.subr.bf16.mxu0 0
    %1845 = vmatpush1.bf16.msra.mxu0 0
    %1846 = vmatprep.subr.bf16.mxu0 0
    %1847 = vmatpush1.bf16.msra.mxu0 0
    %1848 = vmatprep.subr.bf16.mxu0 0
    %1849 = vmatpush1.bf16.msra.mxu0 0
    %1850 = vmatprep.subr.bf16.mxu0 0
    %1851 = vmatpush1.bf16.msra.mxu0 0
    %1852 = vmatprep.subr.bf16.mxu0 0
    %1853 = vmatpush1.bf16.msra.mxu0 0
    %1854 = vmatprep.subr.bf16.mxu0 0
    %1855 = vmatpush1.bf16.msra.mxu0 0
    %1856 = vmatprep.subr.bf16.mxu0 0
    %1857 = vmatpush1.bf16.msra.mxu0 0
    %1858 = vmatprep.subr.bf16.mxu0 0
    %1859 = vmatpush1.bf16.msra.mxu0 %v1842
    %1860 = vmatprep.subr.bf16.mxu0 0
    %1861 = vmatpush2.bf16.msra.mxu0 0
    %1862 = vmatprep.subr.bf16.mxu0 0
    %1863 = vmatpush2.bf16.msra.mxu0 0
    %1864 = vmatprep.subr.bf16.mxu0 0
    %1865 = vmatpush2.bf16.msra.mxu0 0
    %1866 = vmatprep.subr.bf16.mxu0 0
    %1867 = vmatpush2.bf16.msra.mxu0 0
    %1868 = vmatprep.subr.bf16.mxu0 0
    %1869 = vmatpush2.bf16.msra.mxu0 0
    %1870 = vmatprep.subr.bf16.mxu0 0
    %1871 = vmatpush2.bf16.msra.mxu0 0
    %1872 = vmatprep.subr.bf16.mxu0 0
    %1873 = vmatpush2.bf16.msra.mxu0 0
    %1874 = vmatprep.subr.bf16.mxu0 0
    %1875 = vmatpush2.bf16.msra.mxu0 0
    %1876 = vmatprep.mubr.bf16.mxu0 0
    %1877 = vmatmul.mubr.bf16.gmra.mxu0 %v1839
    %v1878 = vpop.f32.mrf.mxu0
    %v1879 = vadd.f32 0.0, %v1878
    %v1880 = vpop.f32.mrf.mxu0
    %v1881 = vpop.f32.mrf.mxu0
    %v1882 = vpop.f32.mrf.mxu0
    %1883 = vdwg.mxu0
    %v1885 = vsel %vm1088, %v1560, 0
    %v1888 = vsel %vm1564, %v1087, 0
    %1890 = vmatprep.subr.bf16.mxu0 0
    %1891 = vmatpush1.bf16.msra.mxu0 0
    %1892 = vmatprep.subr.bf16.mxu0 0
    %1893 = vmatpush1.bf16.msra.mxu0 0
    %1894 = vmatprep.subr.bf16.mxu0 0
    %1895 = vmatpush1.bf16.msra.mxu0 0
    %1896 = vmatprep.subr.bf16.mxu0 0
    %1897 = vmatpush1.bf16.msra.mxu0 0
    %1898 = vmatprep.subr.bf16.mxu0 0
    %1899 = vmatpush1.bf16.msra.mxu0 0
    %1900 = vmatprep.subr.bf16.mxu0 0
    %1901 = vmatpush1.bf16.msra.mxu0 0
    %1902 = vmatprep.subr.bf16.mxu0 0
    %1903 = vmatpush1.bf16.msra.mxu0 0
    %1904 = vmatprep.subr.bf16.mxu0 0
    %1905 = vmatpush1.bf16.msra.mxu0 %v1888
    %1906 = vmatprep.subr.bf16.mxu0 0
    %1907 = vmatpush2.bf16.msra.mxu0 0
    %1908 = vmatprep.subr.bf16.mxu0 0
    %1909 = vmatpush2.bf16.msra.mxu0 0
    %1910 = vmatprep.subr.bf16.mxu0 0
    %1911 = vmatpush2.bf16.msra.mxu0 0
    %1912 = vmatprep.subr.bf16.mxu0 0
    %1913 = vmatpush2.bf16.msra.mxu0 0
    %1914 = vmatprep.subr.bf16.mxu0 0
    %1915 = vmatpush2.bf16.msra.mxu0 0
    %1916 = vmatprep.subr.bf16.mxu0 0
    %1917 = vmatpush2.bf16.msra.mxu0 0
    %1918 = vmatprep.subr.bf16.mxu0 0
    %1919 = vmatpush2.bf16.msra.mxu0 0
    %1920 = vmatprep.subr.bf16.mxu0 0
    %1921 = vmatpush2.bf16.msra.mxu0 0
    %1922 = vmatprep.mubr.bf16.mxu0 0
    %1923 = vmatmul.mubr.bf16.gmra.mxu0 %v1885
    %v1924 = vpop.f32.mrf.mxu0
    %v1925 = vadd.f32 0.0, %v1924
    %v1926 = vpop.f32.mrf.mxu0
    %v1927 = vpop.f32.mrf.mxu0
    %v1928 = vpop.f32.mrf.mxu0
    %1929 = vdwg.mxu0
    %v1930 = vpack.c.bf16 %v1603, %v1603
    %v1932 = vunpack.c.l.s4 1983009808
    %v1933 = vunpack.c.0.s8 %v1932
    %v1934 = vlaneseq
    %v1935 = vshrl.u32 %v1934, 7
    %v1936 = vsub.s32 %v1933, %v1935
    %v1937 = vrot.slane %v1930, %v1936
    %v1938 = vpack.c.bf16 %v1695, %v1695
    %v1940 = vunpack.c.l.s4 1983009808
    %v1941 = vunpack.c.0.s8 %v1940
    %v1942 = vlaneseq
    %v1943 = vshrl.u32 %v1942, 7
    %v1944 = vsub.s32 %v1941, %v1943
    %v1945 = vrot.slane %v1938, %v1944
    %v1946 = vcombine.low %v1937, %v1945
    %v1947 = vcombine.high %v1937, %v1945
    %v1949 = vunpack.c.l.s4 1934713408
    %v1950 = vunpack.c.0.s8 %v1949
    %v1951 = vlaneseq
    %v1952 = vshrl.u32 %v1951, 7
    %v1953 = vsub.s32 %v1950, %v1952
    %v1954 = vrot.slane %v1946, %v1953
    %v1956 = vunpack.c.l.s4 1934713408
    %v1957 = vunpack.c.0.s8 %v1956
    %v1958 = vlaneseq
    %v1959 = vshrl.u32 %v1958, 7
    %v1960 = vsub.s32 %v1957, %v1959
    %v1961 = vrot.slane %v1947, %v1960
    %v1962 = vcombine.high %v1954, 0
    %v1963 = vcombine.high %v1961, 0
    %v1964 = vpack.c.bf16 %v1649, %v1649
    %v1966 = vunpack.c.l.s4 1983009808
    %v1967 = vunpack.c.0.s8 %v1966
    %v1968 = vlaneseq
    %v1969 = vshrl.u32 %v1968, 7
    %v1970 = vsub.s32 %v1967, %v1969
    %v1971 = vrot.slane %v1964, %v1970
    %v1972 = vpack.c.bf16 %v1741, %v1741
    %v1974 = vunpack.c.l.s4 1983009808
    %v1975 = vunpack.c.0.s8 %v1974
    %v1976 = vlaneseq
    %v1977 = vshrl.u32 %v1976, 7
    %v1978 = vsub.s32 %v1975, %v1977
    %v1979 = vrot.slane %v1972, %v1978
    %v1980 = vcombine.low %v1971, %v1979
    %v1981 = vcombine.high %v1971, %v1979
    %v1983 = vunpack.c.l.s4 1934713408
    %v1984 = vunpack.c.0.s8 %v1983
    %v1985 = vlaneseq
    %v1986 = vshrl.u32 %v1985, 7
    %v1987 = vsub.s32 %v1984, %v1986
    %v1988 = vrot.slane %v1980, %v1987
    %v1990 = vunpack.c.l.s4 1934713408
    %v1991 = vunpack.c.0.s8 %v1990
    %v1992 = vlaneseq
    %v1993 = vshrl.u32 %v1992, 7
    %v1994 = vsub.s32 %v1991, %v1993
    %v1995 = vrot.slane %v1981, %v1994
    %v1996 = vcombine.high %v1988, 0
    %v1997 = vcombine.high %v1995, 0
    %v1998 = vpack.c.bf16 %v1787, %v1787
    %v2000 = vunpack.c.l.s4 1983009808
    %v2001 = vunpack.c.0.s8 %v2000
    %v2002 = vlaneseq
    %v2003 = vshrl.u32 %v2002, 7
    %v2004 = vsub.s32 %v2001, %v2003
    %v2005 = vrot.slane %v1998, %v2004
    %v2006 = vpack.c.bf16 %v1879, %v1879
    %v2008 = vunpack.c.l.s4 1983009808
    %v2009 = vunpack.c.0.s8 %v2008
    %v2010 = vlaneseq
    %v2011 = vshrl.u32 %v2010, 7
    %v2012 = vsub.s32 %v2009, %v2011
    %v2013 = vrot.slane %v2006, %v2012
    %v2014 = vcombine.low %v2005, %v2013
    %v2015 = vcombine.high %v2005, %v2013
    %v2017 = vunpack.c.l.s4 1934713408
    %v2018 = vunpack.c.0.s8 %v2017
    %v2019 = vlaneseq
    %v2020 = vshrl.u32 %v2019, 7
    %v2021 = vsub.s32 %v2018, %v2020
    %v2022 = vrot.slane %v2014, %v2021
    %v2024 = vunpack.c.l.s4 1934713408
    %v2025 = vunpack.c.0.s8 %v2024
    %v2026 = vlaneseq
    %v2027 = vshrl.u32 %v2026, 7
    %v2028 = vsub.s32 %v2025, %v2027
    %v2029 = vrot.slane %v2015, %v2028
    %v2030 = vcombine.high %v2022, 0
    %v2031 = vcombine.high %v2029, 0
    %v2032 = vpack.c.bf16 %v1833, %v1833
    %v2034 = vunpack.c.l.s4 1983009808
    %v2035 = vunpack.c.0.s8 %v2034
    %v2036 = vlaneseq
    %v2037 = vshrl.u32 %v2036, 7
    %v2038 = vsub.s32 %v2035, %v2037
    %v2039 = vrot.slane %v2032, %v2038
    %v2040 = vpack.c.bf16 %v1925, %v1925
    %v2042 = vunpack.c.l.s4 1983009808
    %v2043 = vunpack.c.0.s8 %v2042
    %v2044 = vlaneseq
    %v2045 = vshrl.u32 %v2044, 7
    %v2046 = vsub.s32 %v2043, %v2045
    %v2047 = vrot.slane %v2040, %v2046
    %v2048 = vcombine.low %v2039, %v2047
    %v2049 = vcombine.high %v2039, %v2047
    %v2051 = vunpack.c.l.s4 1934713408
    %v2052 = vunpack.c.0.s8 %v2051
    %v2053 = vlaneseq
    %v2054 = vshrl.u32 %v2053, 7
    %v2055 = vsub.s32 %v2052, %v2054
    %v2056 = vrot.slane %v2048, %v2055
    %v2058 = vunpack.c.l.s4 1934713408
    %v2059 = vunpack.c.0.s8 %v2058
    %v2060 = vlaneseq
    %v2061 = vshrl.u32 %v2060, 7
    %v2062 = vsub.s32 %v2059, %v2061
    %v2063 = vrot.slane %v2049, %v2062
    %v2064 = vcombine.high %v2056, 0
    %v2065 = vcombine.high %v2063, 0
    %v2068 = vpack.i.b16 %v1988, %v1954
    %v2070 = vshrl.u32 %v1954, 16
    %v2071 = vshrl.u32 %v1988, 16
    %v2072 = vpack.i.b16 %v2071, %v2070
    %v2076 = vpack.i.b16 %v1996, %v1962
    %v2078 = vshrl.u32 %v1962, 16
    %v2079 = vshrl.u32 %v1996, 16
    %v2080 = vpack.i.b16 %v2079, %v2078
    %v2084 = vpack.i.b16 %v1995, %v1961
    %v2086 = vshrl.u32 %v1961, 16
    %v2087 = vshrl.u32 %v1995, 16
    %v2088 = vpack.i.b16 %v2087, %v2086
    %v2092 = vpack.i.b16 %v1997, %v1963
    %v2094 = vshrl.u32 %v1963, 16
    %v2095 = vshrl.u32 %v1997, 16
    %v2096 = vpack.i.b16 %v2095, %v2094
    %v2100 = vpack.i.b16 %v2056, %v2022
    %v2102 = vshrl.u32 %v2022, 16
    %v2103 = vshrl.u32 %v2056, 16
    %v2104 = vpack.i.b16 %v2103, %v2102
    %v2108 = vpack.i.b16 %v2064, %v2030
    %v2110 = vshrl.u32 %v2030, 16
    %v2111 = vshrl.u32 %v2064, 16
    %v2112 = vpack.i.b16 %v2111, %v2110
    %v2116 = vpack.i.b16 %v2063, %v2029
    %v2118 = vshrl.u32 %v2029, 16
    %v2119 = vshrl.u32 %v2063, 16
    %v2120 = vpack.i.b16 %v2119, %v2118
    %v2124 = vpack.i.b16 %v2065, %v2031
    %v2126 = vshrl.u32 %v2031, 16
    %v2127 = vshrl.u32 %v2065, 16
    %v2128 = vpack.i.b16 %v2127, %v2126
    %v2130 = vcombine.low %v2068, %v2076
    %v2132 = vunpack.c.l.s4 1983009808
    %v2133 = vunpack.c.0.s8 %v2132
    %v2134 = vlaneseq
    %v2135 = vshrl.u32 %v2134, 7
    %v2136 = vsub.s32 %v2133, %v2135
    %v2137 = vrot.slane %v2130, %v2136
    %v2138 = vcombine.low %v2072, %v2080
    %v2140 = vunpack.c.l.s4 1983009808
    %v2141 = vunpack.c.0.s8 %v2140
    %v2142 = vlaneseq
    %v2143 = vshrl.u32 %v2142, 7
    %v2144 = vsub.s32 %v2141, %v2143
    %v2145 = vrot.slane %v2138, %v2144
    %v2146 = vcombine.low %v2084, %v2092
    %v2148 = vunpack.c.l.s4 1983009808
    %v2149 = vunpack.c.0.s8 %v2148
    %v2150 = vlaneseq
    %v2151 = vshrl.u32 %v2150, 7
    %v2152 = vsub.s32 %v2149, %v2151
    %v2153 = vrot.slane %v2146, %v2152
    %v2154 = vcombine.low %v2088, %v2096
    %v2156 = vunpack.c.l.s4 1983009808
    %v2157 = vunpack.c.0.s8 %v2156
    %v2158 = vlaneseq
    %v2159 = vshrl.u32 %v2158, 7
    %v2160 = vsub.s32 %v2157, %v2159
    %v2161 = vrot.slane %v2154, %v2160
    %v2162 = vcombine.low %v2137, %v2145
    %v2164 = vunpack.c.l.s4 1934713408
    %v2165 = vunpack.c.0.s8 %v2164
    %v2166 = vlaneseq
    %v2167 = vshrl.u32 %v2166, 7
    %v2168 = vsub.s32 %v2165, %v2167
    %v2169 = vrot.slane %v2162, %v2168
    %v2170 = vcombine.low %v2153, %v2161
    %v2172 = vunpack.c.l.s4 1934713408
    %v2173 = vunpack.c.0.s8 %v2172
    %v2174 = vlaneseq
    %v2175 = vshrl.u32 %v2174, 7
    %v2176 = vsub.s32 %v2173, %v2175
    %v2177 = vrot.slane %v2170, %v2176
    %v2178 = vcombine.low %v2169, %v2177
    %v2179 = vcombine.high %v2169, %v2177
    %v2180 = vcombine.low %v2100, %v2108
    %v2182 = vunpack.c.l.s4 1983009808
    %v2183 = vunpack.c.0.s8 %v2182
    %v2184 = vlaneseq
    %v2185 = vshrl.u32 %v2184, 7
    %v2186 = vsub.s32 %v2183, %v2185
    %v2187 = vrot.slane %v2180, %v2186
    %v2188 = vcombine.low %v2104, %v2112
    %v2190 = vunpack.c.l.s4 1983009808
    %v2191 = vunpack.c.0.s8 %v2190
    %v2192 = vlaneseq
    %v2193 = vshrl.u32 %v2192, 7
    %v2194 = vsub.s32 %v2191, %v2193
    %v2195 = vrot.slane %v2188, %v2194
    %v2196 = vcombine.low %v2116, %v2124
    %v2198 = vunpack.c.l.s4 1983009808
    %v2199 = vunpack.c.0.s8 %v2198
    %v2200 = vlaneseq
    %v2201 = vshrl.u32 %v2200, 7
    %v2202 = vsub.s32 %v2199, %v2201
    %v2203 = vrot.slane %v2196, %v2202
    %v2204 = vcombine.low %v2120, %v2128
    %v2206 = vunpack.c.l.s4 1983009808
    %v2207 = vunpack.c.0.s8 %v2206
    %v2208 = vlaneseq
    %v2209 = vshrl.u32 %v2208, 7
    %v2210 = vsub.s32 %v2207, %v2209
    %v2211 = vrot.slane %v2204, %v2210
    %v2212 = vcombine.low %v2187, %v2195
    %v2214 = vunpack.c.l.s4 1934713408
    %v2215 = vunpack.c.0.s8 %v2214
    %v2216 = vlaneseq
    %v2217 = vshrl.u32 %v2216, 7
    %v2218 = vsub.s32 %v2215, %v2217
    %v2219 = vrot.slane %v2212, %v2218
    %v2220 = vcombine.low %v2203, %v2211
    %v2222 = vunpack.c.l.s4 1934713408
    %v2223 = vunpack.c.0.s8 %v2222
    %v2224 = vlaneseq
    %v2225 = vshrl.u32 %v2224, 7
    %v2226 = vsub.s32 %v2223, %v2225
    %v2227 = vrot.slane %v2220, %v2226
    %v2228 = vcombine.low %v2219, %v2227
    %v2229 = vcombine.high %v2219, %v2227
    %v2232 = vpack.i.b16 %v2228, %v2178
    %v2233 = vshrl.u32 %v2178, 16
    %v2234 = vshrl.u32 %v2228, 16
    %v2235 = vpack.i.b16 %v2234, %v2233
    %v2238 = vpack.i.b16 %v2229, %v2179
    %v2239 = vshrl.u32 %v2179, 16
    %v2240 = vshrl.u32 %v2229, 16
    %v2241 = vpack.i.b16 %v2240, %v2239
    %2242 = vrot.lane.b32.xlu0 %v2235, 8
    %v2243 = vpop.permute.xlu0 %2242
    %2244 = vrot.lane.b32.xlu0 %v2238, 16
    %v2245 = vpop.permute.xlu0 %2244
    %2246 = vrot.lane.b32.xlu0 %v2241, 24
    %v2247 = vpop.permute.xlu0 %2246
    %v2250 = vsel %vm1088, %v2232, %v2243
    %vm2251 = vcmask 130048
    %v2253 = vsel %vm2251, %v2250, %v2245
    %vm2254 = vcmask 195584
    %v2256 = vsel %vm2254, %v2253, %v2247
    %v2257 = vld [vmem:[%s3] sm:$0xf]
    %v2258 = vld [vmem:[%s3 + $0x4] sm:$0xf]
    %v2259 = vld [vmem:[%s3 + $0x8] sm:$0xf]
    %v2260 = vld [vmem:[%s3 + $0xc] sm:$0xf]
    %v2261 = vld [vmem:[#allocation5] sm:$0x1]
    %v2263 = vlaneseq
    %v2264 = vshrl.u32 %v2263, 7
    %v2265 = vsub.s32 0, %v2264
    %v2266 = vrot.slane %v2261, %v2265
    %v2272 = vunpack.c.l.b16 %v2257
    %v2273 = vunpack.c.l.b16 %v2258
    %v2274 = vunpack.c.l.b16 %v2259
    %v2275 = vunpack.c.l.b16 %v2260
    %v2276 = vpack.c.b16 %v2273, %v2272
    %v2277 = vpack.c.b16 %v2275, %v2274
    %v2280 = vsel %vm197, %v2256, 0
    %2282 = vmatprep.subr.bf16.mxu0 0
    %2283 = vmatpush1.bf16.msra.mxu0 0
    %2284 = vmatprep.subr.bf16.mxu0 0
    %2285 = vmatpush1.bf16.msra.mxu0 0
    %2286 = vmatprep.subr.bf16.mxu0 0
    %2287 = vmatpush1.bf16.msra.mxu0 0
    %2288 = vmatprep.subr.bf16.mxu0 0
    %2289 = vmatpush1.bf16.msra.mxu0 0
    %2290 = vmatprep.subr.bf16.mxu0 0
    %2291 = vmatpush1.bf16.msra.mxu0 0
    %2292 = vmatprep.subr.bf16.mxu0 0
    %2293 = vmatpush1.bf16.msra.mxu0 0
    %2294 = vmatprep.subr.bf16.mxu0 0
    %2295 = vmatpush1.bf16.msra.mxu0 %v2277
    %2296 = vmatprep.subr.bf16.mxu0 0
    %2297 = vmatpush1.bf16.msra.mxu0 %v2276
    %2298 = vmatprep.subr.bf16.mxu0 0
    %2299 = vmatpush2.bf16.msra.mxu0 0
    %2300 = vmatprep.subr.bf16.mxu0 0
    %2301 = vmatpush2.bf16.msra.mxu0 0
    %2302 = vmatprep.subr.bf16.mxu0 0
    %2303 = vmatpush2.bf16.msra.mxu0 0
    %2304 = vmatprep.subr.bf16.mxu0 0
    %2305 = vmatpush2.bf16.msra.mxu0 0
    %2306 = vmatprep.subr.bf16.mxu0 0
    %2307 = vmatpush2.bf16.msra.mxu0 0
    %2308 = vmatprep.subr.bf16.mxu0 0
    %2309 = vmatpush2.bf16.msra.mxu0 0
    %2310 = vmatprep.subr.bf16.mxu0 0
    %2311 = vmatpush2.bf16.msra.mxu0 0
    %2312 = vmatprep.subr.bf16.mxu0 0
    %2313 = vmatpush2.bf16.msra.mxu0 0
    %2314 = vmatprep.mubr.bf16.mxu0 0
    %2315 = vmatmul.mubr.bf16.gmra.mxu0 %v2280
    %v2316 = vpop.f32.mrf.mxu0
    %v2317 = vadd.f32 %v2266, %v2316
    %v2318 = vpop.f32.mrf.mxu0
    %v2319 = vpop.f32.mrf.mxu0
    %v2320 = vadd.f32 %v2266, %v2319
    %v2321 = vpop.f32.mrf.mxu0
    %2322 = vdwg.mxu0
    %v2325 = vcombine.high %v2317, %v2317
    %v2327 = vunpack.c.l.s4 1983009808
    %v2328 = vunpack.c.0.s8 %v2327
    %v2329 = vlaneseq
    %v2330 = vshrl.u32 %v2329, 7
    %v2331 = vsub.s32 %v2328, %v2330
    %v2332 = vrot.slane %v2317, %v2331
    %v2334 = vunpack.c.l.s4 1983009808
    %v2335 = vunpack.c.0.s8 %v2334
    %v2336 = vlaneseq
    %v2337 = vshrl.u32 %v2336, 7
    %v2338 = vsub.s32 %v2335, %v2337
    %v2339 = vrot.slane %v2325, %v2338
    %v2340 = vcombine.high %v2332, %v2332
    %v2341 = vcombine.high %v2339, %v2339
    %v2342 = vcombine.high %v2320, %v2320
    %v2344 = vunpack.c.l.s4 1983009808
    %v2345 = vunpack.c.0.s8 %v2344
    %v2346 = vlaneseq
    %v2347 = vshrl.u32 %v2346, 7
    %v2348 = vsub.s32 %v2345, %v2347
    %v2349 = vrot.slane %v2320, %v2348
    %v2351 = vunpack.c.l.s4 1983009808
    %v2352 = vunpack.c.0.s8 %v2351
    %v2353 = vlaneseq
    %v2354 = vshrl.u32 %v2353, 7
    %v2355 = vsub.s32 %v2352, %v2354
    %v2356 = vrot.slane %v2342, %v2355
    %v2357 = vcombine.high %v2349, %v2349
    %v2358 = vcombine.high %v2356, %v2356
    %v2367 = vadd.f32 %v121, %v2332
    %v2368 = vadd.f32 %v122, %v2340
    %v2369 = vadd.f32 %v123, %v2339
    %v2370 = vadd.f32 %v124, %v2341
    %v2371 = vadd.f32 %v125, %v2349
    %v2372 = vadd.f32 %v126, %v2357
    %v2373 = vadd.f32 %v127, %v2356
    %v2374 = vadd.f32 %v128, %v2358
    %v2383 = vcombine.low %v2367, %v2368
    %v2384 = vcombine.low %v2369, %v2370
    %v2386 = vunpack.c.l.s4 1983009808
    %v2387 = vunpack.c.0.s8 %v2386
    %v2388 = vlaneseq
    %v2389 = vshrl.u32 %v2388, 7
    %v2390 = vsub.s32 %v2387, %v2389
    %v2391 = vrot.slane %v2383, %v2390
    %v2393 = vunpack.c.l.s4 1983009808
    %v2394 = vunpack.c.0.s8 %v2393
    %v2395 = vlaneseq
    %v2396 = vshrl.u32 %v2395, 7
    %v2397 = vsub.s32 %v2394, %v2396
    %v2398 = vrot.slane %v2384, %v2397
    %v2399 = vcombine.low %v2391, %v2398
    %v2400 = vcombine.low %v2371, %v2372
    %v2401 = vcombine.low %v2373, %v2374
    %v2403 = vunpack.c.l.s4 1983009808
    %v2404 = vunpack.c.0.s8 %v2403
    %v2405 = vlaneseq
    %v2406 = vshrl.u32 %v2405, 7
    %v2407 = vsub.s32 %v2404, %v2406
    %v2408 = vrot.slane %v2400, %v2407
    %v2410 = vunpack.c.l.s4 1983009808
    %v2411 = vunpack.c.0.s8 %v2410
    %v2412 = vlaneseq
    %v2413 = vshrl.u32 %v2412, 7
    %v2414 = vsub.s32 %v2411, %v2413
    %v2415 = vrot.slane %v2401, %v2414
    %v2416 = vcombine.low %v2408, %v2415
    %v2419 = vsel %vm197, %v2399, 0.0
    %2420 = vadd.xlane.f32.xlu0 %v2419
    %v2421 = vpop.xlane.xlu0 %2420
    %v2422 = vsel %vm197, %v2416, 0.0
    %2423 = vadd.xlane.f32.xlu0 %v2422
    %v2424 = vpop.xlane.xlu0 %2423
    %v2425 = vrcp.pop 32.0
    %v2426 = vmul.f32 %v2421, %v2425
    %v2427 = vmul.f32 %v2424, %v2425
    %v2431 = vunpack.c.l.s4 269488144
    %v2432 = vunpack.c.0.s8 %v2431
    %v2433 = vlaneseq
    %v2434 = vshrl.u32 %v2433, 7
    %v2435 = vsub.s32 %v2432, %v2434
    %v2436 = vrot.slane %v2426, %v2435
    %v2438 = vunpack.c.l.s4 842150450
    %v2439 = vunpack.c.0.s8 %v2438
    %v2440 = vlaneseq
    %v2441 = vshrl.u32 %v2440, 7
    %v2442 = vsub.s32 %v2439, %v2441
    %v2443 = vrot.slane %v2426, %v2442
    %v2445 = vunpack.c.l.s4 1414812756
    %v2446 = vunpack.c.0.s8 %v2445
    %v2447 = vlaneseq
    %v2448 = vshrl.u32 %v2447, 7
    %v2449 = vsub.s32 %v2446, %v2448
    %v2450 = vrot.slane %v2426, %v2449
    %v2452 = vunpack.c.l.s4 1987475062
    %v2453 = vunpack.c.0.s8 %v2452
    %v2454 = vlaneseq
    %v2455 = vshrl.u32 %v2454, 7
    %v2456 = vsub.s32 %v2453, %v2455
    %v2457 = vrot.slane %v2426, %v2456
    %v2459 = vunpack.c.l.s4 269488144
    %v2460 = vunpack.c.0.s8 %v2459
    %v2461 = vlaneseq
    %v2462 = vshrl.u32 %v2461, 7
    %v2463 = vsub.s32 %v2460, %v2462
    %v2464 = vrot.slane %v2427, %v2463
    %v2466 = vunpack.c.l.s4 842150450
    %v2467 = vunpack.c.0.s8 %v2466
    %v2468 = vlaneseq
    %v2469 = vshrl.u32 %v2468, 7
    %v2470 = vsub.s32 %v2467, %v2469
    %v2471 = vrot.slane %v2427, %v2470
    %v2473 = vunpack.c.l.s4 1414812756
    %v2474 = vunpack.c.0.s8 %v2473
    %v2475 = vlaneseq
    %v2476 = vshrl.u32 %v2475, 7
    %v2477 = vsub.s32 %v2474, %v2476
    %v2478 = vrot.slane %v2427, %v2477
    %v2480 = vunpack.c.l.s4 1987475062
    %v2481 = vunpack.c.0.s8 %v2480
    %v2482 = vlaneseq
    %v2483 = vshrl.u32 %v2482, 7
    %v2484 = vsub.s32 %v2481, %v2483
    %v2485 = vrot.slane %v2427, %v2484
    %v2494 = vsub.f32 %v2367, %v2436
    %v2495 = vsub.f32 %v2368, %v2443
    %v2496 = vsub.f32 %v2369, %v2450
    %v2497 = vsub.f32 %v2370, %v2457
    %v2498 = vsub.f32 %v2371, %v2464
    %v2499 = vsub.f32 %v2372, %v2471
    %v2500 = vsub.f32 %v2373, %v2478
    %v2501 = vsub.f32 %v2374, %v2485
    %v2502 = vmul.f32 %v2494, %v2494
    %v2503 = vmul.f32 %v2495, %v2495
    %v2504 = vmul.f32 %v2496, %v2496
    %v2505 = vmul.f32 %v2497, %v2497
    %v2506 = vmul.f32 %v2498, %v2498
    %v2507 = vmul.f32 %v2499, %v2499
    %v2508 = vmul.f32 %v2500, %v2500
    %v2509 = vmul.f32 %v2501, %v2501
    %v2518 = vcombine.low %v2502, %v2503
    %v2519 = vcombine.low %v2504, %v2505
    %v2521 = vunpack.c.l.s4 1983009808
    %v2522 = vunpack.c.0.s8 %v2521
    %v2523 = vlaneseq
    %v2524 = vshrl.u32 %v2523, 7
    %v2525 = vsub.s32 %v2522, %v2524
    %v2526 = vrot.slane %v2518, %v2525
    %v2528 = vunpack.c.l.s4 1983009808
    %v2529 = vunpack.c.0.s8 %v2528
    %v2530 = vlaneseq
    %v2531 = vshrl.u32 %v2530, 7
    %v2532 = vsub.s32 %v2529, %v2531
    %v2533 = vrot.slane %v2519, %v2532
    %v2534 = vcombine.low %v2526, %v2533
    %v2535 = vcombine.low %v2506, %v2507
    %v2536 = vcombine.low %v2508, %v2509
    %v2538 = vunpack.c.l.s4 1983009808
    %v2539 = vunpack.c.0.s8 %v2538
    %v2540 = vlaneseq
    %v2541 = vshrl.u32 %v2540, 7
    %v2542 = vsub.s32 %v2539, %v2541
    %v2543 = vrot.slane %v2535, %v2542
    %v2545 = vunpack.c.l.s4 1983009808
    %v2546 = vunpack.c.0.s8 %v2545
    %v2547 = vlaneseq
    %v2548 = vshrl.u32 %v2547, 7
    %v2549 = vsub.s32 %v2546, %v2548
    %v2550 = vrot.slane %v2536, %v2549
    %v2551 = vcombine.low %v2543, %v2550
    %v2554 = vsel %vm197, %v2534, 0.0
    %2555 = vadd.xlane.f32.xlu0 %v2554
    %v2556 = vpop.xlane.xlu0 %2555
    %v2557 = vsel %vm197, %v2551, 0.0
    %2558 = vadd.xlane.f32.xlu0 %v2557
    %v2559 = vpop.xlane.xlu0 %2558
    %v2560 = vmul.f32 %v2556, %v2425
    %v2561 = vmul.f32 %v2559, %v2425
    %v2562 = vadd.f32 %v2560, 1e-05
    %v2563 = vadd.f32 %v2561, 1e-05
    %v2564 = vrsqrt.pop %v2562
    %v2565 = vrsqrt.pop %v2563
    %v2569 = vunpack.c.l.s4 269488144
    %v2570 = vunpack.c.0.s8 %v2569
    %v2571 = vlaneseq
    %v2572 = vshrl.u32 %v2571, 7
    %v2573 = vsub.s32 %v2570, %v2572
    %v2574 = vrot.slane %v2564, %v2573
    %v2576 = vunpack.c.l.s4 842150450
    %v2577 = vunpack.c.0.s8 %v2576
    %v2578 = vlaneseq
    %v2579 = vshrl.u32 %v2578, 7
    %v2580 = vsub.s32 %v2577, %v2579
    %v2581 = vrot.slane %v2564, %v2580
    %v2583 = vunpack.c.l.s4 1414812756
    %v2584 = vunpack.c.0.s8 %v2583
    %v2585 = vlaneseq
    %v2586 = vshrl.u32 %v2585, 7
    %v2587 = vsub.s32 %v2584, %v2586
    %v2588 = vrot.slane %v2564, %v2587
    %v2590 = vunpack.c.l.s4 1987475062
    %v2591 = vunpack.c.0.s8 %v2590
    %v2592 = vlaneseq
    %v2593 = vshrl.u32 %v2592, 7
    %v2594 = vsub.s32 %v2591, %v2593
    %v2595 = vrot.slane %v2564, %v2594
    %v2597 = vunpack.c.l.s4 269488144
    %v2598 = vunpack.c.0.s8 %v2597
    %v2599 = vlaneseq
    %v2600 = vshrl.u32 %v2599, 7
    %v2601 = vsub.s32 %v2598, %v2600
    %v2602 = vrot.slane %v2565, %v2601
    %v2604 = vunpack.c.l.s4 842150450
    %v2605 = vunpack.c.0.s8 %v2604
    %v2606 = vlaneseq
    %v2607 = vshrl.u32 %v2606, 7
    %v2608 = vsub.s32 %v2605, %v2607
    %v2609 = vrot.slane %v2565, %v2608
    %v2611 = vunpack.c.l.s4 1414812756
    %v2612 = vunpack.c.0.s8 %v2611
    %v2613 = vlaneseq
    %v2614 = vshrl.u32 %v2613, 7
    %v2615 = vsub.s32 %v2612, %v2614
    %v2616 = vrot.slane %v2565, %v2615
    %v2618 = vunpack.c.l.s4 1987475062
    %v2619 = vunpack.c.0.s8 %v2618
    %v2620 = vlaneseq
    %v2621 = vshrl.u32 %v2620, 7
    %v2622 = vsub.s32 %v2619, %v2621
    %v2623 = vrot.slane %v2565, %v2622
    %v2632 = vmul.f32 %v2494, %v2574
    %v2633 = vmul.f32 %v2495, %v2581
    %v2634 = vmul.f32 %v2496, %v2588
    %v2635 = vmul.f32 %v2497, %v2595
    %v2636 = vmul.f32 %v2498, %v2602
    %v2637 = vmul.f32 %v2499, %v2609
    %v2638 = vmul.f32 %v2500, %v2616
    %v2639 = vmul.f32 %v2501, %v2623
    %v2640 = vld [vmem:[#allocation7] sm:$0x1]
    %v2642 = vlaneseq
    %v2643 = vshrl.u32 %v2642, 7
    %v2644 = vsub.s32 0, %v2643
    %v2645 = vrot.slane %v2640, %v2644
    %v2646 = vcombine.high %v2645, %v2645
    %v2648 = vunpack.c.l.s4 1983009808
    %v2649 = vunpack.c.0.s8 %v2648
    %v2650 = vlaneseq
    %v2651 = vshrl.u32 %v2650, 7
    %v2652 = vsub.s32 %v2649, %v2651
    %v2653 = vrot.slane %v2645, %v2652
    %v2655 = vunpack.c.l.s4 1983009808
    %v2656 = vunpack.c.0.s8 %v2655
    %v2657 = vlaneseq
    %v2658 = vshrl.u32 %v2657, 7
    %v2659 = vsub.s32 %v2656, %v2658
    %v2660 = vrot.slane %v2646, %v2659
    %v2661 = vcombine.high %v2653, %v2653
    %v2662 = vcombine.high %v2660, %v2660
    %v2667 = vmul.f32 %v2632, %v2653
    %v2668 = vmul.f32 %v2633, %v2661
    %v2669 = vmul.f32 %v2634, %v2660
    %v2670 = vmul.f32 %v2635, %v2662
    %v2671 = vmul.f32 %v2636, %v2653
    %v2672 = vmul.f32 %v2637, %v2661
    %v2673 = vmul.f32 %v2638, %v2660
    %v2674 = vmul.f32 %v2639, %v2662
    %v2675 = vld [vmem:[#allocation8] sm:$0x1]
    %v2677 = vlaneseq
    %v2678 = vshrl.u32 %v2677, 7
    %v2679 = vsub.s32 0, %v2678
    %v2680 = vrot.slane %v2675, %v2679
    %v2681 = vcombine.high %v2680, %v2680
    %v2683 = vunpack.c.l.s4 1983009808
    %v2684 = vunpack.c.0.s8 %v2683
    %v2685 = vlaneseq
    %v2686 = vshrl.u32 %v2685, 7
    %v2687 = vsub.s32 %v2684, %v2686
    %v2688 = vrot.slane %v2680, %v2687
    %v2690 = vunpack.c.l.s4 1983009808
    %v2691 = vunpack.c.0.s8 %v2690
    %v2692 = vlaneseq
    %v2693 = vshrl.u32 %v2692, 7
    %v2694 = vsub.s32 %v2691, %v2693
    %v2695 = vrot.slane %v2681, %v2694
    %v2696 = vcombine.high %v2688, %v2688
    %v2697 = vcombine.high %v2695, %v2695
    %v2702 = vadd.f32 %v2667, %v2688
    %v2703 = vadd.f32 %v2668, %v2696
    %v2704 = vadd.f32 %v2669, %v2695
    %v2705 = vadd.f32 %v2670, %v2697
    %v2706 = vadd.f32 %v2671, %v2688
    %v2707 = vadd.f32 %v2672, %v2696
    %v2708 = vadd.f32 %v2673, %v2695
    %v2709 = vadd.f32 %v2674, %v2697
    %v2718 = vcombine.low %v2702, %v2703
    %v2719 = vcombine.low %v2704, %v2705
    %v2721 = vunpack.c.l.s4 1983009808
    %v2722 = vunpack.c.0.s8 %v2721
    %v2723 = vlaneseq
    %v2724 = vshrl.u32 %v2723, 7
    %v2725 = vsub.s32 %v2722, %v2724
    %v2726 = vrot.slane %v2718, %v2725
    %v2728 = vunpack.c.l.s4 1983009808
    %v2729 = vunpack.c.0.s8 %v2728
    %v2730 = vlaneseq
    %v2731 = vshrl.u32 %v2730, 7
    %v2732 = vsub.s32 %v2729, %v2731
    %v2733 = vrot.slane %v2719, %v2732
    %v2734 = vcombine.low %v2726, %v2733
    %v2735 = vcombine.low %v2706, %v2707
    %v2736 = vcombine.low %v2708, %v2709
    %v2738 = vunpack.c.l.s4 1983009808
    %v2739 = vunpack.c.0.s8 %v2738
    %v2740 = vlaneseq
    %v2741 = vshrl.u32 %v2740, 7
    %v2742 = vsub.s32 %v2739, %v2741
    %v2743 = vrot.slane %v2735, %v2742
    %v2745 = vunpack.c.l.s4 1983009808
    %v2746 = vunpack.c.0.s8 %v2745
    %v2747 = vlaneseq
    %v2748 = vshrl.u32 %v2747, 7
    %v2749 = vsub.s32 %v2746, %v2748
    %v2750 = vrot.slane %v2736, %v2749
    %v2751 = vcombine.low %v2743, %v2750
    %v2754 = vpack.c.bf16 %v2751, %v2734
    %v2755 = vld [vmem:[#allocation10] sm:$0xf]
    %v2756 = vld [vmem:[#allocation10 + $0x4] sm:$0xf]
    %v2757 = vld [vmem:[#allocation10 + $0x8] sm:$0xf]
    %v2758 = vld [vmem:[#allocation10 + $0xc] sm:$0xf]
    %v2759 = vld [vmem:[#allocation11] sm:$0x1]
    %v2761 = vlaneseq
    %v2762 = vshrl.u32 %v2761, 7
    %v2763 = vsub.s32 0, %v2762
    %v2764 = vrot.slane %v2759, %v2763
    %v2770 = vunpack.c.l.b16 %v2755
    %v2771 = vunpack.c.l.b16 %v2756
    %v2772 = vunpack.c.l.b16 %v2757
    %v2773 = vunpack.c.l.b16 %v2758
    %v2774 = vpack.c.b16 %v2771, %v2770
    %v2775 = vpack.c.b16 %v2773, %v2772
    %v2779 = vsel %vm197, %v2754, 0
    %2781 = vmatprep.subr.bf16.mxu0 0
    %2782 = vmatpush1.bf16.msra.mxu0 0
    %2783 = vmatprep.subr.bf16.mxu0 0
    %2784 = vmatpush1.bf16.msra.mxu0 0
    %2785 = vmatprep.subr.bf16.mxu0 0
    %2786 = vmatpush1.bf16.msra.mxu0 0
    %2787 = vmatprep.subr.bf16.mxu0 0
    %2788 = vmatpush1.bf16.msra.mxu0 0
    %2789 = vmatprep.subr.bf16.mxu0 0
    %2790 = vmatpush1.bf16.msra.mxu0 0
    %2791 = vmatprep.subr.bf16.mxu0 0
    %2792 = vmatpush1.bf16.msra.mxu0 0
    %2793 = vmatprep.subr.bf16.mxu0 0
    %2794 = vmatpush1.bf16.msra.mxu0 %v2775
    %2795 = vmatprep.subr.bf16.mxu0 0
    %2796 = vmatpush1.bf16.msra.mxu0 %v2774
    %2797 = vmatprep.subr.bf16.mxu0 0
    %2798 = vmatpush2.bf16.msra.mxu0 0
    %2799 = vmatprep.subr.bf16.mxu0 0
    %2800 = vmatpush2.bf16.msra.mxu0 0
    %2801 = vmatprep.subr.bf16.mxu0 0
    %2802 = vmatpush2.bf16.msra.mxu0 0
    %2803 = vmatprep.subr.bf16.mxu0 0
    %2804 = vmatpush2.bf16.msra.mxu0 0
    %2805 = vmatprep.subr.bf16.mxu0 0
    %2806 = vmatpush2.bf16.msra.mxu0 0
    %2807 = vmatprep.subr.bf16.mxu0 0
    %2808 = vmatpush2.bf16.msra.mxu0 0
    %2809 = vmatprep.subr.bf16.mxu0 0
    %2810 = vmatpush2.bf16.msra.mxu0 0
    %2811 = vmatprep.subr.bf16.mxu0 0
    %2812 = vmatpush2.bf16.msra.mxu0 0
    %2813 = vmatprep.mubr.bf16.mxu0 0
    %2814 = vmatmul.mubr.bf16.gmra.mxu0 %v2779
    %v2815 = vpop.f32.mrf.mxu0
    %v2816 = vadd.f32 %v2764, %v2815
    %v2817 = vpop.f32.mrf.mxu0
    %v2818 = vpop.f32.mrf.mxu0
    %v2819 = vadd.f32 %v2764, %v2818
    %v2820 = vpop.f32.mrf.mxu0
    %2821 = vdwg.mxu0
    %v2822 = vpack.c.bf16 %v2819, %v2816
    %v2823 = vmul.bf16 %v2822, 1056980736
    %v2824 = vmul.bf16 %v2822, 1060454197
    %v2825 = verf.bf16.pop %v2824
    %v2826 = vadd.bf16 %v2825, 1065369472
    %v2827 = vmul.bf16 %v2823, %v2826
    %v2828 = vld [vmem:[%s9] sm:$0xf]
    %v2829 = vld [vmem:[%s9 + $0x4] sm:$0xf]
    %v2830 = vld [vmem:[%s9 + $0x8] sm:$0xf]
    %v2831 = vld [vmem:[%s9 + $0xc] sm:$0xf]
    %v2832 = vld [vmem:[%s9 + $0x10] sm:$0xf]
    %v2833 = vld [vmem:[%s9 + $0x14] sm:$0xf]
    %v2834 = vld [vmem:[%s9 + $0x18] sm:$0xf]
    %v2835 = vld [vmem:[%s9 + $0x1c] sm:$0xf]
    %v2836 = vld [vmem:[%s10] sm:$0x1]
    %v2838 = vlaneseq
    %v2839 = vshrl.u32 %v2838, 7
    %v2840 = vsub.s32 0, %v2839
    %v2841 = vrot.slane %v2836, %v2840
    %v2851 = vunpack.c.l.b16 %v2828
    %v2852 = vunpack.c.l.b16 %v2829
    %v2853 = vunpack.c.l.b16 %v2830
    %v2854 = vunpack.c.l.b16 %v2831
    %v2855 = vunpack.c.l.b16 %v2832
    %v2856 = vunpack.c.l.b16 %v2833
    %v2857 = vunpack.c.l.b16 %v2834
    %v2858 = vunpack.c.l.b16 %v2835
    %v2859 = vpack.c.b16 %v2852, %v2851
    %v2860 = vpack.c.b16 %v2854, %v2853
    %v2861 = vpack.c.b16 %v2856, %v2855
    %v2862 = vpack.c.b16 %v2858, %v2857
    %vm2867 = vcmask 523264
    %v2869 = vsel %vm2867, %v2827, 0
    %2871 = vmatprep.subr.bf16.mxu0 0
    %2872 = vmatpush1.bf16.msra.mxu0 0
    %2873 = vmatprep.subr.bf16.mxu0 0
    %2874 = vmatpush1.bf16.msra.mxu0 0
    %2875 = vmatprep.subr.bf16.mxu0 0
    %2876 = vmatpush1.bf16.msra.mxu0 0
    %2877 = vmatprep.subr.bf16.mxu0 0
    %2878 = vmatpush1.bf16.msra.mxu0 0
    %2879 = vmatprep.subr.bf16.mxu0 0
    %2880 = vmatpush1.bf16.msra.mxu0 %v2862
    %2881 = vmatprep.subr.bf16.mxu0 0
    %2882 = vmatpush1.bf16.msra.mxu0 %v2861
    %2883 = vmatprep.subr.bf16.mxu0 0
    %2884 = vmatpush1.bf16.msra.mxu0 %v2860
    %2885 = vmatprep.subr.bf16.mxu0 0
    %2886 = vmatpush1.bf16.msra.mxu0 %v2859
    %2887 = vmatprep.subr.bf16.mxu0 0
    %2888 = vmatpush2.bf16.msra.mxu0 0
    %2889 = vmatprep.subr.bf16.mxu0 0
    %2890 = vmatpush2.bf16.msra.mxu0 0
    %2891 = vmatprep.subr.bf16.mxu0 0
    %2892 = vmatpush2.bf16.msra.mxu0 0
    %2893 = vmatprep.subr.bf16.mxu0 0
    %2894 = vmatpush2.bf16.msra.mxu0 0
    %2895 = vmatprep.subr.bf16.mxu0 0
    %2896 = vmatpush2.bf16.msra.mxu0 0
    %2897 = vmatprep.subr.bf16.mxu0 0
    %2898 = vmatpush2.bf16.msra.mxu0 0
    %2899 = vmatprep.subr.bf16.mxu0 0
    %2900 = vmatpush2.bf16.msra.mxu0 0
    %2901 = vmatprep.subr.bf16.mxu0 0
    %2902 = vmatpush2.bf16.msra.mxu0 0
    %2903 = vmatprep.mubr.bf16.mxu0 0
    %2904 = vmatmul.mubr.bf16.gmra.mxu0 %v2869
    %v2905 = vpop.f32.mrf.mxu0
    %v2906 = vadd.f32 %v2841, %v2905
    %v2907 = vpop.f32.mrf.mxu0
    %v2908 = vpop.f32.mrf.mxu0
    %v2909 = vadd.f32 %v2841, %v2908
    %v2910 = vpop.f32.mrf.mxu0
    %2911 = vdwg.mxu0
    %v2914 = vcombine.high %v2906, %v2906
    %v2916 = vunpack.c.l.s4 1983009808
    %v2917 = vunpack.c.0.s8 %v2916
    %v2918 = vlaneseq
    %v2919 = vshrl.u32 %v2918, 7
    %v2920 = vsub.s32 %v2917, %v2919
    %v2921 = vrot.slane %v2906, %v2920
    %v2923 = vunpack.c.l.s4 1983009808
    %v2924 = vunpack.c.0.s8 %v2923
    %v2925 = vlaneseq
    %v2926 = vshrl.u32 %v2925, 7
    %v2927 = vsub.s32 %v2924, %v2926
    %v2928 = vrot.slane %v2914, %v2927
    %v2929 = vcombine.high %v2921, %v2921
    %v2930 = vcombine.high %v2928, %v2928
    %v2931 = vcombine.high %v2909, %v2909
    %v2933 = vunpack.c.l.s4 1983009808
    %v2934 = vunpack.c.0.s8 %v2933
    %v2935 = vlaneseq
    %v2936 = vshrl.u32 %v2935, 7
    %v2937 = vsub.s32 %v2934, %v2936
    %v2938 = vrot.slane %v2909, %v2937
    %v2940 = vunpack.c.l.s4 1983009808
    %v2941 = vunpack.c.0.s8 %v2940
    %v2942 = vlaneseq
    %v2943 = vshrl.u32 %v2942, 7
    %v2944 = vsub.s32 %v2941, %v2943
    %v2945 = vrot.slane %v2931, %v2944
    %v2946 = vcombine.high %v2938, %v2938
    %v2947 = vcombine.high %v2945, %v2945
    %v2956 = vadd.f32 %v2702, %v2921
    %v2957 = vadd.f32 %v2703, %v2929
    %v2958 = vadd.f32 %v2704, %v2928
    %v2959 = vadd.f32 %v2705, %v2930
    %v2960 = vadd.f32 %v2706, %v2938
    %v2961 = vadd.f32 %v2707, %v2946
    %v2962 = vadd.f32 %v2708, %v2945
    %v2963 = vadd.f32 %v2709, %v2947
    %v2972 = vcombine.low %v2956, %v2957
    %v2973 = vcombine.low %v2958, %v2959
    %v2975 = vunpack.c.l.s4 1983009808
    %v2976 = vunpack.c.0.s8 %v2975
    %v2977 = vlaneseq
    %v2978 = vshrl.u32 %v2977, 7
    %v2979 = vsub.s32 %v2976, %v2978
    %v2980 = vrot.slane %v2972, %v2979
    %v2982 = vunpack.c.l.s4 1983009808
    %v2983 = vunpack.c.0.s8 %v2982
    %v2984 = vlaneseq
    %v2985 = vshrl.u32 %v2984, 7
    %v2986 = vsub.s32 %v2983, %v2985
    %v2987 = vrot.slane %v2973, %v2986
    %v2988 = vcombine.low %v2980, %v2987
    %v2989 = vcombine.low %v2960, %v2961
    %v2990 = vcombine.low %v2962, %v2963
    %v2992 = vunpack.c.l.s4 1983009808
    %v2993 = vunpack.c.0.s8 %v2992
    %v2994 = vlaneseq
    %v2995 = vshrl.u32 %v2994, 7
    %v2996 = vsub.s32 %v2993, %v2995
    %v2997 = vrot.slane %v2989, %v2996
    %v2999 = vunpack.c.l.s4 1983009808
    %v3000 = vunpack.c.0.s8 %v2999
    %v3001 = vlaneseq
    %v3002 = vshrl.u32 %v3001, 7
    %v3003 = vsub.s32 %v3000, %v3002
    %v3004 = vrot.slane %v2990, %v3003
    %v3005 = vcombine.low %v2997, %v3004
    %v3008 = vsel %vm197, %v2988, 0.0
    %3009 = vadd.xlane.f32.xlu0 %v3008
    %v3010 = vpop.xlane.xlu0 %3009
    %v3011 = vsel %vm197, %v3005, 0.0
    %3012 = vadd.xlane.f32.xlu0 %v3011
    %v3013 = vpop.xlane.xlu0 %3012
    %v3014 = vmul.f32 %v3010, %v2425
    %v3015 = vmul.f32 %v3013, %v2425
    %v3019 = vunpack.c.l.s4 269488144
    %v3020 = vunpack.c.0.s8 %v3019
    %v3021 = vlaneseq
    %v3022 = vshrl.u32 %v3021, 7
    %v3023 = vsub.s32 %v3020, %v3022
    %v3024 = vrot.slane %v3014, %v3023
    %v3026 = vunpack.c.l.s4 842150450
    %v3027 = vunpack.c.0.s8 %v3026
    %v3028 = vlaneseq
    %v3029 = vshrl.u32 %v3028, 7
    %v3030 = vsub.s32 %v3027, %v3029
    %v3031 = vrot.slane %v3014, %v3030
    %v3033 = vunpack.c.l.s4 1414812756
    %v3034 = vunpack.c.0.s8 %v3033
    %v3035 = vlaneseq
    %v3036 = vshrl.u32 %v3035, 7
    %v3037 = vsub.s32 %v3034, %v3036
    %v3038 = vrot.slane %v3014, %v3037
    %v3040 = vunpack.c.l.s4 1987475062
    %v3041 = vunpack.c.0.s8 %v3040
    %v3042 = vlaneseq
    %v3043 = vshrl.u32 %v3042, 7
    %v3044 = vsub.s32 %v3041, %v3043
    %v3045 = vrot.slane %v3014, %v3044
    %v3047 = vunpack.c.l.s4 269488144
    %v3048 = vunpack.c.0.s8 %v3047
    %v3049 = vlaneseq
    %v3050 = vshrl.u32 %v3049, 7
    %v3051 = vsub.s32 %v3048, %v3050
    %v3052 = vrot.slane %v3015, %v3051
    %v3054 = vunpack.c.l.s4 842150450
    %v3055 = vunpack.c.0.s8 %v3054
    %v3056 = vlaneseq
    %v3057 = vshrl.u32 %v3056, 7
    %v3058 = vsub.s32 %v3055, %v3057
    %v3059 = vrot.slane %v3015, %v3058
    %v3061 = vunpack.c.l.s4 1414812756
    %v3062 = vunpack.c.0.s8 %v3061
    %v3063 = vlaneseq
    %v3064 = vshrl.u32 %v3063, 7
    %v3065 = vsub.s32 %v3062, %v3064
    %v3066 = vrot.slane %v3015, %v3065
    %v3068 = vunpack.c.l.s4 1987475062
    %v3069 = vunpack.c.0.s8 %v3068
    %v3070 = vlaneseq
    %v3071 = vshrl.u32 %v3070, 7
    %v3072 = vsub.s32 %v3069, %v3071
    %v3073 = vrot.slane %v3015, %v3072
    %v3082 = vsub.f32 %v2956, %v3024
    %v3083 = vsub.f32 %v2957, %v3031
    %v3084 = vsub.f32 %v2958, %v3038
    %v3085 = vsub.f32 %v2959, %v3045
    %v3086 = vsub.f32 %v2960, %v3052
    %v3087 = vsub.f32 %v2961, %v3059
    %v3088 = vsub.f32 %v2962, %v3066
    %v3089 = vsub.f32 %v2963, %v3073
    %v3090 = vmul.f32 %v3082, %v3082
    %v3091 = vmul.f32 %v3083, %v3083
    %v3092 = vmul.f32 %v3084, %v3084
    %v3093 = vmul.f32 %v3085, %v3085
    %v3094 = vmul.f32 %v3086, %v3086
    %v3095 = vmul.f32 %v3087, %v3087
    %v3096 = vmul.f32 %v3088, %v3088
    %v3097 = vmul.f32 %v3089, %v3089
    %v3106 = vcombine.low %v3090, %v3091
    %v3107 = vcombine.low %v3092, %v3093
    %v3109 = vunpack.c.l.s4 1983009808
    %v3110 = vunpack.c.0.s8 %v3109
    %v3111 = vlaneseq
    %v3112 = vshrl.u32 %v3111, 7
    %v3113 = vsub.s32 %v3110, %v3112
    %v3114 = vrot.slane %v3106, %v3113
    %v3116 = vunpack.c.l.s4 1983009808
    %v3117 = vunpack.c.0.s8 %v3116
    %v3118 = vlaneseq
    %v3119 = vshrl.u32 %v3118, 7
    %v3120 = vsub.s32 %v3117, %v3119
    %v3121 = vrot.slane %v3107, %v3120
    %v3122 = vcombine.low %v3114, %v3121
    %v3123 = vcombine.low %v3094, %v3095
    %v3124 = vcombine.low %v3096, %v3097
    %v3126 = vunpack.c.l.s4 1983009808
    %v3127 = vunpack.c.0.s8 %v3126
    %v3128 = vlaneseq
    %v3129 = vshrl.u32 %v3128, 7
    %v3130 = vsub.s32 %v3127, %v3129
    %v3131 = vrot.slane %v3123, %v3130
    %v3133 = vunpack.c.l.s4 1983009808
    %v3134 = vunpack.c.0.s8 %v3133
    %v3135 = vlaneseq
    %v3136 = vshrl.u32 %v3135, 7
    %v3137 = vsub.s32 %v3134, %v3136
    %v3138 = vrot.slane %v3124, %v3137
    %v3139 = vcombine.low %v3131, %v3138
    %v3142 = vsel %vm197, %v3122, 0.0
    %3143 = vadd.xlane.f32.xlu0 %v3142
    %v3144 = vpop.xlane.xlu0 %3143
    %v3145 = vsel %vm197, %v3139, 0.0
    %3146 = vadd.xlane.f32.xlu0 %v3145
    %v3147 = vpop.xlane.xlu0 %3146
    %v3148 = vmul.f32 %v3144, %v2425
    %v3149 = vmul.f32 %v3147, %v2425
    %v3150 = vadd.f32 %v3148, 1e-05
    %v3151 = vadd.f32 %v3149, 1e-05
    %v3152 = vrsqrt.pop %v3150
    %v3153 = vrsqrt.pop %v3151
    %v3157 = vunpack.c.l.s4 269488144
    %v3158 = vunpack.c.0.s8 %v3157
    %v3159 = vlaneseq
    %v3160 = vshrl.u32 %v3159, 7
    %v3161 = vsub.s32 %v3158, %v3160
    %v3162 = vrot.slane %v3152, %v3161
    %v3164 = vunpack.c.l.s4 842150450
    %v3165 = vunpack.c.0.s8 %v3164
    %v3166 = vlaneseq
    %v3167 = vshrl.u32 %v3166, 7
    %v3168 = vsub.s32 %v3165, %v3167
    %v3169 = vrot.slane %v3152, %v3168
    %v3171 = vunpack.c.l.s4 1414812756
    %v3172 = vunpack.c.0.s8 %v3171
    %v3173 = vlaneseq
    %v3174 = vshrl.u32 %v3173, 7
    %v3175 = vsub.s32 %v3172, %v3174
    %v3176 = vrot.slane %v3152, %v3175
    %v3178 = vunpack.c.l.s4 1987475062
    %v3179 = vunpack.c.0.s8 %v3178
    %v3180 = vlaneseq
    %v3181 = vshrl.u32 %v3180, 7
    %v3182 = vsub.s32 %v3179, %v3181
    %v3183 = vrot.slane %v3152, %v3182
    %v3185 = vunpack.c.l.s4 269488144
    %v3186 = vunpack.c.0.s8 %v3185
    %v3187 = vlaneseq
    %v3188 = vshrl.u32 %v3187, 7
    %v3189 = vsub.s32 %v3186, %v3188
    %v3190 = vrot.slane %v3153, %v3189
    %v3192 = vunpack.c.l.s4 842150450
    %v3193 = vunpack.c.0.s8 %v3192
    %v3194 = vlaneseq
    %v3195 = vshrl.u32 %v3194, 7
    %v3196 = vsub.s32 %v3193, %v3195
    %v3197 = vrot.slane %v3153, %v3196
    %v3199 = vunpack.c.l.s4 1414812756
    %v3200 = vunpack.c.0.s8 %v3199
    %v3201 = vlaneseq
    %v3202 = vshrl.u32 %v3201, 7
    %v3203 = vsub.s32 %v3200, %v3202
    %v3204 = vrot.slane %v3153, %v3203
    %v3206 = vunpack.c.l.s4 1987475062
    %v3207 = vunpack.c.0.s8 %v3206
    %v3208 = vlaneseq
    %v3209 = vshrl.u32 %v3208, 7
    %v3210 = vsub.s32 %v3207, %v3209
    %v3211 = vrot.slane %v3153, %v3210
    %v3220 = vmul.f32 %v3082, %v3162
    %v3221 = vmul.f32 %v3083, %v3169
    %v3222 = vmul.f32 %v3084, %v3176
    %v3223 = vmul.f32 %v3085, %v3183
    %v3224 = vmul.f32 %v3086, %v3190
    %v3225 = vmul.f32 %v3087, %v3197
    %v3226 = vmul.f32 %v3088, %v3204
    %v3227 = vmul.f32 %v3089, %v3211
    %v3228 = vld [vmem:[%s11] sm:$0x1]
    %v3230 = vlaneseq
    %v3231 = vshrl.u32 %v3230, 7
    %v3232 = vsub.s32 0, %v3231
    %v3233 = vrot.slane %v3228, %v3232
    %v3234 = vcombine.high %v3233, %v3233
    %v3236 = vunpack.c.l.s4 1983009808
    %v3237 = vunpack.c.0.s8 %v3236
    %v3238 = vlaneseq
    %v3239 = vshrl.u32 %v3238, 7
    %v3240 = vsub.s32 %v3237, %v3239
    %v3241 = vrot.slane %v3233, %v3240
    %v3243 = vunpack.c.l.s4 1983009808
    %v3244 = vunpack.c.0.s8 %v3243
    %v3245 = vlaneseq
    %v3246 = vshrl.u32 %v3245, 7
    %v3247 = vsub.s32 %v3244, %v3246
    %v3248 = vrot.slane %v3234, %v3247
    %v3249 = vcombine.high %v3241, %v3241
    %v3250 = vcombine.high %v3248, %v3248
    %v3255 = vmul.f32 %v3220, %v3241
    %v3256 = vmul.f32 %v3221, %v3249
    %v3257 = vmul.f32 %v3222, %v3248
    %v3258 = vmul.f32 %v3223, %v3250
    %v3259 = vmul.f32 %v3224, %v3241
    %v3260 = vmul.f32 %v3225, %v3249
    %v3261 = vmul.f32 %v3226, %v3248
    %v3262 = vmul.f32 %v3227, %v3250
    %v3263 = vld [vmem:[%s12] sm:$0x1]
    %v3265 = vlaneseq
    %v3266 = vshrl.u32 %v3265, 7
    %v3267 = vsub.s32 0, %v3266
    %v3268 = vrot.slane %v3263, %v3267
    %v3269 = vcombine.high %v3268, %v3268
    %v3271 = vunpack.c.l.s4 1983009808
    %v3272 = vunpack.c.0.s8 %v3271
    %v3273 = vlaneseq
    %v3274 = vshrl.u32 %v3273, 7
    %v3275 = vsub.s32 %v3272, %v3274
    %v3276 = vrot.slane %v3268, %v3275
    %v3278 = vunpack.c.l.s4 1983009808
    %v3279 = vunpack.c.0.s8 %v3278
    %v3280 = vlaneseq
    %v3281 = vshrl.u32 %v3280, 7
    %v3282 = vsub.s32 %v3279, %v3281
    %v3283 = vrot.slane %v3269, %v3282
    %v3284 = vcombine.high %v3276, %v3276
    %v3285 = vcombine.high %v3283, %v3283
    %v3290 = vadd.f32 %v3255, %v3276
    %v3291 = vadd.f32 %v3256, %v3284
    %v3292 = vadd.f32 %v3257, %v3283
    %v3293 = vadd.f32 %v3258, %v3285
    %v3294 = vadd.f32 %v3259, %v3276
    %v3295 = vadd.f32 %v3260, %v3284
    %v3296 = vadd.f32 %v3261, %v3283
    %v3297 = vadd.f32 %v3262, %v3285
    %vm3298 = vcmask 254976
    %3299 = vst.msk [vmem:[#allocation13] sm:$0x3] %vm3298, %v3290
    %3300 = vst.msk [vmem:[#allocation13 + $0x2] sm:$0x3] %vm3298, %v3291
    %3301 = vst.msk [vmem:[#allocation13 + $0x4] sm:$0x3] %vm3298, %v3292
    %3302 = vst.msk [vmem:[#allocation13 + $0x6] sm:$0x3] %vm3298, %v3293
    %3303 = vst.msk [vmem:[#allocation13 + $0x8] sm:$0x3] %vm3298, %v3294
    %3304 = vst.msk [vmem:[#allocation13 + $0xa] sm:$0x3] %vm3298, %v3295
    %3305 = vst.msk [vmem:[#allocation13 + $0xc] sm:$0x3] %vm3298, %v3296
    %3306 = vst.msk [vmem:[#allocation13 + $0xe] sm:$0x3] %vm3298, %v3297
    // Predicated region
    $region78: #{tpu_custom_call.1} parent=1 // pred_check
      _
    $region79: #{tpu_custom_call.1} parent=1 // pred_check_branch
      %3308 = sbr.rel (0) target = $region81
    $region80: #{tpu_custom_call.1} parent=1 // pred_region
      %s3310 = ssub.s32 256, 256
      %3311 = vsyncadd [#allocation4], %s3310
      %s3312 = sshll.u32 [#allocation13], 4
      %s3313 = int_to_ptr.vmem [resolvable:$true] %s3312
      %3318 = dma.vmem_to_hbm [thread:$0]  %s3313, 256, %s13, [#allocation4], 32, 32, 2
    $region81: #{tpu_custom_call.1} parent=1 // pred_fallthru
      _
    // Predicated region
    $region82: #{tpu_custom_call.1} parent=1 // pred_check
      _
    $region83: #{tpu_custom_call.1} parent=1 // pred_check_branch
      %3320 = sbr.rel (0) target = $region85
    $region84: #{tpu_custom_call.1} parent=1 // pred_region
      %3321 = dma.done [#allocation4], 256
    $region85: #{tpu_custom_call.1} parent=1 // pred_fallthru
      _
    %3322 = vsyncpa [#allocation3], 1
    %3323 = vsyncpa [#allocation6], 1
    %3324 = vsyncpa [#allocation9], 1
    %3325 = vsyncpa [#allocation12], 1
    %3326 = vsyncpa [#allocation4], 1

</llo_original>
